<compile_context>
chip_gen: v6e
topology: v6e:2x2x1
jax: 0.10.0
libtpu: 0.0.40
codegen_flags: <defaults>
</compile_context>

<pallas_src>
import jax
import jax.numpy as jnp
from jax import lax
from jax.experimental import pallas as pl
from jax.experimental.pallas import tpu as pltpu


def _make_dense_gcn_kernel(N, F):
    """Kernel for a block of BT graphs.  x_ref: (BT, N*F), adj_ref: (BT, N*N)."""

    def kernel(x_ref, adj_ref,
               w1_ref, b1_ref, w2_ref, b2_ref, w3_ref, b3_ref,
               wlt_ref, blt_ref, out_ref):
        f32 = jnp.float32

        # --- adjacency rows with self-loops, consumed directly from the flat
        #     lane-dense block (row i of graph b = lanes i*N .. i*N+N-1) -----
        iota_n = lax.broadcasted_iota(jnp.int32, (1, N), 1)
        rows, dis = [], []
        for i in range(N):
            r = jnp.where(iota_n == i, 1.0, adj_ref[:, i * N:(i + 1) * N])
            rows.append(r)                                          # (BT, N)
            deg = jnp.sum(r, axis=-1, keepdims=True)                # (BT, 1)
            dis.append(lax.rsqrt(jnp.maximum(deg, 1.0)))            # (BT, 1)
        # per-(i, j) adjacency scalars (hoisted out of the layer loop)
        a = [[rows[i][:, j:j + 1] for j in range(N)] for i in range(N)]

        # --- per-node feature slices of the flat x block --------------------
        h = [x_ref[:, n * F:(n + 1) * F] for n in range(N)]         # N x (BT, F)

        # --- three DenseGCNConv layers + Identity norm + ReLU ---------------
        for w_ref, b_ref in ((w1_ref, b1_ref), (w2_ref, b2_ref),
                             (w3_ref, b3_ref)):
            w = w_ref[...]
            b = b_ref[...]                                           # (1, f_out)
            # Feature transform: shared-weight MXU matmuls batched over BT.
            hw = []
            for n in range(N):
                lhs = h[n] if w.dtype == jnp.float32 else h[n].astype(w.dtype)
                hw.append(jnp.dot(lhs, w, preferred_element_type=f32) * dis[n])
            # Propagation: unrolled VPU broadcast-MACs (no per-graph matmuls).
            h = []
            for i in range(N):
                acc = a[i][0] * hw[0]
                for j in range(1, N):
                    acc = acc + a[i][j] * hw[j]
                h.append(jnp.maximum(acc * dis[i] + b, 0.0))         # (BT, f_out)

        # --- mean pooling over nodes -> (BT, H) ------------------------------
        pooled = h[0]
        for n in range(1, N):
            pooled = pooled + h[n]
        pooled = pooled * (1.0 / N)

        # --- lin3 + log_softmax, computed transposed: (C, BT), batch in lanes
        logits_t = jnp.einsum('ch,bh->cb', wlt_ref[...], pooled,
                              preferred_element_type=f32) + blt_ref[...]
        m = jnp.max(logits_t, axis=0, keepdims=True)
        lse = jnp.log(jnp.sum(jnp.exp(logits_t - m), axis=0, keepdims=True)) + m
        out_ref[...] = (logits_t - lse)[None]                        # (1, C, BT)

    return kernel


def _choose_bt(B, batch_tile):
    """Pick (BT, Bp).  Prefer an exact divisor of B (zero-copy, no padding)."""
    if B <= batch_tile:
        # Keep >= 2 grid steps when the batch is big enough so the "parallel"
        # axis can be sharded across v7x's two TensorCores.
        if B >= 128 and B % 16 == 0:
            return B // 2, B
        return B, B
    bt_max = max(8, (batch_tile // 8) * 8)
    for bt in range(bt_max, max(bt_max // 2, 8) - 1, -8):
        if B % bt == 0:
            return bt, B                      # exact tiling, no padding copy
    # Ragged batch with no aligned divisor near the requested tile: pad.
    # TODO(synk): run the ragged tail as a second single-block pallas_call
    # instead of this concatenate (which copies x/adj once through HBM).
    return bt_max, bt_max * pl.cdiv(B, bt_max)


def dense_gcn_forward(x, adj, params, batch_tile=256, mxu_dtype=jnp.float32):
    """DenseGCN forward.

    batch_tile graphs are processed per grid step (default 256).  With the
    lane-dense layout each graph costs ~16 KiB of padded VMEM (inputs double
    buffered + compiler temps), so keep batch_tile <= ~1000 on v7x (64 MiB/TC)
    and <= ~2000 elsewhere; the default is safe on every generation.
    """
    B, N, F = x.shape
    H = params["w1"].shape[1]
    C = params["wl"].shape[1]

    BT, Bp = _choose_bt(B, batch_tile)
    n_steps = Bp // BT

    # Lane-dense 2-D views (free: merges trailing dims of contiguous arrays).
    xf = x.reshape(B, N * F)
    af = adj.reshape(B, N * N)
    pad = Bp - B
    if pad:
        xf = jnp.concatenate([xf, jnp.zeros((pad, N * F), xf.dtype)], axis=0)
        af = jnp.concatenate([af, jnp.zeros((pad, N * N), af.dtype)], axis=0)

    w1 = params["w1"].astype(mxu_dtype)
    w2 = params["w2"].astype(mxu_dtype)
    w3 = params["w3"].astype(mxu_dtype)
    wlT = params["wl"].T                      # (C, H)  -- classifier stays f32
    blT = params["bl"].reshape(C, 1)          # (C, 1)

    full = lambda shape: pl.BlockSpec(shape, lambda b: (0, 0))
    # Scoped-VMEM limit scaled with the tile (~16 KiB padded per graph, with
    # headroom), capped at v7x's 64 MiB physical per-TensorCore VMEM.
    vmem_limit = min(64 * 1024 * 1024, max(32 * 1024 * 1024, 48 * 1024 * BT))

    out = pl.pallas_call(
        _make_dense_gcn_kernel(N, F),
        out_shape=jax.ShapeDtypeStruct((n_steps, C, BT), jnp.float32),
        grid_spec=pltpu.PrefetchScalarGridSpec(
            num_scalar_prefetch=0,
            grid=(n_steps,),
            in_specs=[
                pl.BlockSpec((BT, N * F), lambda b: (b, 0)),   # x, lane-dense
                pl.BlockSpec((BT, N * N), lambda b: (b, 0)),   # adj, lane-dense
                full((F, H)), full((1, H)),                    # conv1 W, b
                full((H, H)), full((1, H)),                    # conv2 W, b
                full((H, H)), full((1, H)),                    # conv3 W, b
                full((C, H)), full((C, 1)),                    # lin3 W^T, b^T
            ],
            out_specs=pl.BlockSpec((1, C, BT), lambda b: (b, 0, 0)),
        ),
        compiler_params=pltpu.CompilerParams(
            dimension_semantics=("parallel",),
            vmem_limit_bytes=vmem_limit),
    )(xf, af, w1, params["b1"], w2, params["b2"], w3, params["b3"], wlT, blT)

    # (n_steps, C, BT) -> (Bp, C); the transpose is B*C floats, negligible.
    return out.transpose(0, 2, 1).reshape(Bp, C)[:B]


def dense_gcn_reference(x, adj, params):
    """Pure-JAX reference mirroring the PyTorch forward."""
    B, N, _ = adj.shape
    eye = jnp.eye(N, dtype=x.dtype)[None]
    adj = jnp.where(eye > 0, 1.0, adj)
    deg = jnp.clip(adj.sum(-1), 1.0, None)
    dis = deg ** -0.5
    adj_n = dis[:, :, None] * adj * dis[:, None, :]
    h = x
    for w, b in ((params["w1"], params["b1"]),
                 (params["w2"], params["b2"]),
                 (params["w3"], params["b3"])):
        h = jnp.einsum("bij,bjh->bih", adj_n, h @ w) + b.reshape(1, 1, -1)
        h = jax.nn.relu(h)
    pooled = h.mean(axis=1)
    logits = pooled @ params["wl"] + params["bl"].reshape(1, -1)
    return jax.nn.log_softmax(logits, axis=-1)


def init_params(key, nfeat, nhid, nclass):
    """Deterministic glorot-uniform-ish init; biases zero (matches PyG reset)."""
    def glorot(k, fan_in, fan_out):
        limit = (6.0 / (fan_in + fan_out)) ** 0.5
        return jax.random.uniform(k, (fan_in, fan_out), jnp.float32,
                                  minval=-limit, maxval=limit)
    ks = jax.random.split(key, 4)
    return {
        "w1": glorot(ks[0], nfeat, nhid), "b1": jnp.zeros((1, nhid), jnp.float32),
        "w2": glorot(ks[1], nhid, nhid),  "b2": jnp.zeros((1, nhid), jnp.float32),
        "w3": glorot(ks[2], nhid, nhid),  "b3": jnp.zeros((1, nhid), jnp.float32),
        "wl": glorot(ks[3], nhid, nclass), "bl": jnp.zeros((1, nclass), jnp.float32),
    }


def make_inputs(key, B, N, F):
    kx, ka = jax.random.split(key, 2)
    x = jax.random.normal(kx, (B, N, F), jnp.float32)
    a = (jax.random.uniform(ka, (B, N, N)) > 0.5).astype(jnp.float32)
    adj = jnp.clip(a + jnp.swapaxes(a, 1, 2), 0.0, 1.0)
    adj = adj * (1.0 - jnp.eye(N, dtype=jnp.float32)[None])
    return x, adj


if __name__ == "__main__":
    N, F, H, C = 8, 16, 32, 4   # nodes, nfeat, nhid, nclass

    key = jax.random.PRNGKey(0)
    k1, k2, kp = jax.random.split(key, 3)
    params = init_params(kp, F, H, C)

    # 1) small batch: single grid step, block == full batch dim
    x, adj = make_inputs(k1, 2, N, F)
    out = jax.block_until_ready(dense_gcn_forward(x, adj, params))
    ref = dense_gcn_reference(x, adj, params)
    assert out.shape == (2, C)
    assert jnp.allclose(out, ref, atol=1e-4, rtol=1e-4), (out, ref)

    # 2) multi-step parallel grid with an exact divisor tile (no padding copy)
    x2, adj2 = make_inputs(k2, 24, N, F)
    out2 = jax.block_until_ready(dense_gcn_forward(x2, adj2, params, batch_tile=8))
    ref2 = dense_gcn_reference(x2, adj2, params)
    assert out2.shape == (24, C)
    assert jnp.allclose(out2, ref2, atol=1e-4, rtol=1e-4), (out2, ref2)

    # 3) ragged batch -> padded-tail fallback path
    out3 = jax.block_until_ready(
        dense_gcn_forward(x2[:20], adj2[:20], params, batch_tile=8))
    assert out3.shape == (20, C)
    assert jnp.allclose(out3, ref2[:20], atol=1e-4, rtol=1e-4), (out3, ref2[:20])

    # 4) optional bf16 MXU operands for the conv layers (v5e path), loose tol
    out4 = jax.block_until_ready(
        dense_gcn_forward(x2, adj2, params, batch_tile=8, mxu_dtype=jnp.bfloat16))
    assert out4.shape == (24, C)
    assert jnp.allclose(out4, ref2, atol=1e-1, rtol=1e-1), (out4, ref2)

    print("KERNEL_OK")
</pallas_src>

<mosaic_0001>
module attributes {stable_mosaic.version = 11 : i64} {
  func.func @kernel(%arg0: i32, %arg1: memref<2x128xf32, #tpu.memory_space<vmem>>, %arg2: memref<2x64xf32, #tpu.memory_space<vmem>>, %arg3: memref<16x32xf32, #tpu.memory_space<vmem>>, %arg4: memref<1x32xf32, #tpu.memory_space<vmem>>, %arg5: memref<32x32xf32, #tpu.memory_space<vmem>>, %arg6: memref<1x32xf32, #tpu.memory_space<vmem>>, %arg7: memref<32x32xf32, #tpu.memory_space<vmem>>, %arg8: memref<1x32xf32, #tpu.memory_space<vmem>>, %arg9: memref<4x32xf32, #tpu.memory_space<vmem>>, %arg10: memref<4x1xf32, #tpu.memory_space<vmem>>, %arg11: memref<1x4x2xf32, #tpu.memory_space<vmem>>) attributes {dimension_semantics = [#tpu.dimension_semantics<parallel>], iteration_bounds = array<i64: 1>, scalar_prefetch = 0 : i64, scratch_operands = 0 : i64, tpu.core_type = #tpu.core_type<tc>, window_params = [{transform_indices = @transform_0, window_bounds = array<i64: 2, 128>}, {transform_indices = @transform_1, window_bounds = array<i64: 2, 64>}, {pipeline_mode = #tpu.pipeline_mode<synchronous>, transform_indices = @transform_2, window_bounds = array<i64: 16, 32>}, {pipeline_mode = #tpu.pipeline_mode<synchronous>, transform_indices = @transform_3, window_bounds = array<i64: 1, 32>}, {pipeline_mode = #tpu.pipeline_mode<synchronous>, transform_indices = @transform_4, window_bounds = array<i64: 32, 32>}, {pipeline_mode = #tpu.pipeline_mode<synchronous>, transform_indices = @transform_5, window_bounds = array<i64: 1, 32>}, {pipeline_mode = #tpu.pipeline_mode<synchronous>, transform_indices = @transform_6, window_bounds = array<i64: 32, 32>}, {pipeline_mode = #tpu.pipeline_mode<synchronous>, transform_indices = @transform_7, window_bounds = array<i64: 1, 32>}, {pipeline_mode = #tpu.pipeline_mode<synchronous>, transform_indices = @transform_8, window_bounds = array<i64: 4, 32>}, {pipeline_mode = #tpu.pipeline_mode<synchronous>, transform_indices = @transform_9, window_bounds = array<i64: 4, 1>}, {transform_indices = @transform_10, window_bounds = array<i64: 1, 4, 2>}]} {
    %0 = tpu.iota {dimensions = array<i32: 1>} : vector<1x8xi32>
    %c0_i32 = arith.constant 0 : i32
    %1 = vector.broadcast %c0_i32 : i32 to vector<1x8xi32>
    %2 = arith.cmpi eq, %0, %1 : vector<1x8xi32>
    %c0 = arith.constant 0 : index
    %c0_0 = arith.constant 0 : index
    %3 = vector.load %arg2[%c0, %c0_0] : memref<2x64xf32, #tpu.memory_space<vmem>>, vector<2x8xf32>
    %cst = arith.constant 1.000000e+00 : f32
    %4 = vector.shape_cast %2 : vector<1x8xi1> to vector<1x8xi1>
    %5 = vector.broadcast %4 : vector<1x8xi1> to vector<2x8xi1>
    %6 = vector.broadcast %cst : f32 to vector<2x8xf32>
    %7 = arith.select %5, %6, %3 : vector<2x8xi1>, vector<2x8xf32>
    %cst_1 = arith.constant dense<0.000000e+00> : vector<2xf32>
    %8 = vector.multi_reduction <add>, %7, %cst_1 [1] : vector<2x8xf32> to vector<2xf32>
    %9 = vector.shape_cast %8 : vector<2xf32> to vector<2x1xf32>
    %cst_2 = arith.constant 1.000000e+00 : f32
    %10 = vector.broadcast %cst_2 : f32 to vector<2x1xf32>
    %11 = arith.maximumf %9, %10 : vector<2x1xf32>
    %12 = math.rsqrt %11 : vector<2x1xf32>
    %c1_i32 = arith.constant 1 : i32
    %13 = vector.broadcast %c1_i32 : i32 to vector<1x8xi32>
    %14 = arith.cmpi eq, %0, %13 : vector<1x8xi32>
    %c0_3 = arith.constant 0 : index
    %c8 = arith.constant 8 : index
    %15 = vector.load %arg2[%c0_3, %c8] : memref<2x64xf32, #tpu.memory_space<vmem>>, vector<2x8xf32>
    %cst_4 = arith.constant 1.000000e+00 : f32
    %16 = vector.shape_cast %14 : vector<1x8xi1> to vector<1x8xi1>
    %17 = vector.broadcast %16 : vector<1x8xi1> to vector<2x8xi1>
    %18 = vector.broadcast %cst_4 : f32 to vector<2x8xf32>
    %19 = arith.select %17, %18, %15 : vector<2x8xi1>, vector<2x8xf32>
    %cst_5 = arith.constant dense<0.000000e+00> : vector<2xf32>
    %20 = vector.multi_reduction <add>, %19, %cst_5 [1] : vector<2x8xf32> to vector<2xf32>
    %21 = vector.shape_cast %20 : vector<2xf32> to vector<2x1xf32>
    %cst_6 = arith.constant 1.000000e+00 : f32
    %22 = vector.broadcast %cst_6 : f32 to vector<2x1xf32>
    %23 = arith.maximumf %21, %22 : vector<2x1xf32>
    %24 = math.rsqrt %23 : vector<2x1xf32>
    %c2_i32 = arith.constant 2 : i32
    %25 = vector.broadcast %c2_i32 : i32 to vector<1x8xi32>
    %26 = arith.cmpi eq, %0, %25 : vector<1x8xi32>
    %c0_7 = arith.constant 0 : index
    %c16 = arith.constant 16 : index
    %27 = vector.load %arg2[%c0_7, %c16] : memref<2x64xf32, #tpu.memory_space<vmem>>, vector<2x8xf32>
    %cst_8 = arith.constant 1.000000e+00 : f32
    %28 = vector.shape_cast %26 : vector<1x8xi1> to vector<1x8xi1>
    %29 = vector.broadcast %28 : vector<1x8xi1> to vector<2x8xi1>
    %30 = vector.broadcast %cst_8 : f32 to vector<2x8xf32>
    %31 = arith.select %29, %30, %27 : vector<2x8xi1>, vector<2x8xf32>
    %cst_9 = arith.constant dense<0.000000e+00> : vector<2xf32>
    %32 = vector.multi_reduction <add>, %31, %cst_9 [1] : vector<2x8xf32> to vector<2xf32>
    %33 = vector.shape_cast %32 : vector<2xf32> to vector<2x1xf32>
    %cst_10 = arith.constant 1.000000e+00 : f32
    %34 = vector.broadcast %cst_10 : f32 to vector<2x1xf32>
    %35 = arith.maximumf %33, %34 : vector<2x1xf32>
    %36 = math.rsqrt %35 : vector<2x1xf32>
    %c3_i32 = arith.constant 3 : i32
    %37 = vector.broadcast %c3_i32 : i32 to vector<1x8xi32>
    %38 = arith.cmpi eq, %0, %37 : vector<1x8xi32>
    %c0_11 = arith.constant 0 : index
    %c24 = arith.constant 24 : index
    %39 = vector.load %arg2[%c0_11, %c24] : memref<2x64xf32, #tpu.memory_space<vmem>>, vector<2x8xf32>
    %cst_12 = arith.constant 1.000000e+00 : f32
    %40 = vector.shape_cast %38 : vector<1x8xi1> to vector<1x8xi1>
    %41 = vector.broadcast %40 : vector<1x8xi1> to vector<2x8xi1>
    %42 = vector.broadcast %cst_12 : f32 to vector<2x8xf32>
    %43 = arith.select %41, %42, %39 : vector<2x8xi1>, vector<2x8xf32>
    %cst_13 = arith.constant dense<0.000000e+00> : vector<2xf32>
    %44 = vector.multi_reduction <add>, %43, %cst_13 [1] : vector<2x8xf32> to vector<2xf32>
    %45 = vector.shape_cast %44 : vector<2xf32> to vector<2x1xf32>
    %cst_14 = arith.constant 1.000000e+00 : f32
    %46 = vector.broadcast %cst_14 : f32 to vector<2x1xf32>
    %47 = arith.maximumf %45, %46 : vector<2x1xf32>
    %48 = math.rsqrt %47 : vector<2x1xf32>
    %c4_i32 = arith.constant 4 : i32
    %49 = vector.broadcast %c4_i32 : i32 to vector<1x8xi32>
    %50 = arith.cmpi eq, %0, %49 : vector<1x8xi32>
    %c0_15 = arith.constant 0 : index
    %c32 = arith.constant 32 : index
    %51 = vector.load %arg2[%c0_15, %c32] : memref<2x64xf32, #tpu.memory_space<vmem>>, vector<2x8xf32>
    %cst_16 = arith.constant 1.000000e+00 : f32
    %52 = vector.shape_cast %50 : vector<1x8xi1> to vector<1x8xi1>
    %53 = vector.broadcast %52 : vector<1x8xi1> to vector<2x8xi1>
    %54 = vector.broadcast %cst_16 : f32 to vector<2x8xf32>
    %55 = arith.select %53, %54, %51 : vector<2x8xi1>, vector<2x8xf32>
    %cst_17 = arith.constant dense<0.000000e+00> : vector<2xf32>
    %56 = vector.multi_reduction <add>, %55, %cst_17 [1] : vector<2x8xf32> to vector<2xf32>
    %57 = vector.shape_cast %56 : vector<2xf32> to vector<2x1xf32>
    %cst_18 = arith.constant 1.000000e+00 : f32
    %58 = vector.broadcast %cst_18 : f32 to vector<2x1xf32>
    %59 = arith.maximumf %57, %58 : vector<2x1xf32>
    %60 = math.rsqrt %59 : vector<2x1xf32>
    %c5_i32 = arith.constant 5 : i32
    %61 = vector.broadcast %c5_i32 : i32 to vector<1x8xi32>
    %62 = arith.cmpi eq, %0, %61 : vector<1x8xi32>
    %c0_19 = arith.constant 0 : index
    %c40 = arith.constant 40 : index
    %63 = vector.load %arg2[%c0_19, %c40] : memref<2x64xf32, #tpu.memory_space<vmem>>, vector<2x8xf32>
    %cst_20 = arith.constant 1.000000e+00 : f32
    %64 = vector.shape_cast %62 : vector<1x8xi1> to vector<1x8xi1>
    %65 = vector.broadcast %64 : vector<1x8xi1> to vector<2x8xi1>
    %66 = vector.broadcast %cst_20 : f32 to vector<2x8xf32>
    %67 = arith.select %65, %66, %63 : vector<2x8xi1>, vector<2x8xf32>
    %cst_21 = arith.constant dense<0.000000e+00> : vector<2xf32>
    %68 = vector.multi_reduction <add>, %67, %cst_21 [1] : vector<2x8xf32> to vector<2xf32>
    %69 = vector.shape_cast %68 : vector<2xf32> to vector<2x1xf32>
    %cst_22 = arith.constant 1.000000e+00 : f32
    %70 = vector.broadcast %cst_22 : f32 to vector<2x1xf32>
    %71 = arith.maximumf %69, %70 : vector<2x1xf32>
    %72 = math.rsqrt %71 : vector<2x1xf32>
    %c6_i32 = arith.constant 6 : i32
    %73 = vector.broadcast %c6_i32 : i32 to vector<1x8xi32>
    %74 = arith.cmpi eq, %0, %73 : vector<1x8xi32>
    %c0_23 = arith.constant 0 : index
    %c48 = arith.constant 48 : index
    %75 = vector.load %arg2[%c0_23, %c48] : memref<2x64xf32, #tpu.memory_space<vmem>>, vector<2x8xf32>
    %cst_24 = arith.constant 1.000000e+00 : f32
    %76 = vector.shape_cast %74 : vector<1x8xi1> to vector<1x8xi1>
    %77 = vector.broadcast %76 : vector<1x8xi1> to vector<2x8xi1>
    %78 = vector.broadcast %cst_24 : f32 to vector<2x8xf32>
    %79 = arith.select %77, %78, %75 : vector<2x8xi1>, vector<2x8xf32>
    %cst_25 = arith.constant dense<0.000000e+00> : vector<2xf32>
    %80 = vector.multi_reduction <add>, %79, %cst_25 [1] : vector<2x8xf32> to vector<2xf32>
    %81 = vector.shape_cast %80 : vector<2xf32> to vector<2x1xf32>
    %cst_26 = arith.constant 1.000000e+00 : f32
    %82 = vector.broadcast %cst_26 : f32 to vector<2x1xf32>
    %83 = arith.maximumf %81, %82 : vector<2x1xf32>
    %84 = math.rsqrt %83 : vector<2x1xf32>
    %c7_i32 = arith.constant 7 : i32
    %85 = vector.broadcast %c7_i32 : i32 to vector<1x8xi32>
    %86 = arith.cmpi eq, %0, %85 : vector<1x8xi32>
    %c0_27 = arith.constant 0 : index
    %c56 = arith.constant 56 : index
    %87 = vector.load %arg2[%c0_27, %c56] : memref<2x64xf32, #tpu.memory_space<vmem>>, vector<2x8xf32>
    %cst_28 = arith.constant 1.000000e+00 : f32
    %88 = vector.shape_cast %86 : vector<1x8xi1> to vector<1x8xi1>
    %89 = vector.broadcast %88 : vector<1x8xi1> to vector<2x8xi1>
    %90 = vector.broadcast %cst_28 : f32 to vector<2x8xf32>
    %91 = arith.select %89, %90, %87 : vector<2x8xi1>, vector<2x8xf32>
    %cst_29 = arith.constant dense<0.000000e+00> : vector<2xf32>
    %92 = vector.multi_reduction <add>, %91, %cst_29 [1] : vector<2x8xf32> to vector<2xf32>
    %93 = vector.shape_cast %92 : vector<2xf32> to vector<2x1xf32>
    %cst_30 = arith.constant 1.000000e+00 : f32
    %94 = vector.broadcast %cst_30 : f32 to vector<2x1xf32>
    %95 = arith.maximumf %93, %94 : vector<2x1xf32>
    %96 = math.rsqrt %95 : vector<2x1xf32>
    %97 = vector.extract_strided_slice %7 {offsets = [0, 0], sizes = [2, 1], strides = [1, 1]} : vector<2x8xf32> to vector<2x1xf32>
    %98 = vector.extract_strided_slice %7 {offsets = [0, 1], sizes = [2, 1], strides = [1, 1]} : vector<2x8xf32> to vector<2x1xf32>
    %99 = vector.extract_strided_slice %7 {offsets = [0, 2], sizes = [2, 1], strides = [1, 1]} : vector<2x8xf32> to vector<2x1xf32>
    %100 = vector.extract_strided_slice %7 {offsets = [0, 3], sizes = [2, 1], strides = [1, 1]} : vector<2x8xf32> to vector<2x1xf32>
    %101 = vector.extract_strided_slice %7 {offsets = [0, 4], sizes = [2, 1], strides = [1, 1]} : vector<2x8xf32> to vector<2x1xf32>
    %102 = vector.extract_strided_slice %7 {offsets = [0, 5], sizes = [2, 1], strides = [1, 1]} : vector<2x8xf32> to vector<2x1xf32>
    %103 = vector.extract_strided_slice %7 {offsets = [0, 6], sizes = [2, 1], strides = [1, 1]} : vector<2x8xf32> to vector<2x1xf32>
    %104 = vector.extract_strided_slice %7 {offsets = [0, 7], sizes = [2, 1], strides = [1, 1]} : vector<2x8xf32> to vector<2x1xf32>
    %105 = vector.extract_strided_slice %19 {offsets = [0, 0], sizes = [2, 1], strides = [1, 1]} : vector<2x8xf32> to vector<2x1xf32>
    %106 = vector.extract_strided_slice %19 {offsets = [0, 1], sizes = [2, 1], strides = [1, 1]} : vector<2x8xf32> to vector<2x1xf32>
    %107 = vector.extract_strided_slice %19 {offsets = [0, 2], sizes = [2, 1], strides = [1, 1]} : vector<2x8xf32> to vector<2x1xf32>
    %108 = vector.extract_strided_slice %19 {offsets = [0, 3], sizes = [2, 1], strides = [1, 1]} : vector<2x8xf32> to vector<2x1xf32>
    %109 = vector.extract_strided_slice %19 {offsets = [0, 4], sizes = [2, 1], strides = [1, 1]} : vector<2x8xf32> to vector<2x1xf32>
    %110 = vector.extract_strided_slice %19 {offsets = [0, 5], sizes = [2, 1], strides = [1, 1]} : vector<2x8xf32> to vector<2x1xf32>
    %111 = vector.extract_strided_slice %19 {offsets = [0, 6], sizes = [2, 1], strides = [1, 1]} : vector<2x8xf32> to vector<2x1xf32>
    %112 = vector.extract_strided_slice %19 {offsets = [0, 7], sizes = [2, 1], strides = [1, 1]} : vector<2x8xf32> to vector<2x1xf32>
    %113 = vector.extract_strided_slice %31 {offsets = [0, 0], sizes = [2, 1], strides = [1, 1]} : vector<2x8xf32> to vector<2x1xf32>
    %114 = vector.extract_strided_slice %31 {offsets = [0, 1], sizes = [2, 1], strides = [1, 1]} : vector<2x8xf32> to vector<2x1xf32>
    %115 = vector.extract_strided_slice %31 {offsets = [0, 2], sizes = [2, 1], strides = [1, 1]} : vector<2x8xf32> to vector<2x1xf32>
    %116 = vector.extract_strided_slice %31 {offsets = [0, 3], sizes = [2, 1], strides = [1, 1]} : vector<2x8xf32> to vector<2x1xf32>
    %117 = vector.extract_strided_slice %31 {offsets = [0, 4], sizes = [2, 1], strides = [1, 1]} : vector<2x8xf32> to vector<2x1xf32>
    %118 = vector.extract_strided_slice %31 {offsets = [0, 5], sizes = [2, 1], strides = [1, 1]} : vector<2x8xf32> to vector<2x1xf32>
    %119 = vector.extract_strided_slice %31 {offsets = [0, 6], sizes = [2, 1], strides = [1, 1]} : vector<2x8xf32> to vector<2x1xf32>
    %120 = vector.extract_strided_slice %31 {offsets = [0, 7], sizes = [2, 1], strides = [1, 1]} : vector<2x8xf32> to vector<2x1xf32>
    %121 = vector.extract_strided_slice %43 {offsets = [0, 0], sizes = [2, 1], strides = [1, 1]} : vector<2x8xf32> to vector<2x1xf32>
    %122 = vector.extract_strided_slice %43 {offsets = [0, 1], sizes = [2, 1], strides = [1, 1]} : vector<2x8xf32> to vector<2x1xf32>
    %123 = vector.extract_strided_slice %43 {offsets = [0, 2], sizes = [2, 1], strides = [1, 1]} : vector<2x8xf32> to vector<2x1xf32>
    %124 = vector.extract_strided_slice %43 {offsets = [0, 3], sizes = [2, 1], strides = [1, 1]} : vector<2x8xf32> to vector<2x1xf32>
    %125 = vector.extract_strided_slice %43 {offsets = [0, 4], sizes = [2, 1], strides = [1, 1]} : vector<2x8xf32> to vector<2x1xf32>
    %126 = vector.extract_strided_slice %43 {offsets = [0, 5], sizes = [2, 1], strides = [1, 1]} : vector<2x8xf32> to vector<2x1xf32>
    %127 = vector.extract_strided_slice %43 {offsets = [0, 6], sizes = [2, 1], strides = [1, 1]} : vector<2x8xf32> to vector<2x1xf32>
    %128 = vector.extract_strided_slice %43 {offsets = [0, 7], sizes = [2, 1], strides = [1, 1]} : vector<2x8xf32> to vector<2x1xf32>
    %129 = vector.extract_strided_slice %55 {offsets = [0, 0], sizes = [2, 1], strides = [1, 1]} : vector<2x8xf32> to vector<2x1xf32>
    %130 = vector.extract_strided_slice %55 {offsets = [0, 1], sizes = [2, 1], strides = [1, 1]} : vector<2x8xf32> to vector<2x1xf32>
    %131 = vector.extract_strided_slice %55 {offsets = [0, 2], sizes = [2, 1], strides = [1, 1]} : vector<2x8xf32> to vector<2x1xf32>
    %132 = vector.extract_strided_slice %55 {offsets = [0, 3], sizes = [2, 1], strides = [1, 1]} : vector<2x8xf32> to vector<2x1xf32>
    %133 = vector.extract_strided_slice %55 {offsets = [0, 4], sizes = [2, 1], strides = [1, 1]} : vector<2x8xf32> to vector<2x1xf32>
    %134 = vector.extract_strided_slice %55 {offsets = [0, 5], sizes = [2, 1], strides = [1, 1]} : vector<2x8xf32> to vector<2x1xf32>
    %135 = vector.extract_strided_slice %55 {offsets = [0, 6], sizes = [2, 1], strides = [1, 1]} : vector<2x8xf32> to vector<2x1xf32>
    %136 = vector.extract_strided_slice %55 {offsets = [0, 7], sizes = [2, 1], strides = [1, 1]} : vector<2x8xf32> to vector<2x1xf32>
    %137 = vector.extract_strided_slice %67 {offsets = [0, 0], sizes = [2, 1], strides = [1, 1]} : vector<2x8xf32> to vector<2x1xf32>
    %138 = vector.extract_strided_slice %67 {offsets = [0, 1], sizes = [2, 1], strides = [1, 1]} : vector<2x8xf32> to vector<2x1xf32>
    %139 = vector.extract_strided_slice %67 {offsets = [0, 2], sizes = [2, 1], strides = [1, 1]} : vector<2x8xf32> to vector<2x1xf32>
    %140 = vector.extract_strided_slice %67 {offsets = [0, 3], sizes = [2, 1], strides = [1, 1]} : vector<2x8xf32> to vector<2x1xf32>
    %141 = vector.extract_strided_slice %67 {offsets = [0, 4], sizes = [2, 1], strides = [1, 1]} : vector<2x8xf32> to vector<2x1xf32>
    %142 = vector.extract_strided_slice %67 {offsets = [0, 5], sizes = [2, 1], strides = [1, 1]} : vector<2x8xf32> to vector<2x1xf32>
    %143 = vector.extract_strided_slice %67 {offsets = [0, 6], sizes = [2, 1], strides = [1, 1]} : vector<2x8xf32> to vector<2x1xf32>
    %144 = vector.extract_strided_slice %67 {offsets = [0, 7], sizes = [2, 1], strides = [1, 1]} : vector<2x8xf32> to vector<2x1xf32>
    %145 = vector.extract_strided_slice %79 {offsets = [0, 0], sizes = [2, 1], strides = [1, 1]} : vector<2x8xf32> to vector<2x1xf32>
    %146 = vector.extract_strided_slice %79 {offsets = [0, 1], sizes = [2, 1], strides = [1, 1]} : vector<2x8xf32> to vector<2x1xf32>
    %147 = vector.extract_strided_slice %79 {offsets = [0, 2], sizes = [2, 1], strides = [1, 1]} : vector<2x8xf32> to vector<2x1xf32>
    %148 = vector.extract_strided_slice %79 {offsets = [0, 3], sizes = [2, 1], strides = [1, 1]} : vector<2x8xf32> to vector<2x1xf32>
    %149 = vector.extract_strided_slice %79 {offsets = [0, 4], sizes = [2, 1], strides = [1, 1]} : vector<2x8xf32> to vector<2x1xf32>
    %150 = vector.extract_strided_slice %79 {offsets = [0, 5], sizes = [2, 1], strides = [1, 1]} : vector<2x8xf32> to vector<2x1xf32>
    %151 = vector.extract_strided_slice %79 {offsets = [0, 6], sizes = [2, 1], strides = [1, 1]} : vector<2x8xf32> to vector<2x1xf32>
    %152 = vector.extract_strided_slice %79 {offsets = [0, 7], sizes = [2, 1], strides = [1, 1]} : vector<2x8xf32> to vector<2x1xf32>
    %153 = vector.extract_strided_slice %91 {offsets = [0, 0], sizes = [2, 1], strides = [1, 1]} : vector<2x8xf32> to vector<2x1xf32>
    %154 = vector.extract_strided_slice %91 {offsets = [0, 1], sizes = [2, 1], strides = [1, 1]} : vector<2x8xf32> to vector<2x1xf32>
    %155 = vector.extract_strided_slice %91 {offsets = [0, 2], sizes = [2, 1], strides = [1, 1]} : vector<2x8xf32> to vector<2x1xf32>
    %156 = vector.extract_strided_slice %91 {offsets = [0, 3], sizes = [2, 1], strides = [1, 1]} : vector<2x8xf32> to vector<2x1xf32>
    %157 = vector.extract_strided_slice %91 {offsets = [0, 4], sizes = [2, 1], strides = [1, 1]} : vector<2x8xf32> to vector<2x1xf32>
    %158 = vector.extract_strided_slice %91 {offsets = [0, 5], sizes = [2, 1], strides = [1, 1]} : vector<2x8xf32> to vector<2x1xf32>
    %159 = vector.extract_strided_slice %91 {offsets = [0, 6], sizes = [2, 1], strides = [1, 1]} : vector<2x8xf32> to vector<2x1xf32>
    %160 = vector.extract_strided_slice %91 {offsets = [0, 7], sizes = [2, 1], strides = [1, 1]} : vector<2x8xf32> to vector<2x1xf32>
    %c0_31 = arith.constant 0 : index
    %c0_32 = arith.constant 0 : index
    %161 = vector.load %arg1[%c0_31, %c0_32] : memref<2x128xf32, #tpu.memory_space<vmem>>, vector<2x16xf32>
    %c0_33 = arith.constant 0 : index
    %c16_34 = arith.constant 16 : index
    %162 = vector.load %arg1[%c0_33, %c16_34] : memref<2x128xf32, #tpu.memory_space<vmem>>, vector<2x16xf32>
    %c0_35 = arith.constant 0 : index
    %c32_36 = arith.constant 32 : index
    %163 = vector.load %arg1[%c0_35, %c32_36] : memref<2x128xf32, #tpu.memory_space<vmem>>, vector<2x16xf32>
    %c0_37 = arith.constant 0 : index
    %c48_38 = arith.constant 48 : index
    %164 = vector.load %arg1[%c0_37, %c48_38] : memref<2x128xf32, #tpu.memory_space<vmem>>, vector<2x16xf32>
    %c0_39 = arith.constant 0 : index
    %c64 = arith.constant 64 : index
    %165 = vector.load %arg1[%c0_39, %c64] : memref<2x128xf32, #tpu.memory_space<vmem>>, vector<2x16xf32>
    %c0_40 = arith.constant 0 : index
    %c80 = arith.constant 80 : index
    %166 = vector.load %arg1[%c0_40, %c80] : memref<2x128xf32, #tpu.memory_space<vmem>>, vector<2x16xf32>
    %c0_41 = arith.constant 0 : index
    %c96 = arith.constant 96 : index
    %167 = vector.load %arg1[%c0_41, %c96] : memref<2x128xf32, #tpu.memory_space<vmem>>, vector<2x16xf32>
    %c0_42 = arith.constant 0 : index
    %c112 = arith.constant 112 : index
    %168 = vector.load %arg1[%c0_42, %c112] : memref<2x128xf32, #tpu.memory_space<vmem>>, vector<2x16xf32>
    %c0_43 = arith.constant 0 : index
    %c0_44 = arith.constant 0 : index
    %169 = vector.load %arg3[%c0_43, %c0_44] : memref<16x32xf32, #tpu.memory_space<vmem>>, vector<16x32xf32>
    %c0_45 = arith.constant 0 : index
    %c0_46 = arith.constant 0 : index
    %170 = vector.load %arg4[%c0_45, %c0_46] : memref<1x32xf32, #tpu.memory_space<vmem>>, vector<1x32xf32>
    %cst_47 = arith.constant dense<0.000000e+00> : vector<2x32xf32>
    %171 = tpu.matmul %161, %169, %cst_47 {dimension_numbers = #tpu.dot_dimension_numbers<[1], [0], [0], [1], [0, 0, 1, 1], [], []>} : vector<2x16xf32>, vector<16x32xf32>, vector<2x32xf32> -> vector<2x32xf32>
    %172 = vector.broadcast %12 : vector<2x1xf32> to vector<2x32xf32>
    %173 = arith.mulf %171, %172 : vector<2x32xf32>
    %cst_48 = arith.constant dense<0.000000e+00> : vector<2x32xf32>
    %174 = tpu.matmul %162, %169, %cst_48 {dimension_numbers = #tpu.dot_dimension_numbers<[1], [0], [0], [1], [0, 0, 1, 1], [], []>} : vector<2x16xf32>, vector<16x32xf32>, vector<2x32xf32> -> vector<2x32xf32>
    %175 = vector.broadcast %24 : vector<2x1xf32> to vector<2x32xf32>
    %176 = arith.mulf %174, %175 : vector<2x32xf32>
    %cst_49 = arith.constant dense<0.000000e+00> : vector<2x32xf32>
    %177 = tpu.matmul %163, %169, %cst_49 {dimension_numbers = #tpu.dot_dimension_numbers<[1], [0], [0], [1], [0, 0, 1, 1], [], []>} : vector<2x16xf32>, vector<16x32xf32>, vector<2x32xf32> -> vector<2x32xf32>
    %178 = vector.broadcast %36 : vector<2x1xf32> to vector<2x32xf32>
    %179 = arith.mulf %177, %178 : vector<2x32xf32>
    %cst_50 = arith.constant dense<0.000000e+00> : vector<2x32xf32>
    %180 = tpu.matmul %164, %169, %cst_50 {dimension_numbers = #tpu.dot_dimension_numbers<[1], [0], [0], [1], [0, 0, 1, 1], [], []>} : vector<2x16xf32>, vector<16x32xf32>, vector<2x32xf32> -> vector<2x32xf32>
    %181 = vector.broadcast %48 : vector<2x1xf32> to vector<2x32xf32>
    %182 = arith.mulf %180, %181 : vector<2x32xf32>
    %cst_51 = arith.constant dense<0.000000e+00> : vector<2x32xf32>
    %183 = tpu.matmul %165, %169, %cst_51 {dimension_numbers = #tpu.dot_dimension_numbers<[1], [0], [0], [1], [0, 0, 1, 1], [], []>} : vector<2x16xf32>, vector<16x32xf32>, vector<2x32xf32> -> vector<2x32xf32>
    %184 = vector.broadcast %60 : vector<2x1xf32> to vector<2x32xf32>
    %185 = arith.mulf %183, %184 : vector<2x32xf32>
    %cst_52 = arith.constant dense<0.000000e+00> : vector<2x32xf32>
    %186 = tpu.matmul %166, %169, %cst_52 {dimension_numbers = #tpu.dot_dimension_numbers<[1], [0], [0], [1], [0, 0, 1, 1], [], []>} : vector<2x16xf32>, vector<16x32xf32>, vector<2x32xf32> -> vector<2x32xf32>
    %187 = vector.broadcast %72 : vector<2x1xf32> to vector<2x32xf32>
    %188 = arith.mulf %186, %187 : vector<2x32xf32>
    %cst_53 = arith.constant dense<0.000000e+00> : vector<2x32xf32>
    %189 = tpu.matmul %167, %169, %cst_53 {dimension_numbers = #tpu.dot_dimension_numbers<[1], [0], [0], [1], [0, 0, 1, 1], [], []>} : vector<2x16xf32>, vector<16x32xf32>, vector<2x32xf32> -> vector<2x32xf32>
    %190 = vector.broadcast %84 : vector<2x1xf32> to vector<2x32xf32>
    %191 = arith.mulf %189, %190 : vector<2x32xf32>
    %cst_54 = arith.constant dense<0.000000e+00> : vector<2x32xf32>
    %192 = tpu.matmul %168, %169, %cst_54 {dimension_numbers = #tpu.dot_dimension_numbers<[1], [0], [0], [1], [0, 0, 1, 1], [], []>} : vector<2x16xf32>, vector<16x32xf32>, vector<2x32xf32> -> vector<2x32xf32>
    %193 = vector.broadcast %96 : vector<2x1xf32> to vector<2x32xf32>
    %194 = arith.mulf %192, %193 : vector<2x32xf32>
    %195 = vector.broadcast %97 : vector<2x1xf32> to vector<2x32xf32>
    %196 = arith.mulf %195, %173 : vector<2x32xf32>
    %197 = vector.broadcast %98 : vector<2x1xf32> to vector<2x32xf32>
    %198 = arith.mulf %197, %176 : vector<2x32xf32>
    %199 = arith.addf %196, %198 : vector<2x32xf32>
    %200 = vector.broadcast %99 : vector<2x1xf32> to vector<2x32xf32>
    %201 = arith.mulf %200, %179 : vector<2x32xf32>
    %202 = arith.addf %199, %201 : vector<2x32xf32>
    %203 = vector.broadcast %100 : vector<2x1xf32> to vector<2x32xf32>
    %204 = arith.mulf %203, %182 : vector<2x32xf32>
    %205 = arith.addf %202, %204 : vector<2x32xf32>
    %206 = vector.broadcast %101 : vector<2x1xf32> to vector<2x32xf32>
    %207 = arith.mulf %206, %185 : vector<2x32xf32>
    %208 = arith.addf %205, %207 : vector<2x32xf32>
    %209 = vector.broadcast %102 : vector<2x1xf32> to vector<2x32xf32>
    %210 = arith.mulf %209, %188 : vector<2x32xf32>
    %211 = arith.addf %208, %210 : vector<2x32xf32>
    %212 = vector.broadcast %103 : vector<2x1xf32> to vector<2x32xf32>
    %213 = arith.mulf %212, %191 : vector<2x32xf32>
    %214 = arith.addf %211, %213 : vector<2x32xf32>
    %215 = vector.broadcast %104 : vector<2x1xf32> to vector<2x32xf32>
    %216 = arith.mulf %215, %194 : vector<2x32xf32>
    %217 = arith.addf %214, %216 : vector<2x32xf32>
    %218 = vector.broadcast %12 : vector<2x1xf32> to vector<2x32xf32>
    %219 = arith.mulf %217, %218 : vector<2x32xf32>
    %220 = vector.broadcast %170 : vector<1x32xf32> to vector<2x32xf32>
    %221 = arith.addf %219, %220 : vector<2x32xf32>
    %cst_55 = arith.constant 0.000000e+00 : f32
    %222 = vector.broadcast %cst_55 : f32 to vector<2x32xf32>
    %223 = arith.maximumf %221, %222 : vector<2x32xf32>
    %224 = vector.broadcast %105 : vector<2x1xf32> to vector<2x32xf32>
    %225 = arith.mulf %224, %173 : vector<2x32xf32>
    %226 = vector.broadcast %106 : vector<2x1xf32> to vector<2x32xf32>
    %227 = arith.mulf %226, %176 : vector<2x32xf32>
    %228 = arith.addf %225, %227 : vector<2x32xf32>
    %229 = vector.broadcast %107 : vector<2x1xf32> to vector<2x32xf32>
    %230 = arith.mulf %229, %179 : vector<2x32xf32>
    %231 = arith.addf %228, %230 : vector<2x32xf32>
    %232 = vector.broadcast %108 : vector<2x1xf32> to vector<2x32xf32>
    %233 = arith.mulf %232, %182 : vector<2x32xf32>
    %234 = arith.addf %231, %233 : vector<2x32xf32>
    %235 = vector.broadcast %109 : vector<2x1xf32> to vector<2x32xf32>
    %236 = arith.mulf %235, %185 : vector<2x32xf32>
    %237 = arith.addf %234, %236 : vector<2x32xf32>
    %238 = vector.broadcast %110 : vector<2x1xf32> to vector<2x32xf32>
    %239 = arith.mulf %238, %188 : vector<2x32xf32>
    %240 = arith.addf %237, %239 : vector<2x32xf32>
    %241 = vector.broadcast %111 : vector<2x1xf32> to vector<2x32xf32>
    %242 = arith.mulf %241, %191 : vector<2x32xf32>
    %243 = arith.addf %240, %242 : vector<2x32xf32>
    %244 = vector.broadcast %112 : vector<2x1xf32> to vector<2x32xf32>
    %245 = arith.mulf %244, %194 : vector<2x32xf32>
    %246 = arith.addf %243, %245 : vector<2x32xf32>
    %247 = vector.broadcast %24 : vector<2x1xf32> to vector<2x32xf32>
    %248 = arith.mulf %246, %247 : vector<2x32xf32>
    %249 = vector.broadcast %170 : vector<1x32xf32> to vector<2x32xf32>
    %250 = arith.addf %248, %249 : vector<2x32xf32>
    %cst_56 = arith.constant 0.000000e+00 : f32
    %251 = vector.broadcast %cst_56 : f32 to vector<2x32xf32>
    %252 = arith.maximumf %250, %251 : vector<2x32xf32>
    %253 = vector.broadcast %113 : vector<2x1xf32> to vector<2x32xf32>
    %254 = arith.mulf %253, %173 : vector<2x32xf32>
    %255 = vector.broadcast %114 : vector<2x1xf32> to vector<2x32xf32>
    %256 = arith.mulf %255, %176 : vector<2x32xf32>
    %257 = arith.addf %254, %256 : vector<2x32xf32>
    %258 = vector.broadcast %115 : vector<2x1xf32> to vector<2x32xf32>
    %259 = arith.mulf %258, %179 : vector<2x32xf32>
    %260 = arith.addf %257, %259 : vector<2x32xf32>
    %261 = vector.broadcast %116 : vector<2x1xf32> to vector<2x32xf32>
    %262 = arith.mulf %261, %182 : vector<2x32xf32>
    %263 = arith.addf %260, %262 : vector<2x32xf32>
    %264 = vector.broadcast %117 : vector<2x1xf32> to vector<2x32xf32>
    %265 = arith.mulf %264, %185 : vector<2x32xf32>
    %266 = arith.addf %263, %265 : vector<2x32xf32>
    %267 = vector.broadcast %118 : vector<2x1xf32> to vector<2x32xf32>
    %268 = arith.mulf %267, %188 : vector<2x32xf32>
    %269 = arith.addf %266, %268 : vector<2x32xf32>
    %270 = vector.broadcast %119 : vector<2x1xf32> to vector<2x32xf32>
    %271 = arith.mulf %270, %191 : vector<2x32xf32>
    %272 = arith.addf %269, %271 : vector<2x32xf32>
    %273 = vector.broadcast %120 : vector<2x1xf32> to vector<2x32xf32>
    %274 = arith.mulf %273, %194 : vector<2x32xf32>
    %275 = arith.addf %272, %274 : vector<2x32xf32>
    %276 = vector.broadcast %36 : vector<2x1xf32> to vector<2x32xf32>
    %277 = arith.mulf %275, %276 : vector<2x32xf32>
    %278 = vector.broadcast %170 : vector<1x32xf32> to vector<2x32xf32>
    %279 = arith.addf %277, %278 : vector<2x32xf32>
    %cst_57 = arith.constant 0.000000e+00 : f32
    %280 = vector.broadcast %cst_57 : f32 to vector<2x32xf32>
    %281 = arith.maximumf %279, %280 : vector<2x32xf32>
    %282 = vector.broadcast %121 : vector<2x1xf32> to vector<2x32xf32>
    %283 = arith.mulf %282, %173 : vector<2x32xf32>
    %284 = vector.broadcast %122 : vector<2x1xf32> to vector<2x32xf32>
    %285 = arith.mulf %284, %176 : vector<2x32xf32>
    %286 = arith.addf %283, %285 : vector<2x32xf32>
    %287 = vector.broadcast %123 : vector<2x1xf32> to vector<2x32xf32>
    %288 = arith.mulf %287, %179 : vector<2x32xf32>
    %289 = arith.addf %286, %288 : vector<2x32xf32>
    %290 = vector.broadcast %124 : vector<2x1xf32> to vector<2x32xf32>
    %291 = arith.mulf %290, %182 : vector<2x32xf32>
    %292 = arith.addf %289, %291 : vector<2x32xf32>
    %293 = vector.broadcast %125 : vector<2x1xf32> to vector<2x32xf32>
    %294 = arith.mulf %293, %185 : vector<2x32xf32>
    %295 = arith.addf %292, %294 : vector<2x32xf32>
    %296 = vector.broadcast %126 : vector<2x1xf32> to vector<2x32xf32>
    %297 = arith.mulf %296, %188 : vector<2x32xf32>
    %298 = arith.addf %295, %297 : vector<2x32xf32>
    %299 = vector.broadcast %127 : vector<2x1xf32> to vector<2x32xf32>
    %300 = arith.mulf %299, %191 : vector<2x32xf32>
    %301 = arith.addf %298, %300 : vector<2x32xf32>
    %302 = vector.broadcast %128 : vector<2x1xf32> to vector<2x32xf32>
    %303 = arith.mulf %302, %194 : vector<2x32xf32>
    %304 = arith.addf %301, %303 : vector<2x32xf32>
    %305 = vector.broadcast %48 : vector<2x1xf32> to vector<2x32xf32>
    %306 = arith.mulf %304, %305 : vector<2x32xf32>
    %307 = vector.broadcast %170 : vector<1x32xf32> to vector<2x32xf32>
    %308 = arith.addf %306, %307 : vector<2x32xf32>
    %cst_58 = arith.constant 0.000000e+00 : f32
    %309 = vector.broadcast %cst_58 : f32 to vector<2x32xf32>
    %310 = arith.maximumf %308, %309 : vector<2x32xf32>
    %311 = vector.broadcast %129 : vector<2x1xf32> to vector<2x32xf32>
    %312 = arith.mulf %311, %173 : vector<2x32xf32>
    %313 = vector.broadcast %130 : vector<2x1xf32> to vector<2x32xf32>
    %314 = arith.mulf %313, %176 : vector<2x32xf32>
    %315 = arith.addf %312, %314 : vector<2x32xf32>
    %316 = vector.broadcast %131 : vector<2x1xf32> to vector<2x32xf32>
    %317 = arith.mulf %316, %179 : vector<2x32xf32>
    %318 = arith.addf %315, %317 : vector<2x32xf32>
    %319 = vector.broadcast %132 : vector<2x1xf32> to vector<2x32xf32>
    %320 = arith.mulf %319, %182 : vector<2x32xf32>
    %321 = arith.addf %318, %320 : vector<2x32xf32>
    %322 = vector.broadcast %133 : vector<2x1xf32> to vector<2x32xf32>
    %323 = arith.mulf %322, %185 : vector<2x32xf32>
    %324 = arith.addf %321, %323 : vector<2x32xf32>
    %325 = vector.broadcast %134 : vector<2x1xf32> to vector<2x32xf32>
    %326 = arith.mulf %325, %188 : vector<2x32xf32>
    %327 = arith.addf %324, %326 : vector<2x32xf32>
    %328 = vector.broadcast %135 : vector<2x1xf32> to vector<2x32xf32>
    %329 = arith.mulf %328, %191 : vector<2x32xf32>
    %330 = arith.addf %327, %329 : vector<2x32xf32>
    %331 = vector.broadcast %136 : vector<2x1xf32> to vector<2x32xf32>
    %332 = arith.mulf %331, %194 : vector<2x32xf32>
    %333 = arith.addf %330, %332 : vector<2x32xf32>
    %334 = vector.broadcast %60 : vector<2x1xf32> to vector<2x32xf32>
    %335 = arith.mulf %333, %334 : vector<2x32xf32>
    %336 = vector.broadcast %170 : vector<1x32xf32> to vector<2x32xf32>
    %337 = arith.addf %335, %336 : vector<2x32xf32>
    %cst_59 = arith.constant 0.000000e+00 : f32
    %338 = vector.broadcast %cst_59 : f32 to vector<2x32xf32>
    %339 = arith.maximumf %337, %338 : vector<2x32xf32>
    %340 = vector.broadcast %137 : vector<2x1xf32> to vector<2x32xf32>
    %341 = arith.mulf %340, %173 : vector<2x32xf32>
    %342 = vector.broadcast %138 : vector<2x1xf32> to vector<2x32xf32>
    %343 = arith.mulf %342, %176 : vector<2x32xf32>
    %344 = arith.addf %341, %343 : vector<2x32xf32>
    %345 = vector.broadcast %139 : vector<2x1xf32> to vector<2x32xf32>
    %346 = arith.mulf %345, %179 : vector<2x32xf32>
    %347 = arith.addf %344, %346 : vector<2x32xf32>
    %348 = vector.broadcast %140 : vector<2x1xf32> to vector<2x32xf32>
    %349 = arith.mulf %348, %182 : vector<2x32xf32>
    %350 = arith.addf %347, %349 : vector<2x32xf32>
    %351 = vector.broadcast %141 : vector<2x1xf32> to vector<2x32xf32>
    %352 = arith.mulf %351, %185 : vector<2x32xf32>
    %353 = arith.addf %350, %352 : vector<2x32xf32>
    %354 = vector.broadcast %142 : vector<2x1xf32> to vector<2x32xf32>
    %355 = arith.mulf %354, %188 : vector<2x32xf32>
    %356 = arith.addf %353, %355 : vector<2x32xf32>
    %357 = vector.broadcast %143 : vector<2x1xf32> to vector<2x32xf32>
    %358 = arith.mulf %357, %191 : vector<2x32xf32>
    %359 = arith.addf %356, %358 : vector<2x32xf32>
    %360 = vector.broadcast %144 : vector<2x1xf32> to vector<2x32xf32>
    %361 = arith.mulf %360, %194 : vector<2x32xf32>
    %362 = arith.addf %359, %361 : vector<2x32xf32>
    %363 = vector.broadcast %72 : vector<2x1xf32> to vector<2x32xf32>
    %364 = arith.mulf %362, %363 : vector<2x32xf32>
    %365 = vector.broadcast %170 : vector<1x32xf32> to vector<2x32xf32>
    %366 = arith.addf %364, %365 : vector<2x32xf32>
    %cst_60 = arith.constant 0.000000e+00 : f32
    %367 = vector.broadcast %cst_60 : f32 to vector<2x32xf32>
    %368 = arith.maximumf %366, %367 : vector<2x32xf32>
    %369 = vector.broadcast %145 : vector<2x1xf32> to vector<2x32xf32>
    %370 = arith.mulf %369, %173 : vector<2x32xf32>
    %371 = vector.broadcast %146 : vector<2x1xf32> to vector<2x32xf32>
    %372 = arith.mulf %371, %176 : vector<2x32xf32>
    %373 = arith.addf %370, %372 : vector<2x32xf32>
    %374 = vector.broadcast %147 : vector<2x1xf32> to vector<2x32xf32>
    %375 = arith.mulf %374, %179 : vector<2x32xf32>
    %376 = arith.addf %373, %375 : vector<2x32xf32>
    %377 = vector.broadcast %148 : vector<2x1xf32> to vector<2x32xf32>
    %378 = arith.mulf %377, %182 : vector<2x32xf32>
    %379 = arith.addf %376, %378 : vector<2x32xf32>
    %380 = vector.broadcast %149 : vector<2x1xf32> to vector<2x32xf32>
    %381 = arith.mulf %380, %185 : vector<2x32xf32>
    %382 = arith.addf %379, %381 : vector<2x32xf32>
    %383 = vector.broadcast %150 : vector<2x1xf32> to vector<2x32xf32>
    %384 = arith.mulf %383, %188 : vector<2x32xf32>
    %385 = arith.addf %382, %384 : vector<2x32xf32>
    %386 = vector.broadcast %151 : vector<2x1xf32> to vector<2x32xf32>
    %387 = arith.mulf %386, %191 : vector<2x32xf32>
    %388 = arith.addf %385, %387 : vector<2x32xf32>
    %389 = vector.broadcast %152 : vector<2x1xf32> to vector<2x32xf32>
    %390 = arith.mulf %389, %194 : vector<2x32xf32>
    %391 = arith.addf %388, %390 : vector<2x32xf32>
    %392 = vector.broadcast %84 : vector<2x1xf32> to vector<2x32xf32>
    %393 = arith.mulf %391, %392 : vector<2x32xf32>
    %394 = vector.broadcast %170 : vector<1x32xf32> to vector<2x32xf32>
    %395 = arith.addf %393, %394 : vector<2x32xf32>
    %cst_61 = arith.constant 0.000000e+00 : f32
    %396 = vector.broadcast %cst_61 : f32 to vector<2x32xf32>
    %397 = arith.maximumf %395, %396 : vector<2x32xf32>
    %398 = vector.broadcast %153 : vector<2x1xf32> to vector<2x32xf32>
    %399 = arith.mulf %398, %173 : vector<2x32xf32>
    %400 = vector.broadcast %154 : vector<2x1xf32> to vector<2x32xf32>
    %401 = arith.mulf %400, %176 : vector<2x32xf32>
    %402 = arith.addf %399, %401 : vector<2x32xf32>
    %403 = vector.broadcast %155 : vector<2x1xf32> to vector<2x32xf32>
    %404 = arith.mulf %403, %179 : vector<2x32xf32>
    %405 = arith.addf %402, %404 : vector<2x32xf32>
    %406 = vector.broadcast %156 : vector<2x1xf32> to vector<2x32xf32>
    %407 = arith.mulf %406, %182 : vector<2x32xf32>
    %408 = arith.addf %405, %407 : vector<2x32xf32>
    %409 = vector.broadcast %157 : vector<2x1xf32> to vector<2x32xf32>
    %410 = arith.mulf %409, %185 : vector<2x32xf32>
    %411 = arith.addf %408, %410 : vector<2x32xf32>
    %412 = vector.broadcast %158 : vector<2x1xf32> to vector<2x32xf32>
    %413 = arith.mulf %412, %188 : vector<2x32xf32>
    %414 = arith.addf %411, %413 : vector<2x32xf32>
    %415 = vector.broadcast %159 : vector<2x1xf32> to vector<2x32xf32>
    %416 = arith.mulf %415, %191 : vector<2x32xf32>
    %417 = arith.addf %414, %416 : vector<2x32xf32>
    %418 = vector.broadcast %160 : vector<2x1xf32> to vector<2x32xf32>
    %419 = arith.mulf %418, %194 : vector<2x32xf32>
    %420 = arith.addf %417, %419 : vector<2x32xf32>
    %421 = vector.broadcast %96 : vector<2x1xf32> to vector<2x32xf32>
    %422 = arith.mulf %420, %421 : vector<2x32xf32>
    %423 = vector.broadcast %170 : vector<1x32xf32> to vector<2x32xf32>
    %424 = arith.addf %422, %423 : vector<2x32xf32>
    %cst_62 = arith.constant 0.000000e+00 : f32
    %425 = vector.broadcast %cst_62 : f32 to vector<2x32xf32>
    %426 = arith.maximumf %424, %425 : vector<2x32xf32>
    %c0_63 = arith.constant 0 : index
    %c0_64 = arith.constant 0 : index
    %427 = vector.load %arg5[%c0_63, %c0_64] : memref<32x32xf32, #tpu.memory_space<vmem>>, vector<32x32xf32>
    %c0_65 = arith.constant 0 : index
    %c0_66 = arith.constant 0 : index
    %428 = vector.load %arg6[%c0_65, %c0_66] : memref<1x32xf32, #tpu.memory_space<vmem>>, vector<1x32xf32>
    %cst_67 = arith.constant dense<0.000000e+00> : vector<2x32xf32>
    %429 = tpu.matmul %223, %427, %cst_67 {dimension_numbers = #tpu.dot_dimension_numbers<[1], [0], [0], [1], [0, 0, 1, 1], [], []>} : vector<2x32xf32>, vector<32x32xf32>, vector<2x32xf32> -> vector<2x32xf32>
    %430 = vector.broadcast %12 : vector<2x1xf32> to vector<2x32xf32>
    %431 = arith.mulf %429, %430 : vector<2x32xf32>
    %cst_68 = arith.constant dense<0.000000e+00> : vector<2x32xf32>
    %432 = tpu.matmul %252, %427, %cst_68 {dimension_numbers = #tpu.dot_dimension_numbers<[1], [0], [0], [1], [0, 0, 1, 1], [], []>} : vector<2x32xf32>, vector<32x32xf32>, vector<2x32xf32> -> vector<2x32xf32>
    %433 = vector.broadcast %24 : vector<2x1xf32> to vector<2x32xf32>
    %434 = arith.mulf %432, %433 : vector<2x32xf32>
    %cst_69 = arith.constant dense<0.000000e+00> : vector<2x32xf32>
    %435 = tpu.matmul %281, %427, %cst_69 {dimension_numbers = #tpu.dot_dimension_numbers<[1], [0], [0], [1], [0, 0, 1, 1], [], []>} : vector<2x32xf32>, vector<32x32xf32>, vector<2x32xf32> -> vector<2x32xf32>
    %436 = vector.broadcast %36 : vector<2x1xf32> to vector<2x32xf32>
    %437 = arith.mulf %435, %436 : vector<2x32xf32>
    %cst_70 = arith.constant dense<0.000000e+00> : vector<2x32xf32>
    %438 = tpu.matmul %310, %427, %cst_70 {dimension_numbers = #tpu.dot_dimension_numbers<[1], [0], [0], [1], [0, 0, 1, 1], [], []>} : vector<2x32xf32>, vector<32x32xf32>, vector<2x32xf32> -> vector<2x32xf32>
    %439 = vector.broadcast %48 : vector<2x1xf32> to vector<2x32xf32>
    %440 = arith.mulf %438, %439 : vector<2x32xf32>
    %cst_71 = arith.constant dense<0.000000e+00> : vector<2x32xf32>
    %441 = tpu.matmul %339, %427, %cst_71 {dimension_numbers = #tpu.dot_dimension_numbers<[1], [0], [0], [1], [0, 0, 1, 1], [], []>} : vector<2x32xf32>, vector<32x32xf32>, vector<2x32xf32> -> vector<2x32xf32>
    %442 = vector.broadcast %60 : vector<2x1xf32> to vector<2x32xf32>
    %443 = arith.mulf %441, %442 : vector<2x32xf32>
    %cst_72 = arith.constant dense<0.000000e+00> : vector<2x32xf32>
    %444 = tpu.matmul %368, %427, %cst_72 {dimension_numbers = #tpu.dot_dimension_numbers<[1], [0], [0], [1], [0, 0, 1, 1], [], []>} : vector<2x32xf32>, vector<32x32xf32>, vector<2x32xf32> -> vector<2x32xf32>
    %445 = vector.broadcast %72 : vector<2x1xf32> to vector<2x32xf32>
    %446 = arith.mulf %444, %445 : vector<2x32xf32>
    %cst_73 = arith.constant dense<0.000000e+00> : vector<2x32xf32>
    %447 = tpu.matmul %397, %427, %cst_73 {dimension_numbers = #tpu.dot_dimension_numbers<[1], [0], [0], [1], [0, 0, 1, 1], [], []>} : vector<2x32xf32>, vector<32x32xf32>, vector<2x32xf32> -> vector<2x32xf32>
    %448 = vector.broadcast %84 : vector<2x1xf32> to vector<2x32xf32>
    %449 = arith.mulf %447, %448 : vector<2x32xf32>
    %cst_74 = arith.constant dense<0.000000e+00> : vector<2x32xf32>
    %450 = tpu.matmul %426, %427, %cst_74 {dimension_numbers = #tpu.dot_dimension_numbers<[1], [0], [0], [1], [0, 0, 1, 1], [], []>} : vector<2x32xf32>, vector<32x32xf32>, vector<2x32xf32> -> vector<2x32xf32>
    %451 = vector.broadcast %96 : vector<2x1xf32> to vector<2x32xf32>
    %452 = arith.mulf %450, %451 : vector<2x32xf32>
    %453 = vector.broadcast %97 : vector<2x1xf32> to vector<2x32xf32>
    %454 = arith.mulf %453, %431 : vector<2x32xf32>
    %455 = vector.broadcast %98 : vector<2x1xf32> to vector<2x32xf32>
    %456 = arith.mulf %455, %434 : vector<2x32xf32>
    %457 = arith.addf %454, %456 : vector<2x32xf32>
    %458 = vector.broadcast %99 : vector<2x1xf32> to vector<2x32xf32>
    %459 = arith.mulf %458, %437 : vector<2x32xf32>
    %460 = arith.addf %457, %459 : vector<2x32xf32>
    %461 = vector.broadcast %100 : vector<2x1xf32> to vector<2x32xf32>
    %462 = arith.mulf %461, %440 : vector<2x32xf32>
    %463 = arith.addf %460, %462 : vector<2x32xf32>
    %464 = vector.broadcast %101 : vector<2x1xf32> to vector<2x32xf32>
    %465 = arith.mulf %464, %443 : vector<2x32xf32>
    %466 = arith.addf %463, %465 : vector<2x32xf32>
    %467 = vector.broadcast %102 : vector<2x1xf32> to vector<2x32xf32>
    %468 = arith.mulf %467, %446 : vector<2x32xf32>
    %469 = arith.addf %466, %468 : vector<2x32xf32>
    %470 = vector.broadcast %103 : vector<2x1xf32> to vector<2x32xf32>
    %471 = arith.mulf %470, %449 : vector<2x32xf32>
    %472 = arith.addf %469, %471 : vector<2x32xf32>
    %473 = vector.broadcast %104 : vector<2x1xf32> to vector<2x32xf32>
    %474 = arith.mulf %473, %452 : vector<2x32xf32>
    %475 = arith.addf %472, %474 : vector<2x32xf32>
    %476 = vector.broadcast %12 : vector<2x1xf32> to vector<2x32xf32>
    %477 = arith.mulf %475, %476 : vector<2x32xf32>
    %478 = vector.broadcast %428 : vector<1x32xf32> to vector<2x32xf32>
    %479 = arith.addf %477, %478 : vector<2x32xf32>
    %cst_75 = arith.constant 0.000000e+00 : f32
    %480 = vector.broadcast %cst_75 : f32 to vector<2x32xf32>
    %481 = arith.maximumf %479, %480 : vector<2x32xf32>
    %482 = vector.broadcast %105 : vector<2x1xf32> to vector<2x32xf32>
    %483 = arith.mulf %482, %431 : vector<2x32xf32>
    %484 = vector.broadcast %106 : vector<2x1xf32> to vector<2x32xf32>
    %485 = arith.mulf %484, %434 : vector<2x32xf32>
    %486 = arith.addf %483, %485 : vector<2x32xf32>
    %487 = vector.broadcast %107 : vector<2x1xf32> to vector<2x32xf32>
    %488 = arith.mulf %487, %437 : vector<2x32xf32>
    %489 = arith.addf %486, %488 : vector<2x32xf32>
    %490 = vector.broadcast %108 : vector<2x1xf32> to vector<2x32xf32>
    %491 = arith.mulf %490, %440 : vector<2x32xf32>
    %492 = arith.addf %489, %491 : vector<2x32xf32>
    %493 = vector.broadcast %109 : vector<2x1xf32> to vector<2x32xf32>
    %494 = arith.mulf %493, %443 : vector<2x32xf32>
    %495 = arith.addf %492, %494 : vector<2x32xf32>
    %496 = vector.broadcast %110 : vector<2x1xf32> to vector<2x32xf32>
    %497 = arith.mulf %496, %446 : vector<2x32xf32>
    %498 = arith.addf %495, %497 : vector<2x32xf32>
    %499 = vector.broadcast %111 : vector<2x1xf32> to vector<2x32xf32>
    %500 = arith.mulf %499, %449 : vector<2x32xf32>
    %501 = arith.addf %498, %500 : vector<2x32xf32>
    %502 = vector.broadcast %112 : vector<2x1xf32> to vector<2x32xf32>
    %503 = arith.mulf %502, %452 : vector<2x32xf32>
    %504 = arith.addf %501, %503 : vector<2x32xf32>
    %505 = vector.broadcast %24 : vector<2x1xf32> to vector<2x32xf32>
    %506 = arith.mulf %504, %505 : vector<2x32xf32>
    %507 = vector.broadcast %428 : vector<1x32xf32> to vector<2x32xf32>
    %508 = arith.addf %506, %507 : vector<2x32xf32>
    %cst_76 = arith.constant 0.000000e+00 : f32
    %509 = vector.broadcast %cst_76 : f32 to vector<2x32xf32>
    %510 = arith.maximumf %508, %509 : vector<2x32xf32>
    %511 = vector.broadcast %113 : vector<2x1xf32> to vector<2x32xf32>
    %512 = arith.mulf %511, %431 : vector<2x32xf32>
    %513 = vector.broadcast %114 : vector<2x1xf32> to vector<2x32xf32>
    %514 = arith.mulf %513, %434 : vector<2x32xf32>
    %515 = arith.addf %512, %514 : vector<2x32xf32>
    %516 = vector.broadcast %115 : vector<2x1xf32> to vector<2x32xf32>
    %517 = arith.mulf %516, %437 : vector<2x32xf32>
    %518 = arith.addf %515, %517 : vector<2x32xf32>
    %519 = vector.broadcast %116 : vector<2x1xf32> to vector<2x32xf32>
    %520 = arith.mulf %519, %440 : vector<2x32xf32>
    %521 = arith.addf %518, %520 : vector<2x32xf32>
    %522 = vector.broadcast %117 : vector<2x1xf32> to vector<2x32xf32>
    %523 = arith.mulf %522, %443 : vector<2x32xf32>
    %524 = arith.addf %521, %523 : vector<2x32xf32>
    %525 = vector.broadcast %118 : vector<2x1xf32> to vector<2x32xf32>
    %526 = arith.mulf %525, %446 : vector<2x32xf32>
    %527 = arith.addf %524, %526 : vector<2x32xf32>
    %528 = vector.broadcast %119 : vector<2x1xf32> to vector<2x32xf32>
    %529 = arith.mulf %528, %449 : vector<2x32xf32>
    %530 = arith.addf %527, %529 : vector<2x32xf32>
    %531 = vector.broadcast %120 : vector<2x1xf32> to vector<2x32xf32>
    %532 = arith.mulf %531, %452 : vector<2x32xf32>
    %533 = arith.addf %530, %532 : vector<2x32xf32>
    %534 = vector.broadcast %36 : vector<2x1xf32> to vector<2x32xf32>
    %535 = arith.mulf %533, %534 : vector<2x32xf32>
    %536 = vector.broadcast %428 : vector<1x32xf32> to vector<2x32xf32>
    %537 = arith.addf %535, %536 : vector<2x32xf32>
    %cst_77 = arith.constant 0.000000e+00 : f32
    %538 = vector.broadcast %cst_77 : f32 to vector<2x32xf32>
    %539 = arith.maximumf %537, %538 : vector<2x32xf32>
    %540 = vector.broadcast %121 : vector<2x1xf32> to vector<2x32xf32>
    %541 = arith.mulf %540, %431 : vector<2x32xf32>
    %542 = vector.broadcast %122 : vector<2x1xf32> to vector<2x32xf32>
    %543 = arith.mulf %542, %434 : vector<2x32xf32>
    %544 = arith.addf %541, %543 : vector<2x32xf32>
    %545 = vector.broadcast %123 : vector<2x1xf32> to vector<2x32xf32>
    %546 = arith.mulf %545, %437 : vector<2x32xf32>
    %547 = arith.addf %544, %546 : vector<2x32xf32>
    %548 = vector.broadcast %124 : vector<2x1xf32> to vector<2x32xf32>
    %549 = arith.mulf %548, %440 : vector<2x32xf32>
    %550 = arith.addf %547, %549 : vector<2x32xf32>
    %551 = vector.broadcast %125 : vector<2x1xf32> to vector<2x32xf32>
    %552 = arith.mulf %551, %443 : vector<2x32xf32>
    %553 = arith.addf %550, %552 : vector<2x32xf32>
    %554 = vector.broadcast %126 : vector<2x1xf32> to vector<2x32xf32>
    %555 = arith.mulf %554, %446 : vector<2x32xf32>
    %556 = arith.addf %553, %555 : vector<2x32xf32>
    %557 = vector.broadcast %127 : vector<2x1xf32> to vector<2x32xf32>
    %558 = arith.mulf %557, %449 : vector<2x32xf32>
    %559 = arith.addf %556, %558 : vector<2x32xf32>
    %560 = vector.broadcast %128 : vector<2x1xf32> to vector<2x32xf32>
    %561 = arith.mulf %560, %452 : vector<2x32xf32>
    %562 = arith.addf %559, %561 : vector<2x32xf32>
    %563 = vector.broadcast %48 : vector<2x1xf32> to vector<2x32xf32>
    %564 = arith.mulf %562, %563 : vector<2x32xf32>
    %565 = vector.broadcast %428 : vector<1x32xf32> to vector<2x32xf32>
    %566 = arith.addf %564, %565 : vector<2x32xf32>
    %cst_78 = arith.constant 0.000000e+00 : f32
    %567 = vector.broadcast %cst_78 : f32 to vector<2x32xf32>
    %568 = arith.maximumf %566, %567 : vector<2x32xf32>
    %569 = vector.broadcast %129 : vector<2x1xf32> to vector<2x32xf32>
    %570 = arith.mulf %569, %431 : vector<2x32xf32>
    %571 = vector.broadcast %130 : vector<2x1xf32> to vector<2x32xf32>
    %572 = arith.mulf %571, %434 : vector<2x32xf32>
    %573 = arith.addf %570, %572 : vector<2x32xf32>
    %574 = vector.broadcast %131 : vector<2x1xf32> to vector<2x32xf32>
    %575 = arith.mulf %574, %437 : vector<2x32xf32>
    %576 = arith.addf %573, %575 : vector<2x32xf32>
    %577 = vector.broadcast %132 : vector<2x1xf32> to vector<2x32xf32>
    %578 = arith.mulf %577, %440 : vector<2x32xf32>
    %579 = arith.addf %576, %578 : vector<2x32xf32>
    %580 = vector.broadcast %133 : vector<2x1xf32> to vector<2x32xf32>
    %581 = arith.mulf %580, %443 : vector<2x32xf32>
    %582 = arith.addf %579, %581 : vector<2x32xf32>
    %583 = vector.broadcast %134 : vector<2x1xf32> to vector<2x32xf32>
    %584 = arith.mulf %583, %446 : vector<2x32xf32>
    %585 = arith.addf %582, %584 : vector<2x32xf32>
    %586 = vector.broadcast %135 : vector<2x1xf32> to vector<2x32xf32>
    %587 = arith.mulf %586, %449 : vector<2x32xf32>
    %588 = arith.addf %585, %587 : vector<2x32xf32>
    %589 = vector.broadcast %136 : vector<2x1xf32> to vector<2x32xf32>
    %590 = arith.mulf %589, %452 : vector<2x32xf32>
    %591 = arith.addf %588, %590 : vector<2x32xf32>
    %592 = vector.broadcast %60 : vector<2x1xf32> to vector<2x32xf32>
    %593 = arith.mulf %591, %592 : vector<2x32xf32>
    %594 = vector.broadcast %428 : vector<1x32xf32> to vector<2x32xf32>
    %595 = arith.addf %593, %594 : vector<2x32xf32>
    %cst_79 = arith.constant 0.000000e+00 : f32
    %596 = vector.broadcast %cst_79 : f32 to vector<2x32xf32>
    %597 = arith.maximumf %595, %596 : vector<2x32xf32>
    %598 = vector.broadcast %137 : vector<2x1xf32> to vector<2x32xf32>
    %599 = arith.mulf %598, %431 : vector<2x32xf32>
    %600 = vector.broadcast %138 : vector<2x1xf32> to vector<2x32xf32>
    %601 = arith.mulf %600, %434 : vector<2x32xf32>
    %602 = arith.addf %599, %601 : vector<2x32xf32>
    %603 = vector.broadcast %139 : vector<2x1xf32> to vector<2x32xf32>
    %604 = arith.mulf %603, %437 : vector<2x32xf32>
    %605 = arith.addf %602, %604 : vector<2x32xf32>
    %606 = vector.broadcast %140 : vector<2x1xf32> to vector<2x32xf32>
    %607 = arith.mulf %606, %440 : vector<2x32xf32>
    %608 = arith.addf %605, %607 : vector<2x32xf32>
    %609 = vector.broadcast %141 : vector<2x1xf32> to vector<2x32xf32>
    %610 = arith.mulf %609, %443 : vector<2x32xf32>
    %611 = arith.addf %608, %610 : vector<2x32xf32>
    %612 = vector.broadcast %142 : vector<2x1xf32> to vector<2x32xf32>
    %613 = arith.mulf %612, %446 : vector<2x32xf32>
    %614 = arith.addf %611, %613 : vector<2x32xf32>
    %615 = vector.broadcast %143 : vector<2x1xf32> to vector<2x32xf32>
    %616 = arith.mulf %615, %449 : vector<2x32xf32>
    %617 = arith.addf %614, %616 : vector<2x32xf32>
    %618 = vector.broadcast %144 : vector<2x1xf32> to vector<2x32xf32>
    %619 = arith.mulf %618, %452 : vector<2x32xf32>
    %620 = arith.addf %617, %619 : vector<2x32xf32>
    %621 = vector.broadcast %72 : vector<2x1xf32> to vector<2x32xf32>
    %622 = arith.mulf %620, %621 : vector<2x32xf32>
    %623 = vector.broadcast %428 : vector<1x32xf32> to vector<2x32xf32>
    %624 = arith.addf %622, %623 : vector<2x32xf32>
    %cst_80 = arith.constant 0.000000e+00 : f32
    %625 = vector.broadcast %cst_80 : f32 to vector<2x32xf32>
    %626 = arith.maximumf %624, %625 : vector<2x32xf32>
    %627 = vector.broadcast %145 : vector<2x1xf32> to vector<2x32xf32>
    %628 = arith.mulf %627, %431 : vector<2x32xf32>
    %629 = vector.broadcast %146 : vector<2x1xf32> to vector<2x32xf32>
    %630 = arith.mulf %629, %434 : vector<2x32xf32>
    %631 = arith.addf %628, %630 : vector<2x32xf32>
    %632 = vector.broadcast %147 : vector<2x1xf32> to vector<2x32xf32>
    %633 = arith.mulf %632, %437 : vector<2x32xf32>
    %634 = arith.addf %631, %633 : vector<2x32xf32>
    %635 = vector.broadcast %148 : vector<2x1xf32> to vector<2x32xf32>
    %636 = arith.mulf %635, %440 : vector<2x32xf32>
    %637 = arith.addf %634, %636 : vector<2x32xf32>
    %638 = vector.broadcast %149 : vector<2x1xf32> to vector<2x32xf32>
    %639 = arith.mulf %638, %443 : vector<2x32xf32>
    %640 = arith.addf %637, %639 : vector<2x32xf32>
    %641 = vector.broadcast %150 : vector<2x1xf32> to vector<2x32xf32>
    %642 = arith.mulf %641, %446 : vector<2x32xf32>
    %643 = arith.addf %640, %642 : vector<2x32xf32>
    %644 = vector.broadcast %151 : vector<2x1xf32> to vector<2x32xf32>
    %645 = arith.mulf %644, %449 : vector<2x32xf32>
    %646 = arith.addf %643, %645 : vector<2x32xf32>
    %647 = vector.broadcast %152 : vector<2x1xf32> to vector<2x32xf32>
    %648 = arith.mulf %647, %452 : vector<2x32xf32>
    %649 = arith.addf %646, %648 : vector<2x32xf32>
    %650 = vector.broadcast %84 : vector<2x1xf32> to vector<2x32xf32>
    %651 = arith.mulf %649, %650 : vector<2x32xf32>
    %652 = vector.broadcast %428 : vector<1x32xf32> to vector<2x32xf32>
    %653 = arith.addf %651, %652 : vector<2x32xf32>
    %cst_81 = arith.constant 0.000000e+00 : f32
    %654 = vector.broadcast %cst_81 : f32 to vector<2x32xf32>
    %655 = arith.maximumf %653, %654 : vector<2x32xf32>
    %656 = vector.broadcast %153 : vector<2x1xf32> to vector<2x32xf32>
    %657 = arith.mulf %656, %431 : vector<2x32xf32>
    %658 = vector.broadcast %154 : vector<2x1xf32> to vector<2x32xf32>
    %659 = arith.mulf %658, %434 : vector<2x32xf32>
    %660 = arith.addf %657, %659 : vector<2x32xf32>
    %661 = vector.broadcast %155 : vector<2x1xf32> to vector<2x32xf32>
    %662 = arith.mulf %661, %437 : vector<2x32xf32>
    %663 = arith.addf %660, %662 : vector<2x32xf32>
    %664 = vector.broadcast %156 : vector<2x1xf32> to vector<2x32xf32>
    %665 = arith.mulf %664, %440 : vector<2x32xf32>
    %666 = arith.addf %663, %665 : vector<2x32xf32>
    %667 = vector.broadcast %157 : vector<2x1xf32> to vector<2x32xf32>
    %668 = arith.mulf %667, %443 : vector<2x32xf32>
    %669 = arith.addf %666, %668 : vector<2x32xf32>
    %670 = vector.broadcast %158 : vector<2x1xf32> to vector<2x32xf32>
    %671 = arith.mulf %670, %446 : vector<2x32xf32>
    %672 = arith.addf %669, %671 : vector<2x32xf32>
    %673 = vector.broadcast %159 : vector<2x1xf32> to vector<2x32xf32>
    %674 = arith.mulf %673, %449 : vector<2x32xf32>
    %675 = arith.addf %672, %674 : vector<2x32xf32>
    %676 = vector.broadcast %160 : vector<2x1xf32> to vector<2x32xf32>
    %677 = arith.mulf %676, %452 : vector<2x32xf32>
    %678 = arith.addf %675, %677 : vector<2x32xf32>
    %679 = vector.broadcast %96 : vector<2x1xf32> to vector<2x32xf32>
    %680 = arith.mulf %678, %679 : vector<2x32xf32>
    %681 = vector.broadcast %428 : vector<1x32xf32> to vector<2x32xf32>
    %682 = arith.addf %680, %681 : vector<2x32xf32>
    %cst_82 = arith.constant 0.000000e+00 : f32
    %683 = vector.broadcast %cst_82 : f32 to vector<2x32xf32>
    %684 = arith.maximumf %682, %683 : vector<2x32xf32>
    %c0_83 = arith.constant 0 : index
    %c0_84 = arith.constant 0 : index
    %685 = vector.load %arg7[%c0_83, %c0_84] : memref<32x32xf32, #tpu.memory_space<vmem>>, vector<32x32xf32>
    %c0_85 = arith.constant 0 : index
    %c0_86 = arith.constant 0 : index
    %686 = vector.load %arg8[%c0_85, %c0_86] : memref<1x32xf32, #tpu.memory_space<vmem>>, vector<1x32xf32>
    %cst_87 = arith.constant dense<0.000000e+00> : vector<2x32xf32>
    %687 = tpu.matmul %481, %685, %cst_87 {dimension_numbers = #tpu.dot_dimension_numbers<[1], [0], [0], [1], [0, 0, 1, 1], [], []>} : vector<2x32xf32>, vector<32x32xf32>, vector<2x32xf32> -> vector<2x32xf32>
    %688 = vector.broadcast %12 : vector<2x1xf32> to vector<2x32xf32>
    %689 = arith.mulf %687, %688 : vector<2x32xf32>
    %cst_88 = arith.constant dense<0.000000e+00> : vector<2x32xf32>
    %690 = tpu.matmul %510, %685, %cst_88 {dimension_numbers = #tpu.dot_dimension_numbers<[1], [0], [0], [1], [0, 0, 1, 1], [], []>} : vector<2x32xf32>, vector<32x32xf32>, vector<2x32xf32> -> vector<2x32xf32>
    %691 = vector.broadcast %24 : vector<2x1xf32> to vector<2x32xf32>
    %692 = arith.mulf %690, %691 : vector<2x32xf32>
    %cst_89 = arith.constant dense<0.000000e+00> : vector<2x32xf32>
    %693 = tpu.matmul %539, %685, %cst_89 {dimension_numbers = #tpu.dot_dimension_numbers<[1], [0], [0], [1], [0, 0, 1, 1], [], []>} : vector<2x32xf32>, vector<32x32xf32>, vector<2x32xf32> -> vector<2x32xf32>
    %694 = vector.broadcast %36 : vector<2x1xf32> to vector<2x32xf32>
    %695 = arith.mulf %693, %694 : vector<2x32xf32>
    %cst_90 = arith.constant dense<0.000000e+00> : vector<2x32xf32>
    %696 = tpu.matmul %568, %685, %cst_90 {dimension_numbers = #tpu.dot_dimension_numbers<[1], [0], [0], [1], [0, 0, 1, 1], [], []>} : vector<2x32xf32>, vector<32x32xf32>, vector<2x32xf32> -> vector<2x32xf32>
    %697 = vector.broadcast %48 : vector<2x1xf32> to vector<2x32xf32>
    %698 = arith.mulf %696, %697 : vector<2x32xf32>
    %cst_91 = arith.constant dense<0.000000e+00> : vector<2x32xf32>
    %699 = tpu.matmul %597, %685, %cst_91 {dimension_numbers = #tpu.dot_dimension_numbers<[1], [0], [0], [1], [0, 0, 1, 1], [], []>} : vector<2x32xf32>, vector<32x32xf32>, vector<2x32xf32> -> vector<2x32xf32>
    %700 = vector.broadcast %60 : vector<2x1xf32> to vector<2x32xf32>
    %701 = arith.mulf %699, %700 : vector<2x32xf32>
    %cst_92 = arith.constant dense<0.000000e+00> : vector<2x32xf32>
    %702 = tpu.matmul %626, %685, %cst_92 {dimension_numbers = #tpu.dot_dimension_numbers<[1], [0], [0], [1], [0, 0, 1, 1], [], []>} : vector<2x32xf32>, vector<32x32xf32>, vector<2x32xf32> -> vector<2x32xf32>
    %703 = vector.broadcast %72 : vector<2x1xf32> to vector<2x32xf32>
    %704 = arith.mulf %702, %703 : vector<2x32xf32>
    %cst_93 = arith.constant dense<0.000000e+00> : vector<2x32xf32>
    %705 = tpu.matmul %655, %685, %cst_93 {dimension_numbers = #tpu.dot_dimension_numbers<[1], [0], [0], [1], [0, 0, 1, 1], [], []>} : vector<2x32xf32>, vector<32x32xf32>, vector<2x32xf32> -> vector<2x32xf32>
    %706 = vector.broadcast %84 : vector<2x1xf32> to vector<2x32xf32>
    %707 = arith.mulf %705, %706 : vector<2x32xf32>
    %cst_94 = arith.constant dense<0.000000e+00> : vector<2x32xf32>
    %708 = tpu.matmul %684, %685, %cst_94 {dimension_numbers = #tpu.dot_dimension_numbers<[1], [0], [0], [1], [0, 0, 1, 1], [], []>} : vector<2x32xf32>, vector<32x32xf32>, vector<2x32xf32> -> vector<2x32xf32>
    %709 = vector.broadcast %96 : vector<2x1xf32> to vector<2x32xf32>
    %710 = arith.mulf %708, %709 : vector<2x32xf32>
    %711 = vector.broadcast %97 : vector<2x1xf32> to vector<2x32xf32>
    %712 = arith.mulf %711, %689 : vector<2x32xf32>
    %713 = vector.broadcast %98 : vector<2x1xf32> to vector<2x32xf32>
    %714 = arith.mulf %713, %692 : vector<2x32xf32>
    %715 = arith.addf %712, %714 : vector<2x32xf32>
    %716 = vector.broadcast %99 : vector<2x1xf32> to vector<2x32xf32>
    %717 = arith.mulf %716, %695 : vector<2x32xf32>
    %718 = arith.addf %715, %717 : vector<2x32xf32>
    %719 = vector.broadcast %100 : vector<2x1xf32> to vector<2x32xf32>
    %720 = arith.mulf %719, %698 : vector<2x32xf32>
    %721 = arith.addf %718, %720 : vector<2x32xf32>
    %722 = vector.broadcast %101 : vector<2x1xf32> to vector<2x32xf32>
    %723 = arith.mulf %722, %701 : vector<2x32xf32>
    %724 = arith.addf %721, %723 : vector<2x32xf32>
    %725 = vector.broadcast %102 : vector<2x1xf32> to vector<2x32xf32>
    %726 = arith.mulf %725, %704 : vector<2x32xf32>
    %727 = arith.addf %724, %726 : vector<2x32xf32>
    %728 = vector.broadcast %103 : vector<2x1xf32> to vector<2x32xf32>
    %729 = arith.mulf %728, %707 : vector<2x32xf32>
    %730 = arith.addf %727, %729 : vector<2x32xf32>
    %731 = vector.broadcast %104 : vector<2x1xf32> to vector<2x32xf32>
    %732 = arith.mulf %731, %710 : vector<2x32xf32>
    %733 = arith.addf %730, %732 : vector<2x32xf32>
    %734 = vector.broadcast %12 : vector<2x1xf32> to vector<2x32xf32>
    %735 = arith.mulf %733, %734 : vector<2x32xf32>
    %736 = vector.broadcast %686 : vector<1x32xf32> to vector<2x32xf32>
    %737 = arith.addf %735, %736 : vector<2x32xf32>
    %cst_95 = arith.constant 0.000000e+00 : f32
    %738 = vector.broadcast %cst_95 : f32 to vector<2x32xf32>
    %739 = arith.maximumf %737, %738 : vector<2x32xf32>
    %740 = vector.broadcast %105 : vector<2x1xf32> to vector<2x32xf32>
    %741 = arith.mulf %740, %689 : vector<2x32xf32>
    %742 = vector.broadcast %106 : vector<2x1xf32> to vector<2x32xf32>
    %743 = arith.mulf %742, %692 : vector<2x32xf32>
    %744 = arith.addf %741, %743 : vector<2x32xf32>
    %745 = vector.broadcast %107 : vector<2x1xf32> to vector<2x32xf32>
    %746 = arith.mulf %745, %695 : vector<2x32xf32>
    %747 = arith.addf %744, %746 : vector<2x32xf32>
    %748 = vector.broadcast %108 : vector<2x1xf32> to vector<2x32xf32>
    %749 = arith.mulf %748, %698 : vector<2x32xf32>
    %750 = arith.addf %747, %749 : vector<2x32xf32>
    %751 = vector.broadcast %109 : vector<2x1xf32> to vector<2x32xf32>
    %752 = arith.mulf %751, %701 : vector<2x32xf32>
    %753 = arith.addf %750, %752 : vector<2x32xf32>
    %754 = vector.broadcast %110 : vector<2x1xf32> to vector<2x32xf32>
    %755 = arith.mulf %754, %704 : vector<2x32xf32>
    %756 = arith.addf %753, %755 : vector<2x32xf32>
    %757 = vector.broadcast %111 : vector<2x1xf32> to vector<2x32xf32>
    %758 = arith.mulf %757, %707 : vector<2x32xf32>
    %759 = arith.addf %756, %758 : vector<2x32xf32>
    %760 = vector.broadcast %112 : vector<2x1xf32> to vector<2x32xf32>
    %761 = arith.mulf %760, %710 : vector<2x32xf32>
    %762 = arith.addf %759, %761 : vector<2x32xf32>
    %763 = vector.broadcast %24 : vector<2x1xf32> to vector<2x32xf32>
    %764 = arith.mulf %762, %763 : vector<2x32xf32>
    %765 = vector.broadcast %686 : vector<1x32xf32> to vector<2x32xf32>
    %766 = arith.addf %764, %765 : vector<2x32xf32>
    %cst_96 = arith.constant 0.000000e+00 : f32
    %767 = vector.broadcast %cst_96 : f32 to vector<2x32xf32>
    %768 = arith.maximumf %766, %767 : vector<2x32xf32>
    %769 = vector.broadcast %113 : vector<2x1xf32> to vector<2x32xf32>
    %770 = arith.mulf %769, %689 : vector<2x32xf32>
    %771 = vector.broadcast %114 : vector<2x1xf32> to vector<2x32xf32>
    %772 = arith.mulf %771, %692 : vector<2x32xf32>
    %773 = arith.addf %770, %772 : vector<2x32xf32>
    %774 = vector.broadcast %115 : vector<2x1xf32> to vector<2x32xf32>
    %775 = arith.mulf %774, %695 : vector<2x32xf32>
    %776 = arith.addf %773, %775 : vector<2x32xf32>
    %777 = vector.broadcast %116 : vector<2x1xf32> to vector<2x32xf32>
    %778 = arith.mulf %777, %698 : vector<2x32xf32>
    %779 = arith.addf %776, %778 : vector<2x32xf32>
    %780 = vector.broadcast %117 : vector<2x1xf32> to vector<2x32xf32>
    %781 = arith.mulf %780, %701 : vector<2x32xf32>
    %782 = arith.addf %779, %781 : vector<2x32xf32>
    %783 = vector.broadcast %118 : vector<2x1xf32> to vector<2x32xf32>
    %784 = arith.mulf %783, %704 : vector<2x32xf32>
    %785 = arith.addf %782, %784 : vector<2x32xf32>
    %786 = vector.broadcast %119 : vector<2x1xf32> to vector<2x32xf32>
    %787 = arith.mulf %786, %707 : vector<2x32xf32>
    %788 = arith.addf %785, %787 : vector<2x32xf32>
    %789 = vector.broadcast %120 : vector<2x1xf32> to vector<2x32xf32>
    %790 = arith.mulf %789, %710 : vector<2x32xf32>
    %791 = arith.addf %788, %790 : vector<2x32xf32>
    %792 = vector.broadcast %36 : vector<2x1xf32> to vector<2x32xf32>
    %793 = arith.mulf %791, %792 : vector<2x32xf32>
    %794 = vector.broadcast %686 : vector<1x32xf32> to vector<2x32xf32>
    %795 = arith.addf %793, %794 : vector<2x32xf32>
    %cst_97 = arith.constant 0.000000e+00 : f32
    %796 = vector.broadcast %cst_97 : f32 to vector<2x32xf32>
    %797 = arith.maximumf %795, %796 : vector<2x32xf32>
    %798 = vector.broadcast %121 : vector<2x1xf32> to vector<2x32xf32>
    %799 = arith.mulf %798, %689 : vector<2x32xf32>
    %800 = vector.broadcast %122 : vector<2x1xf32> to vector<2x32xf32>
    %801 = arith.mulf %800, %692 : vector<2x32xf32>
    %802 = arith.addf %799, %801 : vector<2x32xf32>
    %803 = vector.broadcast %123 : vector<2x1xf32> to vector<2x32xf32>
    %804 = arith.mulf %803, %695 : vector<2x32xf32>
    %805 = arith.addf %802, %804 : vector<2x32xf32>
    %806 = vector.broadcast %124 : vector<2x1xf32> to vector<2x32xf32>
    %807 = arith.mulf %806, %698 : vector<2x32xf32>
    %808 = arith.addf %805, %807 : vector<2x32xf32>
    %809 = vector.broadcast %125 : vector<2x1xf32> to vector<2x32xf32>
    %810 = arith.mulf %809, %701 : vector<2x32xf32>
    %811 = arith.addf %808, %810 : vector<2x32xf32>
    %812 = vector.broadcast %126 : vector<2x1xf32> to vector<2x32xf32>
    %813 = arith.mulf %812, %704 : vector<2x32xf32>
    %814 = arith.addf %811, %813 : vector<2x32xf32>
    %815 = vector.broadcast %127 : vector<2x1xf32> to vector<2x32xf32>
    %816 = arith.mulf %815, %707 : vector<2x32xf32>
    %817 = arith.addf %814, %816 : vector<2x32xf32>
    %818 = vector.broadcast %128 : vector<2x1xf32> to vector<2x32xf32>
    %819 = arith.mulf %818, %710 : vector<2x32xf32>
    %820 = arith.addf %817, %819 : vector<2x32xf32>
    %821 = vector.broadcast %48 : vector<2x1xf32> to vector<2x32xf32>
    %822 = arith.mulf %820, %821 : vector<2x32xf32>
    %823 = vector.broadcast %686 : vector<1x32xf32> to vector<2x32xf32>
    %824 = arith.addf %822, %823 : vector<2x32xf32>
    %cst_98 = arith.constant 0.000000e+00 : f32
    %825 = vector.broadcast %cst_98 : f32 to vector<2x32xf32>
    %826 = arith.maximumf %824, %825 : vector<2x32xf32>
    %827 = vector.broadcast %129 : vector<2x1xf32> to vector<2x32xf32>
    %828 = arith.mulf %827, %689 : vector<2x32xf32>
    %829 = vector.broadcast %130 : vector<2x1xf32> to vector<2x32xf32>
    %830 = arith.mulf %829, %692 : vector<2x32xf32>
    %831 = arith.addf %828, %830 : vector<2x32xf32>
    %832 = vector.broadcast %131 : vector<2x1xf32> to vector<2x32xf32>
    %833 = arith.mulf %832, %695 : vector<2x32xf32>
    %834 = arith.addf %831, %833 : vector<2x32xf32>
    %835 = vector.broadcast %132 : vector<2x1xf32> to vector<2x32xf32>
    %836 = arith.mulf %835, %698 : vector<2x32xf32>
    %837 = arith.addf %834, %836 : vector<2x32xf32>
    %838 = vector.broadcast %133 : vector<2x1xf32> to vector<2x32xf32>
    %839 = arith.mulf %838, %701 : vector<2x32xf32>
    %840 = arith.addf %837, %839 : vector<2x32xf32>
    %841 = vector.broadcast %134 : vector<2x1xf32> to vector<2x32xf32>
    %842 = arith.mulf %841, %704 : vector<2x32xf32>
    %843 = arith.addf %840, %842 : vector<2x32xf32>
    %844 = vector.broadcast %135 : vector<2x1xf32> to vector<2x32xf32>
    %845 = arith.mulf %844, %707 : vector<2x32xf32>
    %846 = arith.addf %843, %845 : vector<2x32xf32>
    %847 = vector.broadcast %136 : vector<2x1xf32> to vector<2x32xf32>
    %848 = arith.mulf %847, %710 : vector<2x32xf32>
    %849 = arith.addf %846, %848 : vector<2x32xf32>
    %850 = vector.broadcast %60 : vector<2x1xf32> to vector<2x32xf32>
    %851 = arith.mulf %849, %850 : vector<2x32xf32>
    %852 = vector.broadcast %686 : vector<1x32xf32> to vector<2x32xf32>
    %853 = arith.addf %851, %852 : vector<2x32xf32>
    %cst_99 = arith.constant 0.000000e+00 : f32
    %854 = vector.broadcast %cst_99 : f32 to vector<2x32xf32>
    %855 = arith.maximumf %853, %854 : vector<2x32xf32>
    %856 = vector.broadcast %137 : vector<2x1xf32> to vector<2x32xf32>
    %857 = arith.mulf %856, %689 : vector<2x32xf32>
    %858 = vector.broadcast %138 : vector<2x1xf32> to vector<2x32xf32>
    %859 = arith.mulf %858, %692 : vector<2x32xf32>
    %860 = arith.addf %857, %859 : vector<2x32xf32>
    %861 = vector.broadcast %139 : vector<2x1xf32> to vector<2x32xf32>
    %862 = arith.mulf %861, %695 : vector<2x32xf32>
    %863 = arith.addf %860, %862 : vector<2x32xf32>
    %864 = vector.broadcast %140 : vector<2x1xf32> to vector<2x32xf32>
    %865 = arith.mulf %864, %698 : vector<2x32xf32>
    %866 = arith.addf %863, %865 : vector<2x32xf32>
    %867 = vector.broadcast %141 : vector<2x1xf32> to vector<2x32xf32>
    %868 = arith.mulf %867, %701 : vector<2x32xf32>
    %869 = arith.addf %866, %868 : vector<2x32xf32>
    %870 = vector.broadcast %142 : vector<2x1xf32> to vector<2x32xf32>
    %871 = arith.mulf %870, %704 : vector<2x32xf32>
    %872 = arith.addf %869, %871 : vector<2x32xf32>
    %873 = vector.broadcast %143 : vector<2x1xf32> to vector<2x32xf32>
    %874 = arith.mulf %873, %707 : vector<2x32xf32>
    %875 = arith.addf %872, %874 : vector<2x32xf32>
    %876 = vector.broadcast %144 : vector<2x1xf32> to vector<2x32xf32>
    %877 = arith.mulf %876, %710 : vector<2x32xf32>
    %878 = arith.addf %875, %877 : vector<2x32xf32>
    %879 = vector.broadcast %72 : vector<2x1xf32> to vector<2x32xf32>
    %880 = arith.mulf %878, %879 : vector<2x32xf32>
    %881 = vector.broadcast %686 : vector<1x32xf32> to vector<2x32xf32>
    %882 = arith.addf %880, %881 : vector<2x32xf32>
    %cst_100 = arith.constant 0.000000e+00 : f32
    %883 = vector.broadcast %cst_100 : f32 to vector<2x32xf32>
    %884 = arith.maximumf %882, %883 : vector<2x32xf32>
    %885 = vector.broadcast %145 : vector<2x1xf32> to vector<2x32xf32>
    %886 = arith.mulf %885, %689 : vector<2x32xf32>
    %887 = vector.broadcast %146 : vector<2x1xf32> to vector<2x32xf32>
    %888 = arith.mulf %887, %692 : vector<2x32xf32>
    %889 = arith.addf %886, %888 : vector<2x32xf32>
    %890 = vector.broadcast %147 : vector<2x1xf32> to vector<2x32xf32>
    %891 = arith.mulf %890, %695 : vector<2x32xf32>
    %892 = arith.addf %889, %891 : vector<2x32xf32>
    %893 = vector.broadcast %148 : vector<2x1xf32> to vector<2x32xf32>
    %894 = arith.mulf %893, %698 : vector<2x32xf32>
    %895 = arith.addf %892, %894 : vector<2x32xf32>
    %896 = vector.broadcast %149 : vector<2x1xf32> to vector<2x32xf32>
    %897 = arith.mulf %896, %701 : vector<2x32xf32>
    %898 = arith.addf %895, %897 : vector<2x32xf32>
    %899 = vector.broadcast %150 : vector<2x1xf32> to vector<2x32xf32>
    %900 = arith.mulf %899, %704 : vector<2x32xf32>
    %901 = arith.addf %898, %900 : vector<2x32xf32>
    %902 = vector.broadcast %151 : vector<2x1xf32> to vector<2x32xf32>
    %903 = arith.mulf %902, %707 : vector<2x32xf32>
    %904 = arith.addf %901, %903 : vector<2x32xf32>
    %905 = vector.broadcast %152 : vector<2x1xf32> to vector<2x32xf32>
    %906 = arith.mulf %905, %710 : vector<2x32xf32>
    %907 = arith.addf %904, %906 : vector<2x32xf32>
    %908 = vector.broadcast %84 : vector<2x1xf32> to vector<2x32xf32>
    %909 = arith.mulf %907, %908 : vector<2x32xf32>
    %910 = vector.broadcast %686 : vector<1x32xf32> to vector<2x32xf32>
    %911 = arith.addf %909, %910 : vector<2x32xf32>
    %cst_101 = arith.constant 0.000000e+00 : f32
    %912 = vector.broadcast %cst_101 : f32 to vector<2x32xf32>
    %913 = arith.maximumf %911, %912 : vector<2x32xf32>
    %914 = vector.broadcast %153 : vector<2x1xf32> to vector<2x32xf32>
    %915 = arith.mulf %914, %689 : vector<2x32xf32>
    %916 = vector.broadcast %154 : vector<2x1xf32> to vector<2x32xf32>
    %917 = arith.mulf %916, %692 : vector<2x32xf32>
    %918 = arith.addf %915, %917 : vector<2x32xf32>
    %919 = vector.broadcast %155 : vector<2x1xf32> to vector<2x32xf32>
    %920 = arith.mulf %919, %695 : vector<2x32xf32>
    %921 = arith.addf %918, %920 : vector<2x32xf32>
    %922 = vector.broadcast %156 : vector<2x1xf32> to vector<2x32xf32>
    %923 = arith.mulf %922, %698 : vector<2x32xf32>
    %924 = arith.addf %921, %923 : vector<2x32xf32>
    %925 = vector.broadcast %157 : vector<2x1xf32> to vector<2x32xf32>
    %926 = arith.mulf %925, %701 : vector<2x32xf32>
    %927 = arith.addf %924, %926 : vector<2x32xf32>
    %928 = vector.broadcast %158 : vector<2x1xf32> to vector<2x32xf32>
    %929 = arith.mulf %928, %704 : vector<2x32xf32>
    %930 = arith.addf %927, %929 : vector<2x32xf32>
    %931 = vector.broadcast %159 : vector<2x1xf32> to vector<2x32xf32>
    %932 = arith.mulf %931, %707 : vector<2x32xf32>
    %933 = arith.addf %930, %932 : vector<2x32xf32>
    %934 = vector.broadcast %160 : vector<2x1xf32> to vector<2x32xf32>
    %935 = arith.mulf %934, %710 : vector<2x32xf32>
    %936 = arith.addf %933, %935 : vector<2x32xf32>
    %937 = vector.broadcast %96 : vector<2x1xf32> to vector<2x32xf32>
    %938 = arith.mulf %936, %937 : vector<2x32xf32>
    %939 = vector.broadcast %686 : vector<1x32xf32> to vector<2x32xf32>
    %940 = arith.addf %938, %939 : vector<2x32xf32>
    %cst_102 = arith.constant 0.000000e+00 : f32
    %941 = vector.broadcast %cst_102 : f32 to vector<2x32xf32>
    %942 = arith.maximumf %940, %941 : vector<2x32xf32>
    %943 = arith.addf %739, %768 : vector<2x32xf32>
    %944 = arith.addf %943, %797 : vector<2x32xf32>
    %945 = arith.addf %944, %826 : vector<2x32xf32>
    %946 = arith.addf %945, %855 : vector<2x32xf32>
    %947 = arith.addf %946, %884 : vector<2x32xf32>
    %948 = arith.addf %947, %913 : vector<2x32xf32>
    %949 = arith.addf %948, %942 : vector<2x32xf32>
    %cst_103 = arith.constant 1.250000e-01 : f32
    %950 = vector.broadcast %cst_103 : f32 to vector<2x32xf32>
    %951 = arith.mulf %949, %950 : vector<2x32xf32>
    %c0_104 = arith.constant 0 : index
    %c0_105 = arith.constant 0 : index
    %952 = vector.load %arg9[%c0_104, %c0_105] : memref<4x32xf32, #tpu.memory_space<vmem>>, vector<4x32xf32>
    "tpu.trace_start"() <{level = 10 : i32, message = "ch,bh->cb"}> : () -> ()
    %cst_106 = arith.constant dense<0.000000e+00> : vector<4x2xf32>
    %953 = tpu.matmul %952, %951, %cst_106 {dimension_numbers = #tpu.dot_dimension_numbers<[1], [1], [0], [0], [0, 0, 1, 0], [], []>} : vector<4x32xf32>, vector<2x32xf32>, vector<4x2xf32> -> vector<4x2xf32>
    "tpu.trace_stop"() : () -> ()
    %c0_107 = arith.constant 0 : index
    %c0_108 = arith.constant 0 : index
    %954 = vector.load %arg10[%c0_107, %c0_108] : memref<4x1xf32, #tpu.memory_space<vmem>>, vector<4x1xf32>
    %955 = vector.broadcast %954 : vector<4x1xf32> to vector<4x2xf32>
    %956 = arith.addf %953, %955 : vector<4x2xf32>
    %cst_109 = arith.constant dense<0xFF800000> : vector<2xf32>
    %957 = vector.multi_reduction <maximumf>, %956, %cst_109 [0] : vector<4x2xf32> to vector<2xf32>
    %958 = vector.shape_cast %957 : vector<2xf32> to vector<1x2xf32>
    %959 = vector.broadcast %958 : vector<1x2xf32> to vector<4x2xf32>
    %960 = arith.subf %956, %959 : vector<4x2xf32>
    %961 = math.exp %960 : vector<4x2xf32>
    %cst_110 = arith.constant dense<0.000000e+00> : vector<2xf32>
    %962 = vector.multi_reduction <add>, %961, %cst_110 [0] : vector<4x2xf32> to vector<2xf32>
    %963 = vector.shape_cast %962 : vector<2xf32> to vector<1x2xf32>
    %964 = math.log %963 : vector<1x2xf32>
    %965 = arith.addf %964, %958 : vector<1x2xf32>
    %966 = vector.broadcast %965 : vector<1x2xf32> to vector<4x2xf32>
    %967 = arith.subf %956, %966 : vector<4x2xf32>
    %968 = vector.shape_cast %967 : vector<4x2xf32> to vector<1x4x2xf32>
    %c0_111 = arith.constant 0 : index
    %c0_112 = arith.constant 0 : index
    %c0_113 = arith.constant 0 : index
    %969 = vector.load %arg11[%c0_111, %c0_112, %c0_113] : memref<1x4x2xf32, #tpu.memory_space<vmem>>, vector<1x4x2xf32>
    tpu.vector_store %arg11[%c0_111, %c0_112, %c0_113], %968 {strides = array<i32>} : memref<1x4x2xf32, #tpu.memory_space<vmem>>, vector<1x4x2xf32>,
    return
  }
  func.func @transform_0(%arg0: i32) -> (i32, i32) {
    %c0_i32 = arith.constant 0 : i32
    %c0_i32_0 = arith.constant 0 : i32
    return %arg0, %c0_i32 : i32, i32
  }
  func.func @transform_1(%arg0: i32) -> (i32, i32) {
    %c0_i32 = arith.constant 0 : i32
    %c0_i32_0 = arith.constant 0 : i32
    return %arg0, %c0_i32 : i32, i32
  }
  func.func @transform_2(%arg0: i32) -> (i32, i32) {
    %c0_i32 = arith.constant 0 : i32
    %c0_i32_0 = arith.constant 0 : i32
    %c0_i32_1 = arith.constant 0 : i32
    return %c0_i32, %c0_i32_0 : i32, i32
  }
  func.func @transform_3(%arg0: i32) -> (i32, i32) {
    %c0_i32 = arith.constant 0 : i32
    %c0_i32_0 = arith.constant 0 : i32
    %c0_i32_1 = arith.constant 0 : i32
    return %c0_i32, %c0_i32_0 : i32, i32
  }
  func.func @transform_4(%arg0: i32) -> (i32, i32) {
    %c0_i32 = arith.constant 0 : i32
    %c0_i32_0 = arith.constant 0 : i32
    %c0_i32_1 = arith.constant 0 : i32
    return %c0_i32, %c0_i32_0 : i32, i32
  }
  func.func @transform_5(%arg0: i32) -> (i32, i32) {
    %c0_i32 = arith.constant 0 : i32
    %c0_i32_0 = arith.constant 0 : i32
    %c0_i32_1 = arith.constant 0 : i32
    return %c0_i32, %c0_i32_0 : i32, i32
  }
  func.func @transform_6(%arg0: i32) -> (i32, i32) {
    %c0_i32 = arith.constant 0 : i32
    %c0_i32_0 = arith.constant 0 : i32
    %c0_i32_1 = arith.constant 0 : i32
    return %c0_i32, %c0_i32_0 : i32, i32
  }
  func.func @transform_7(%arg0: i32) -> (i32, i32) {
    %c0_i32 = arith.constant 0 : i32
    %c0_i32_0 = arith.constant 0 : i32
    %c0_i32_1 = arith.constant 0 : i32
    return %c0_i32, %c0_i32_0 : i32, i32
  }
  func.func @transform_8(%arg0: i32) -> (i32, i32) {
    %c0_i32 = arith.constant 0 : i32
    %c0_i32_0 = arith.constant 0 : i32
    %c0_i32_1 = arith.constant 0 : i32
    return %c0_i32, %c0_i32_0 : i32, i32
  }
  func.func @transform_9(%arg0: i32) -> (i32, i32) {
    %c0_i32 = arith.constant 0 : i32
    %c0_i32_0 = arith.constant 0 : i32
    %c0_i32_1 = arith.constant 0 : i32
    return %c0_i32, %c0_i32_0 : i32, i32
  }
  func.func @transform_10(%arg0: i32) -> (i32, i32, i32) {
    %c0_i32 = arith.constant 0 : i32
    %c0_i32_0 = arith.constant 0 : i32
    %c0_i32_1 = arith.constant 0 : i32
    return %arg0, %c0_i32, %c0_i32_0 : i32, i32, i32
  }
}

</mosaic_0001>

<llo_original>
// kernel: tpu_custom_call.1
$region0: #{tpu_custom_call.1}
  #allocation0 [shape = 'u32[]', space=smem, size = 0x4, offset = 0x4, fixed_abs, tag = 'smem constant byte address 0x4 - core index']
  #allocation1 [shape = 'u32[144,128]{1,0:T(1,128)}', space=vmem, size = 0x12000, scoped, tag = 'internal scratch']
  %s0 = inlined_call_operand.vmem [shape: f32[2,128], index: 0, kind: input, shape index: {}]
  %s1 = inlined_call_operand.vmem [shape: f32[2,64], index: 1, kind: input, shape index: {}]
  %s2 = inlined_call_operand.hbm [shape: f32[16,32], index: 2, kind: input, shape index: {}]
  %s3 = inlined_call_operand.vmem [shape: f32[1,32], index: 3, kind: input, shape index: {}]
  %s4 = inlined_call_operand.hbm [shape: f32[32,32], index: 4, kind: input, shape index: {}]
  %s5 = inlined_call_operand.vmem [shape: f32[1,32], index: 5, kind: input, shape index: {}]
  %s6 = inlined_call_operand.hbm [shape: f32[32,32], index: 6, kind: input, shape index: {}]
  %s7 = inlined_call_operand.vmem [shape: f32[1,32], index: 7, kind: input, shape index: {}]
  %s8 = inlined_call_operand.vmem [shape: f32[4,32], index: 8, kind: input, shape index: {}]
  %s9 = inlined_call_operand.vmem [shape: f32[4,1], index: 9, kind: input, shape index: {}]
  %s10 = inlined_call_operand.vmem [shape: f32[1,4,2], index: 10, kind: output, shape index: {}]
  %s11 = sld [smem:[#allocation0]]
  $region62: #{tpu_custom_call.1} parent=0
    _
  %s13 = ssub.s32 1, %s11
  %s14 = scalar_select 0, %s13, %s11
  $region1: #{tpu_custom_call.1} parent=0
    #allocation2 [shape = 'u8[8192]{0}', space=vmem, size = 0x2000, scoped, tag = 'input window, operand 2, single buffered']
    #allocation3 [shape = 's32[1]{0}', space=sflag, size = 0x4, scoped, tag = 'scoped memory for tpu_custom_call.1']
    #allocation4 [shape = 'u8[16384]{0}', space=vmem, size = 0x4000, scoped, tag = 'input window, operand 4, single buffered']
    #allocation5 [shape = 's32[1]{0}', space=sflag, size = 0x4, scoped, tag = 'scoped memory for tpu_custom_call.1']
    #allocation6 [shape = 'u8[16384]{0}', space=vmem, size = 0x4000, scoped, tag = 'input window, operand 6, single buffered']
    %15 = vsyncpa [#allocation3], 0
    %16 = vsyncpa [#allocation5], 0
    // Predicated region
    $region2: #{tpu_custom_call.1} parent=1 // pred_check
      _
    $region3: #{tpu_custom_call.1} parent=1 // pred_check_branch
      %18 = sbr.rel (0) target = $region5
    $region4: #{tpu_custom_call.1} parent=1 // pred_region
      _
    $region5: #{tpu_custom_call.1} parent=1 // pred_fallthru
      _
    // Predicated region
    $region6: #{tpu_custom_call.1} parent=1 // pred_check
      _
    $region7: #{tpu_custom_call.1} parent=1 // pred_check_branch
      %20 = sbr.rel (0) target = $region9
    $region8: #{tpu_custom_call.1} parent=1 // pred_region
      _
    $region9: #{tpu_custom_call.1} parent=1 // pred_fallthru
      _
    // Predicated region
    $region10: #{tpu_custom_call.1} parent=1 // pred_check
      _
    $region11: #{tpu_custom_call.1} parent=1 // pred_check_branch
      %22 = sbr.rel (0) target = $region13
    $region12: #{tpu_custom_call.1} parent=1 // pred_region
      %s24 = ssub.s32 256, 256
      %25 = vsyncadd [#allocation3], %s24
      %s26 = sshll.u32 [#allocation2], 4
      %s27 = int_to_ptr.vmem [resolvable:$true] %s26
      %32 = dma.hbm_to_vmem [thread:$0]  %s2, 256, %s27, [#allocation3], 128, 128, 8
    $region13: #{tpu_custom_call.1} parent=1 // pred_fallthru
      _
    // Predicated region
    $region14: #{tpu_custom_call.1} parent=1 // pred_check
      _
    $region15: #{tpu_custom_call.1} parent=1 // pred_check_branch
      %34 = sbr.rel (0) target = $region17
    $region16: #{tpu_custom_call.1} parent=1 // pred_region
      _
    $region17: #{tpu_custom_call.1} parent=1 // pred_fallthru
      _
    // Predicated region
    $region18: #{tpu_custom_call.1} parent=1 // pred_check
      _
    $region19: #{tpu_custom_call.1} parent=1 // pred_check_branch
      %36 = sbr.rel (0) target = $region21
    $region20: #{tpu_custom_call.1} parent=1 // pred_region
      %s38 = ssub.s32 512, 512
      %39 = vsyncadd [#allocation5], %s38
      %s40 = sshll.u32 [#allocation4], 4
      %s41 = int_to_ptr.vmem [resolvable:$true] %s40
      %46 = dma.hbm_to_vmem [thread:$0]  %s4, 512, %s41, [#allocation5], 128, 128, 8
    $region21: #{tpu_custom_call.1} parent=1 // pred_fallthru
      _
    // Predicated region
    $region22: #{tpu_custom_call.1} parent=1 // pred_check
      _
    $region23: #{tpu_custom_call.1} parent=1 // pred_check_branch
      %48 = sbr.rel (0) target = $region25
    $region24: #{tpu_custom_call.1} parent=1 // pred_region
      _
    $region25: #{tpu_custom_call.1} parent=1 // pred_fallthru
      _
    // Predicated region
    $region26: #{tpu_custom_call.1} parent=1 // pred_check
      _
    $region27: #{tpu_custom_call.1} parent=1 // pred_check_branch
      %50 = sbr.rel (0) target = $region29
    $region28: #{tpu_custom_call.1} parent=1 // pred_region
      %s52 = ssub.s32 512, 512
      %53 = vsyncadd [#allocation5], %s52
      %s54 = sshll.u32 [#allocation6], 4
      %s55 = int_to_ptr.vmem [resolvable:$true] %s54
      %60 = dma.hbm_to_vmem [thread:$0]  %s6, 512, %s55, [#allocation5], 128, 128, 8
    $region29: #{tpu_custom_call.1} parent=1 // pred_fallthru
      _
    // Predicated region
    $region30: #{tpu_custom_call.1} parent=1 // pred_check
      _
    $region31: #{tpu_custom_call.1} parent=1 // pred_check_branch
      %62 = sbr.rel (0) target = $region33
    $region32: #{tpu_custom_call.1} parent=1 // pred_region
      _
    $region33: #{tpu_custom_call.1} parent=1 // pred_fallthru
      _
    // Predicated region
    $region34: #{tpu_custom_call.1} parent=1 // pred_check
      _
    $region35: #{tpu_custom_call.1} parent=1 // pred_check_branch
      %64 = sbr.rel (0) target = $region37
    $region36: #{tpu_custom_call.1} parent=1 // pred_region
      _
    $region37: #{tpu_custom_call.1} parent=1 // pred_fallthru
      _
    // Predicated region
    $region38: #{tpu_custom_call.1} parent=1 // pred_check
      _
    $region39: #{tpu_custom_call.1} parent=1 // pred_check_branch
      %66 = sbr.rel (0) target = $region41
    $region40: #{tpu_custom_call.1} parent=1 // pred_region
      _
    $region41: #{tpu_custom_call.1} parent=1 // pred_fallthru
      _
    // Predicated region
    $region42: #{tpu_custom_call.1} parent=1 // pred_check
      _
    $region43: #{tpu_custom_call.1} parent=1 // pred_check_branch
      %68 = sbr.rel (0) target = $region45
    $region44: #{tpu_custom_call.1} parent=1 // pred_region
      %69 = dma.done [#allocation3], 256
    $region45: #{tpu_custom_call.1} parent=1 // pred_fallthru
      _
    // Predicated region
    $region46: #{tpu_custom_call.1} parent=1 // pred_check
      _
    $region47: #{tpu_custom_call.1} parent=1 // pred_check_branch
      %71 = sbr.rel (0) target = $region49
    $region48: #{tpu_custom_call.1} parent=1 // pred_region
      %72 = dma.done [#allocation5], 512
    $region49: #{tpu_custom_call.1} parent=1 // pred_fallthru
      _
    // Predicated region
    $region50: #{tpu_custom_call.1} parent=1 // pred_check
      _
    $region51: #{tpu_custom_call.1} parent=1 // pred_check_branch
      %74 = sbr.rel (0) target = $region53
    $region52: #{tpu_custom_call.1} parent=1 // pred_region
      %75 = dma.done [#allocation5], 512
    $region53: #{tpu_custom_call.1} parent=1 // pred_fallthru
      _
    %v76 = vlaneseq
    %v77 = vand.u32 %v76, 127
    %vm78 = vcmp.eq.s32.totalorder %v77, 0
    %v79 = vld [vmem:[%s1] sm:$0x3]
    %v80 = vsel %vm78, 1, 0
    %vm81 = vcmp.eq.s32.totalorder %v80, 1
    %v82 = vsel %vm81, 1.0, %v79
    %vm83 = vcmask 58368
    %v84 = vsel %vm83, %v82, 0.0
    %85 = vadd.xlane.f32.xlu0 %v84
    %v86 = vpop.xlane.xlu0 %85
    %v87 = vmax.f32 %v86, 1.0
    %v88 = vrsqrt.pop %v87
    %vm89 = vcmp.eq.s32.totalorder %v77, 1
    %v90 = vsel %vm89, 1, 0
    %vm91 = vcmp.eq.s32.totalorder %v90, 1
    %93 = vrot.lane.b32.xlu0 %v79, 120
    %v94 = vpop.permute.xlu0 %93
    %v96 = vsel %vm91, 1.0, %v94
    %v97 = vsel %vm83, %v96, 0.0
    %98 = vadd.xlane.f32.xlu0 %v97
    %v99 = vpop.xlane.xlu0 %98
    %v100 = vmax.f32 %v99, 1.0
    %v101 = vrsqrt.pop %v100
    %vm102 = vcmp.eq.s32.totalorder %v77, 2
    %v103 = vsel %vm102, 1, 0
    %vm104 = vcmp.eq.s32.totalorder %v103, 1
    %105 = vrot.lane.b32.xlu0 %v79, 112
    %v106 = vpop.permute.xlu0 %105
    %v108 = vsel %vm104, 1.0, %v106
    %v109 = vsel %vm83, %v108, 0.0
    %110 = vadd.xlane.f32.xlu0 %v109
    %v111 = vpop.xlane.xlu0 %110
    %v112 = vmax.f32 %v111, 1.0
    %v113 = vrsqrt.pop %v112
    %vm114 = vcmp.eq.s32.totalorder %v77, 3
    %v115 = vsel %vm114, 1, 0
    %vm116 = vcmp.eq.s32.totalorder %v115, 1
    %117 = vrot.lane.b32.xlu0 %v79, 104
    %v118 = vpop.permute.xlu0 %117
    %v120 = vsel %vm116, 1.0, %v118
    %v121 = vsel %vm83, %v120, 0.0
    %122 = vadd.xlane.f32.xlu0 %v121
    %v123 = vpop.xlane.xlu0 %122
    %v124 = vmax.f32 %v123, 1.0
    %v125 = vrsqrt.pop %v124
    %vm126 = vcmp.eq.s32.totalorder %v77, 4
    %v127 = vsel %vm126, 1, 0
    %vm128 = vcmp.eq.s32.totalorder %v127, 1
    %129 = vrot.lane.b32.xlu0 %v79, 96
    %v130 = vpop.permute.xlu0 %129
    %v132 = vsel %vm128, 1.0, %v130
    %v133 = vsel %vm83, %v132, 0.0
    %134 = vadd.xlane.f32.xlu0 %v133
    %v135 = vpop.xlane.xlu0 %134
    %v136 = vmax.f32 %v135, 1.0
    %v137 = vrsqrt.pop %v136
    %vm138 = vcmp.eq.s32.totalorder %v77, 5
    %v139 = vsel %vm138, 1, 0
    %vm140 = vcmp.eq.s32.totalorder %v139, 1
    %141 = vrot.lane.b32.xlu0 %v79, 88
    %v142 = vpop.permute.xlu0 %141
    %v144 = vsel %vm140, 1.0, %v142
    %v145 = vsel %vm83, %v144, 0.0
    %146 = vadd.xlane.f32.xlu0 %v145
    %v147 = vpop.xlane.xlu0 %146
    %v148 = vmax.f32 %v147, 1.0
    %v149 = vrsqrt.pop %v148
    %vm150 = vcmp.eq.s32.totalorder %v77, 6
    %v151 = vsel %vm150, 1, 0
    %vm152 = vcmp.eq.s32.totalorder %v151, 1
    %153 = vrot.lane.b32.xlu0 %v79, 80
    %v154 = vpop.permute.xlu0 %153
    %v156 = vsel %vm152, 1.0, %v154
    %v157 = vsel %vm83, %v156, 0.0
    %158 = vadd.xlane.f32.xlu0 %v157
    %v159 = vpop.xlane.xlu0 %158
    %v160 = vmax.f32 %v159, 1.0
    %v161 = vrsqrt.pop %v160
    %vm162 = vcmp.eq.s32.totalorder %v77, 7
    %v163 = vsel %vm162, 1, 0
    %vm164 = vcmp.eq.s32.totalorder %v163, 1
    %165 = vrot.lane.b32.xlu0 %v79, 72
    %v166 = vpop.permute.xlu0 %165
    %v168 = vsel %vm164, 1.0, %v166
    %v169 = vsel %vm83, %v168, 0.0
    %170 = vadd.xlane.f32.xlu0 %v169
    %v171 = vpop.xlane.xlu0 %170
    %v172 = vmax.f32 %v171, 1.0
    %v173 = vrsqrt.pop %v172
    %v174 = vld [vmem:[%s0] sm:$0x3]
    %v175 = vld [vmem:[#allocation2] sm:$0xff]
    %v176 = vld [vmem:[#allocation2 + $0x8] sm:$0xff]
    %v177 = vld [vmem:[%s3] sm:$0x1]
    %vm178 = vcmask 130048
    %v180 = vsel %vm178, %v174, 0
    %182 = vmatprep.subr.mxu0 0.0
    %183 = vmatpush1.msra.mxu0 0.0
    %184 = vmatprep.subr.mxu0 0.0
    %185 = vmatpush1.msra.mxu0 0.0
    %186 = vmatprep.subr.mxu0 0.0
    %187 = vmatpush1.msra.mxu0 0.0
    %188 = vmatprep.subr.mxu0 0.0
    %189 = vmatpush1.msra.mxu0 0.0
    %190 = vmatprep.subr.mxu0 0.0
    %191 = vmatpush1.msra.mxu0 0.0
    %192 = vmatprep.subr.mxu0 0.0
    %193 = vmatpush1.msra.mxu0 0.0
    %194 = vmatprep.subr.mxu0 0.0
    %195 = vmatpush1.msra.mxu0 0.0
    %196 = vmatprep.subr.mxu0 0.0
    %197 = vmatpush1.msra.mxu0 0.0
    %198 = vmatprep.subr.mxu0 0.0
    %199 = vmatpush1.msra.mxu0 0.0
    %200 = vmatprep.subr.mxu0 0.0
    %201 = vmatpush1.msra.mxu0 0.0
    %202 = vmatprep.subr.mxu0 0.0
    %203 = vmatpush1.msra.mxu0 0.0
    %204 = vmatprep.subr.mxu0 0.0
    %205 = vmatpush1.msra.mxu0 0.0
    %206 = vmatprep.subr.mxu0 0.0
    %207 = vmatpush1.msra.mxu0 0.0
    %208 = vmatprep.subr.mxu0 0.0
    %209 = vmatpush1.msra.mxu0 0.0
    %210 = vmatprep.subr.mxu0 0.0
    %211 = vmatpush1.msra.mxu0 %v176
    %212 = vmatprep.subr.mxu0 0.0
    %213 = vmatpush1.msra.mxu0 %v175
    %214 = vmatprep.subr.mxu0 0.0
    %215 = vmatpush2.msra.mxu0 0.0
    %216 = vmatprep.subr.mxu0 0.0
    %217 = vmatpush2.msra.mxu0 0.0
    %218 = vmatprep.subr.mxu0 0.0
    %219 = vmatpush2.msra.mxu0 0.0
    %220 = vmatprep.subr.mxu0 0.0
    %221 = vmatpush2.msra.mxu0 0.0
    %222 = vmatprep.subr.mxu0 0.0
    %223 = vmatpush2.msra.mxu0 0.0
    %224 = vmatprep.subr.mxu0 0.0
    %225 = vmatpush2.msra.mxu0 0.0
    %226 = vmatprep.subr.mxu0 0.0
    %227 = vmatpush2.msra.mxu0 0.0
    %228 = vmatprep.subr.mxu0 0.0
    %229 = vmatpush2.msra.mxu0 0.0
    %230 = vmatprep.subr.mxu0 0.0
    %231 = vmatpush2.msra.mxu0 0.0
    %232 = vmatprep.subr.mxu0 0.0
    %233 = vmatpush2.msra.mxu0 0.0
    %234 = vmatprep.subr.mxu0 0.0
    %235 = vmatpush2.msra.mxu0 0.0
    %236 = vmatprep.subr.mxu0 0.0
    %237 = vmatpush2.msra.mxu0 0.0
    %238 = vmatprep.subr.mxu0 0.0
    %239 = vmatpush2.msra.mxu0 0.0
    %240 = vmatprep.subr.mxu0 0.0
    %241 = vmatpush2.msra.mxu0 0.0
    %242 = vmatprep.subr.mxu0 0.0
    %243 = vmatpush2.msra.mxu0 0.0
    %244 = vmatprep.subr.mxu0 0.0
    %245 = vmatpush2.msra.mxu0 0.0
    %246 = vmatprep.mubr.f32.mxu0 0.0
    %247 = vmatmul.mubr.f32.gmra.mxu0 %v180
    %v248 = vpop.f32.mrf.mxu0
    %v249 = vadd.f32 0.0, %v248
    %v250 = vpop.f32.mrf.mxu0
    %251 = vdwg.mxu0
    %v252 = vmul.f32 %v249, %v88
    %253 = vrot.lane.b32.xlu0 %v174, 112
    %v254 = vpop.permute.xlu0 %253
    %v255 = vsel %vm178, %v254, 0
    %257 = vmatprep.subr.mxu0 0.0
    %258 = vmatpush1.msra.mxu0 0.0
    %259 = vmatprep.subr.mxu0 0.0
    %260 = vmatpush1.msra.mxu0 0.0
    %261 = vmatprep.subr.mxu0 0.0
    %262 = vmatpush1.msra.mxu0 0.0
    %263 = vmatprep.subr.mxu0 0.0
    %264 = vmatpush1.msra.mxu0 0.0
    %265 = vmatprep.subr.mxu0 0.0
    %266 = vmatpush1.msra.mxu0 0.0
    %267 = vmatprep.subr.mxu0 0.0
    %268 = vmatpush1.msra.mxu0 0.0
    %269 = vmatprep.subr.mxu0 0.0
    %270 = vmatpush1.msra.mxu0 0.0
    %271 = vmatprep.subr.mxu0 0.0
    %272 = vmatpush1.msra.mxu0 0.0
    %273 = vmatprep.subr.mxu0 0.0
    %274 = vmatpush1.msra.mxu0 0.0
    %275 = vmatprep.subr.mxu0 0.0
    %276 = vmatpush1.msra.mxu0 0.0
    %277 = vmatprep.subr.mxu0 0.0
    %278 = vmatpush1.msra.mxu0 0.0
    %279 = vmatprep.subr.mxu0 0.0
    %280 = vmatpush1.msra.mxu0 0.0
    %281 = vmatprep.subr.mxu0 0.0
    %282 = vmatpush1.msra.mxu0 0.0
    %283 = vmatprep.subr.mxu0 0.0
    %284 = vmatpush1.msra.mxu0 0.0
    %285 = vmatprep.subr.mxu0 0.0
    %286 = vmatpush1.msra.mxu0 %v176
    %287 = vmatprep.subr.mxu0 0.0
    %288 = vmatpush1.msra.mxu0 %v175
    %289 = vmatprep.subr.mxu0 0.0
    %290 = vmatpush2.msra.mxu0 0.0
    %291 = vmatprep.subr.mxu0 0.0
    %292 = vmatpush2.msra.mxu0 0.0
    %293 = vmatprep.subr.mxu0 0.0
    %294 = vmatpush2.msra.mxu0 0.0
    %295 = vmatprep.subr.mxu0 0.0
    %296 = vmatpush2.msra.mxu0 0.0
    %297 = vmatprep.subr.mxu0 0.0
    %298 = vmatpush2.msra.mxu0 0.0
    %299 = vmatprep.subr.mxu0 0.0
    %300 = vmatpush2.msra.mxu0 0.0
    %301 = vmatprep.subr.mxu0 0.0
    %302 = vmatpush2.msra.mxu0 0.0
    %303 = vmatprep.subr.mxu0 0.0
    %304 = vmatpush2.msra.mxu0 0.0
    %305 = vmatprep.subr.mxu0 0.0
    %306 = vmatpush2.msra.mxu0 0.0
    %307 = vmatprep.subr.mxu0 0.0
    %308 = vmatpush2.msra.mxu0 0.0
    %309 = vmatprep.subr.mxu0 0.0
    %310 = vmatpush2.msra.mxu0 0.0
    %311 = vmatprep.subr.mxu0 0.0
    %312 = vmatpush2.msra.mxu0 0.0
    %313 = vmatprep.subr.mxu0 0.0
    %314 = vmatpush2.msra.mxu0 0.0
    %315 = vmatprep.subr.mxu0 0.0
    %316 = vmatpush2.msra.mxu0 0.0
    %317 = vmatprep.subr.mxu0 0.0
    %318 = vmatpush2.msra.mxu0 0.0
    %319 = vmatprep.subr.mxu0 0.0
    %320 = vmatpush2.msra.mxu0 0.0
    %321 = vmatprep.mubr.f32.mxu0 0.0
    %322 = vmatmul.mubr.f32.gmra.mxu0 %v255
    %v323 = vpop.f32.mrf.mxu0
    %v324 = vadd.f32 0.0, %v323
    %v325 = vpop.f32.mrf.mxu0
    %326 = vdwg.mxu0
    %v327 = vmul.f32 %v324, %v101
    %328 = vrot.lane.b32.xlu0 %v174, 96
    %v329 = vpop.permute.xlu0 %328
    %v330 = vsel %vm178, %v329, 0
    %332 = vmatprep.subr.mxu0 0.0
    %333 = vmatpush1.msra.mxu0 0.0
    %334 = vmatprep.subr.mxu0 0.0
    %335 = vmatpush1.msra.mxu0 0.0
    %336 = vmatprep.subr.mxu0 0.0
    %337 = vmatpush1.msra.mxu0 0.0
    %338 = vmatprep.subr.mxu0 0.0
    %339 = vmatpush1.msra.mxu0 0.0
    %340 = vmatprep.subr.mxu0 0.0
    %341 = vmatpush1.msra.mxu0 0.0
    %342 = vmatprep.subr.mxu0 0.0
    %343 = vmatpush1.msra.mxu0 0.0
    %344 = vmatprep.subr.mxu0 0.0
    %345 = vmatpush1.msra.mxu0 0.0
    %346 = vmatprep.subr.mxu0 0.0
    %347 = vmatpush1.msra.mxu0 0.0
    %348 = vmatprep.subr.mxu0 0.0
    %349 = vmatpush1.msra.mxu0 0.0
    %350 = vmatprep.subr.mxu0 0.0
    %351 = vmatpush1.msra.mxu0 0.0
    %352 = vmatprep.subr.mxu0 0.0
    %353 = vmatpush1.msra.mxu0 0.0
    %354 = vmatprep.subr.mxu0 0.0
    %355 = vmatpush1.msra.mxu0 0.0
    %356 = vmatprep.subr.mxu0 0.0
    %357 = vmatpush1.msra.mxu0 0.0
    %358 = vmatprep.subr.mxu0 0.0
    %359 = vmatpush1.msra.mxu0 0.0
    %360 = vmatprep.subr.mxu0 0.0
    %361 = vmatpush1.msra.mxu0 %v176
    %362 = vmatprep.subr.mxu0 0.0
    %363 = vmatpush1.msra.mxu0 %v175
    %364 = vmatprep.subr.mxu0 0.0
    %365 = vmatpush2.msra.mxu0 0.0
    %366 = vmatprep.subr.mxu0 0.0
    %367 = vmatpush2.msra.mxu0 0.0
    %368 = vmatprep.subr.mxu0 0.0
    %369 = vmatpush2.msra.mxu0 0.0
    %370 = vmatprep.subr.mxu0 0.0
    %371 = vmatpush2.msra.mxu0 0.0
    %372 = vmatprep.subr.mxu0 0.0
    %373 = vmatpush2.msra.mxu0 0.0
    %374 = vmatprep.subr.mxu0 0.0
    %375 = vmatpush2.msra.mxu0 0.0
    %376 = vmatprep.subr.mxu0 0.0
    %377 = vmatpush2.msra.mxu0 0.0
    %378 = vmatprep.subr.mxu0 0.0
    %379 = vmatpush2.msra.mxu0 0.0
    %380 = vmatprep.subr.mxu0 0.0
    %381 = vmatpush2.msra.mxu0 0.0
    %382 = vmatprep.subr.mxu0 0.0
    %383 = vmatpush2.msra.mxu0 0.0
    %384 = vmatprep.subr.mxu0 0.0
    %385 = vmatpush2.msra.mxu0 0.0
    %386 = vmatprep.subr.mxu0 0.0
    %387 = vmatpush2.msra.mxu0 0.0
    %388 = vmatprep.subr.mxu0 0.0
    %389 = vmatpush2.msra.mxu0 0.0
    %390 = vmatprep.subr.mxu0 0.0
    %391 = vmatpush2.msra.mxu0 0.0
    %392 = vmatprep.subr.mxu0 0.0
    %393 = vmatpush2.msra.mxu0 0.0
    %394 = vmatprep.subr.mxu0 0.0
    %395 = vmatpush2.msra.mxu0 0.0
    %396 = vmatprep.mubr.f32.mxu0 0.0
    %397 = vmatmul.mubr.f32.gmra.mxu0 %v330
    %v398 = vpop.f32.mrf.mxu0
    %v399 = vadd.f32 0.0, %v398
    %v400 = vpop.f32.mrf.mxu0
    %401 = vdwg.mxu0
    %v402 = vmul.f32 %v399, %v113
    %403 = vrot.lane.b32.xlu0 %v174, 80
    %v404 = vpop.permute.xlu0 %403
    %v405 = vsel %vm178, %v404, 0
    %407 = vmatprep.subr.mxu0 0.0
    %408 = vmatpush1.msra.mxu0 0.0
    %409 = vmatprep.subr.mxu0 0.0
    %410 = vmatpush1.msra.mxu0 0.0
    %411 = vmatprep.subr.mxu0 0.0
    %412 = vmatpush1.msra.mxu0 0.0
    %413 = vmatprep.subr.mxu0 0.0
    %414 = vmatpush1.msra.mxu0 0.0
    %415 = vmatprep.subr.mxu0 0.0
    %416 = vmatpush1.msra.mxu0 0.0
    %417 = vmatprep.subr.mxu0 0.0
    %418 = vmatpush1.msra.mxu0 0.0
    %419 = vmatprep.subr.mxu0 0.0
    %420 = vmatpush1.msra.mxu0 0.0
    %421 = vmatprep.subr.mxu0 0.0
    %422 = vmatpush1.msra.mxu0 0.0
    %423 = vmatprep.subr.mxu0 0.0
    %424 = vmatpush1.msra.mxu0 0.0
    %425 = vmatprep.subr.mxu0 0.0
    %426 = vmatpush1.msra.mxu0 0.0
    %427 = vmatprep.subr.mxu0 0.0
    %428 = vmatpush1.msra.mxu0 0.0
    %429 = vmatprep.subr.mxu0 0.0
    %430 = vmatpush1.msra.mxu0 0.0
    %431 = vmatprep.subr.mxu0 0.0
    %432 = vmatpush1.msra.mxu0 0.0
    %433 = vmatprep.subr.mxu0 0.0
    %434 = vmatpush1.msra.mxu0 0.0
    %435 = vmatprep.subr.mxu0 0.0
    %436 = vmatpush1.msra.mxu0 %v176
    %437 = vmatprep.subr.mxu0 0.0
    %438 = vmatpush1.msra.mxu0 %v175
    %439 = vmatprep.subr.mxu0 0.0
    %440 = vmatpush2.msra.mxu0 0.0
    %441 = vmatprep.subr.mxu0 0.0
    %442 = vmatpush2.msra.mxu0 0.0
    %443 = vmatprep.subr.mxu0 0.0
    %444 = vmatpush2.msra.mxu0 0.0
    %445 = vmatprep.subr.mxu0 0.0
    %446 = vmatpush2.msra.mxu0 0.0
    %447 = vmatprep.subr.mxu0 0.0
    %448 = vmatpush2.msra.mxu0 0.0
    %449 = vmatprep.subr.mxu0 0.0
    %450 = vmatpush2.msra.mxu0 0.0
    %451 = vmatprep.subr.mxu0 0.0
    %452 = vmatpush2.msra.mxu0 0.0
    %453 = vmatprep.subr.mxu0 0.0
    %454 = vmatpush2.msra.mxu0 0.0
    %455 = vmatprep.subr.mxu0 0.0
    %456 = vmatpush2.msra.mxu0 0.0
    %457 = vmatprep.subr.mxu0 0.0
    %458 = vmatpush2.msra.mxu0 0.0
    %459 = vmatprep.subr.mxu0 0.0
    %460 = vmatpush2.msra.mxu0 0.0
    %461 = vmatprep.subr.mxu0 0.0
    %462 = vmatpush2.msra.mxu0 0.0
    %463 = vmatprep.subr.mxu0 0.0
    %464 = vmatpush2.msra.mxu0 0.0
    %465 = vmatprep.subr.mxu0 0.0
    %466 = vmatpush2.msra.mxu0 0.0
    %467 = vmatprep.subr.mxu0 0.0
    %468 = vmatpush2.msra.mxu0 0.0
    %469 = vmatprep.subr.mxu0 0.0
    %470 = vmatpush2.msra.mxu0 0.0
    %471 = vmatprep.mubr.f32.mxu0 0.0
    %472 = vmatmul.mubr.f32.gmra.mxu0 %v405
    %v473 = vpop.f32.mrf.mxu0
    %v474 = vadd.f32 0.0, %v473
    %v475 = vpop.f32.mrf.mxu0
    %476 = vdwg.mxu0
    %v477 = vmul.f32 %v474, %v125
    %478 = vrot.lane.b32.xlu0 %v174, 64
    %v479 = vpop.permute.xlu0 %478
    %v480 = vsel %vm178, %v479, 0
    %482 = vmatprep.subr.mxu0 0.0
    %483 = vmatpush1.msra.mxu0 0.0
    %484 = vmatprep.subr.mxu0 0.0
    %485 = vmatpush1.msra.mxu0 0.0
    %486 = vmatprep.subr.mxu0 0.0
    %487 = vmatpush1.msra.mxu0 0.0
    %488 = vmatprep.subr.mxu0 0.0
    %489 = vmatpush1.msra.mxu0 0.0
    %490 = vmatprep.subr.mxu0 0.0
    %491 = vmatpush1.msra.mxu0 0.0
    %492 = vmatprep.subr.mxu0 0.0
    %493 = vmatpush1.msra.mxu0 0.0
    %494 = vmatprep.subr.mxu0 0.0
    %495 = vmatpush1.msra.mxu0 0.0
    %496 = vmatprep.subr.mxu0 0.0
    %497 = vmatpush1.msra.mxu0 0.0
    %498 = vmatprep.subr.mxu0 0.0
    %499 = vmatpush1.msra.mxu0 0.0
    %500 = vmatprep.subr.mxu0 0.0
    %501 = vmatpush1.msra.mxu0 0.0
    %502 = vmatprep.subr.mxu0 0.0
    %503 = vmatpush1.msra.mxu0 0.0
    %504 = vmatprep.subr.mxu0 0.0
    %505 = vmatpush1.msra.mxu0 0.0
    %506 = vmatprep.subr.mxu0 0.0
    %507 = vmatpush1.msra.mxu0 0.0
    %508 = vmatprep.subr.mxu0 0.0
    %509 = vmatpush1.msra.mxu0 0.0
    %510 = vmatprep.subr.mxu0 0.0
    %511 = vmatpush1.msra.mxu0 %v176
    %512 = vmatprep.subr.mxu0 0.0
    %513 = vmatpush1.msra.mxu0 %v175
    %514 = vmatprep.subr.mxu0 0.0
    %515 = vmatpush2.msra.mxu0 0.0
    %516 = vmatprep.subr.mxu0 0.0
    %517 = vmatpush2.msra.mxu0 0.0
    %518 = vmatprep.subr.mxu0 0.0
    %519 = vmatpush2.msra.mxu0 0.0
    %520 = vmatprep.subr.mxu0 0.0
    %521 = vmatpush2.msra.mxu0 0.0
    %522 = vmatprep.subr.mxu0 0.0
    %523 = vmatpush2.msra.mxu0 0.0
    %524 = vmatprep.subr.mxu0 0.0
    %525 = vmatpush2.msra.mxu0 0.0
    %526 = vmatprep.subr.mxu0 0.0
    %527 = vmatpush2.msra.mxu0 0.0
    %528 = vmatprep.subr.mxu0 0.0
    %529 = vmatpush2.msra.mxu0 0.0
    %530 = vmatprep.subr.mxu0 0.0
    %531 = vmatpush2.msra.mxu0 0.0
    %532 = vmatprep.subr.mxu0 0.0
    %533 = vmatpush2.msra.mxu0 0.0
    %534 = vmatprep.subr.mxu0 0.0
    %535 = vmatpush2.msra.mxu0 0.0
    %536 = vmatprep.subr.mxu0 0.0
    %537 = vmatpush2.msra.mxu0 0.0
    %538 = vmatprep.subr.mxu0 0.0
    %539 = vmatpush2.msra.mxu0 0.0
    %540 = vmatprep.subr.mxu0 0.0
    %541 = vmatpush2.msra.mxu0 0.0
    %542 = vmatprep.subr.mxu0 0.0
    %543 = vmatpush2.msra.mxu0 0.0
    %544 = vmatprep.subr.mxu0 0.0
    %545 = vmatpush2.msra.mxu0 0.0
    %546 = vmatprep.mubr.f32.mxu0 0.0
    %547 = vmatmul.mubr.f32.gmra.mxu0 %v480
    %v548 = vpop.f32.mrf.mxu0
    %v549 = vadd.f32 0.0, %v548
    %v550 = vpop.f32.mrf.mxu0
    %551 = vdwg.mxu0
    %v552 = vmul.f32 %v549, %v137
    %553 = vrot.lane.b32.xlu0 %v174, 48
    %v554 = vpop.permute.xlu0 %553
    %v555 = vsel %vm178, %v554, 0
    %557 = vmatprep.subr.mxu0 0.0
    %558 = vmatpush1.msra.mxu0 0.0
    %559 = vmatprep.subr.mxu0 0.0
    %560 = vmatpush1.msra.mxu0 0.0
    %561 = vmatprep.subr.mxu0 0.0
    %562 = vmatpush1.msra.mxu0 0.0
    %563 = vmatprep.subr.mxu0 0.0
    %564 = vmatpush1.msra.mxu0 0.0
    %565 = vmatprep.subr.mxu0 0.0
    %566 = vmatpush1.msra.mxu0 0.0
    %567 = vmatprep.subr.mxu0 0.0
    %568 = vmatpush1.msra.mxu0 0.0
    %569 = vmatprep.subr.mxu0 0.0
    %570 = vmatpush1.msra.mxu0 0.0
    %571 = vmatprep.subr.mxu0 0.0
    %572 = vmatpush1.msra.mxu0 0.0
    %573 = vmatprep.subr.mxu0 0.0
    %574 = vmatpush1.msra.mxu0 0.0
    %575 = vmatprep.subr.mxu0 0.0
    %576 = vmatpush1.msra.mxu0 0.0
    %577 = vmatprep.subr.mxu0 0.0
    %578 = vmatpush1.msra.mxu0 0.0
    %579 = vmatprep.subr.mxu0 0.0
    %580 = vmatpush1.msra.mxu0 0.0
    %581 = vmatprep.subr.mxu0 0.0
    %582 = vmatpush1.msra.mxu0 0.0
    %583 = vmatprep.subr.mxu0 0.0
    %584 = vmatpush1.msra.mxu0 0.0
    %585 = vmatprep.subr.mxu0 0.0
    %586 = vmatpush1.msra.mxu0 %v176
    %587 = vmatprep.subr.mxu0 0.0
    %588 = vmatpush1.msra.mxu0 %v175
    %589 = vmatprep.subr.mxu0 0.0
    %590 = vmatpush2.msra.mxu0 0.0
    %591 = vmatprep.subr.mxu0 0.0
    %592 = vmatpush2.msra.mxu0 0.0
    %593 = vmatprep.subr.mxu0 0.0
    %594 = vmatpush2.msra.mxu0 0.0
    %595 = vmatprep.subr.mxu0 0.0
    %596 = vmatpush2.msra.mxu0 0.0
    %597 = vmatprep.subr.mxu0 0.0
    %598 = vmatpush2.msra.mxu0 0.0
    %599 = vmatprep.subr.mxu0 0.0
    %600 = vmatpush2.msra.mxu0 0.0
    %601 = vmatprep.subr.mxu0 0.0
    %602 = vmatpush2.msra.mxu0 0.0
    %603 = vmatprep.subr.mxu0 0.0
    %604 = vmatpush2.msra.mxu0 0.0
    %605 = vmatprep.subr.mxu0 0.0
    %606 = vmatpush2.msra.mxu0 0.0
    %607 = vmatprep.subr.mxu0 0.0
    %608 = vmatpush2.msra.mxu0 0.0
    %609 = vmatprep.subr.mxu0 0.0
    %610 = vmatpush2.msra.mxu0 0.0
    %611 = vmatprep.subr.mxu0 0.0
    %612 = vmatpush2.msra.mxu0 0.0
    %613 = vmatprep.subr.mxu0 0.0
    %614 = vmatpush2.msra.mxu0 0.0
    %615 = vmatprep.subr.mxu0 0.0
    %616 = vmatpush2.msra.mxu0 0.0
    %617 = vmatprep.subr.mxu0 0.0
    %618 = vmatpush2.msra.mxu0 0.0
    %619 = vmatprep.subr.mxu0 0.0
    %620 = vmatpush2.msra.mxu0 0.0
    %621 = vmatprep.mubr.f32.mxu0 0.0
    %622 = vmatmul.mubr.f32.gmra.mxu0 %v555
    %v623 = vpop.f32.mrf.mxu0
    %v624 = vadd.f32 0.0, %v623
    %v625 = vpop.f32.mrf.mxu0
    %626 = vdwg.mxu0
    %v627 = vmul.f32 %v624, %v149
    %628 = vrot.lane.b32.xlu0 %v174, 32
    %v629 = vpop.permute.xlu0 %628
    %v630 = vsel %vm178, %v629, 0
    %632 = vmatprep.subr.mxu0 0.0
    %633 = vmatpush1.msra.mxu0 0.0
    %634 = vmatprep.subr.mxu0 0.0
    %635 = vmatpush1.msra.mxu0 0.0
    %636 = vmatprep.subr.mxu0 0.0
    %637 = vmatpush1.msra.mxu0 0.0
    %638 = vmatprep.subr.mxu0 0.0
    %639 = vmatpush1.msra.mxu0 0.0
    %640 = vmatprep.subr.mxu0 0.0
    %641 = vmatpush1.msra.mxu0 0.0
    %642 = vmatprep.subr.mxu0 0.0
    %643 = vmatpush1.msra.mxu0 0.0
    %644 = vmatprep.subr.mxu0 0.0
    %645 = vmatpush1.msra.mxu0 0.0
    %646 = vmatprep.subr.mxu0 0.0
    %647 = vmatpush1.msra.mxu0 0.0
    %648 = vmatprep.subr.mxu0 0.0
    %649 = vmatpush1.msra.mxu0 0.0
    %650 = vmatprep.subr.mxu0 0.0
    %651 = vmatpush1.msra.mxu0 0.0
    %652 = vmatprep.subr.mxu0 0.0
    %653 = vmatpush1.msra.mxu0 0.0
    %654 = vmatprep.subr.mxu0 0.0
    %655 = vmatpush1.msra.mxu0 0.0
    %656 = vmatprep.subr.mxu0 0.0
    %657 = vmatpush1.msra.mxu0 0.0
    %658 = vmatprep.subr.mxu0 0.0
    %659 = vmatpush1.msra.mxu0 0.0
    %660 = vmatprep.subr.mxu0 0.0
    %661 = vmatpush1.msra.mxu0 %v176
    %662 = vmatprep.subr.mxu0 0.0
    %663 = vmatpush1.msra.mxu0 %v175
    %664 = vmatprep.subr.mxu0 0.0
    %665 = vmatpush2.msra.mxu0 0.0
    %666 = vmatprep.subr.mxu0 0.0
    %667 = vmatpush2.msra.mxu0 0.0
    %668 = vmatprep.subr.mxu0 0.0
    %669 = vmatpush2.msra.mxu0 0.0
    %670 = vmatprep.subr.mxu0 0.0
    %671 = vmatpush2.msra.mxu0 0.0
    %672 = vmatprep.subr.mxu0 0.0
    %673 = vmatpush2.msra.mxu0 0.0
    %674 = vmatprep.subr.mxu0 0.0
    %675 = vmatpush2.msra.mxu0 0.0
    %676 = vmatprep.subr.mxu0 0.0
    %677 = vmatpush2.msra.mxu0 0.0
    %678 = vmatprep.subr.mxu0 0.0
    %679 = vmatpush2.msra.mxu0 0.0
    %680 = vmatprep.subr.mxu0 0.0
    %681 = vmatpush2.msra.mxu0 0.0
    %682 = vmatprep.subr.mxu0 0.0
    %683 = vmatpush2.msra.mxu0 0.0
    %684 = vmatprep.subr.mxu0 0.0
    %685 = vmatpush2.msra.mxu0 0.0
    %686 = vmatprep.subr.mxu0 0.0
    %687 = vmatpush2.msra.mxu0 0.0
    %688 = vmatprep.subr.mxu0 0.0
    %689 = vmatpush2.msra.mxu0 0.0
    %690 = vmatprep.subr.mxu0 0.0
    %691 = vmatpush2.msra.mxu0 0.0
    %692 = vmatprep.subr.mxu0 0.0
    %693 = vmatpush2.msra.mxu0 0.0
    %694 = vmatprep.subr.mxu0 0.0
    %695 = vmatpush2.msra.mxu0 0.0
    %696 = vmatprep.mubr.f32.mxu0 0.0
    %697 = vmatmul.mubr.f32.gmra.mxu0 %v630
    %v698 = vpop.f32.mrf.mxu0
    %v699 = vadd.f32 0.0, %v698
    %v700 = vpop.f32.mrf.mxu0
    %701 = vdwg.mxu0
    %v702 = vmul.f32 %v699, %v161
    %703 = vrot.lane.b32.xlu0 %v174, 16
    %v704 = vpop.permute.xlu0 %703
    %v705 = vsel %vm178, %v704, 0
    %707 = vmatprep.subr.mxu0 0.0
    %708 = vmatpush1.msra.mxu0 0.0
    %709 = vmatprep.subr.mxu0 0.0
    %710 = vmatpush1.msra.mxu0 0.0
    %711 = vmatprep.subr.mxu0 0.0
    %712 = vmatpush1.msra.mxu0 0.0
    %713 = vmatprep.subr.mxu0 0.0
    %714 = vmatpush1.msra.mxu0 0.0
    %715 = vmatprep.subr.mxu0 0.0
    %716 = vmatpush1.msra.mxu0 0.0
    %717 = vmatprep.subr.mxu0 0.0
    %718 = vmatpush1.msra.mxu0 0.0
    %719 = vmatprep.subr.mxu0 0.0
    %720 = vmatpush1.msra.mxu0 0.0
    %721 = vmatprep.subr.mxu0 0.0
    %722 = vmatpush1.msra.mxu0 0.0
    %723 = vmatprep.subr.mxu0 0.0
    %724 = vmatpush1.msra.mxu0 0.0
    %725 = vmatprep.subr.mxu0 0.0
    %726 = vmatpush1.msra.mxu0 0.0
    %727 = vmatprep.subr.mxu0 0.0
    %728 = vmatpush1.msra.mxu0 0.0
    %729 = vmatprep.subr.mxu0 0.0
    %730 = vmatpush1.msra.mxu0 0.0
    %731 = vmatprep.subr.mxu0 0.0
    %732 = vmatpush1.msra.mxu0 0.0
    %733 = vmatprep.subr.mxu0 0.0
    %734 = vmatpush1.msra.mxu0 0.0
    %735 = vmatprep.subr.mxu0 0.0
    %736 = vmatpush1.msra.mxu0 %v176
    %737 = vmatprep.subr.mxu0 0.0
    %738 = vmatpush1.msra.mxu0 %v175
    %739 = vmatprep.subr.mxu0 0.0
    %740 = vmatpush2.msra.mxu0 0.0
    %741 = vmatprep.subr.mxu0 0.0
    %742 = vmatpush2.msra.mxu0 0.0
    %743 = vmatprep.subr.mxu0 0.0
    %744 = vmatpush2.msra.mxu0 0.0
    %745 = vmatprep.subr.mxu0 0.0
    %746 = vmatpush2.msra.mxu0 0.0
    %747 = vmatprep.subr.mxu0 0.0
    %748 = vmatpush2.msra.mxu0 0.0
    %749 = vmatprep.subr.mxu0 0.0
    %750 = vmatpush2.msra.mxu0 0.0
    %751 = vmatprep.subr.mxu0 0.0
    %752 = vmatpush2.msra.mxu0 0.0
    %753 = vmatprep.subr.mxu0 0.0
    %754 = vmatpush2.msra.mxu0 0.0
    %755 = vmatprep.subr.mxu0 0.0
    %756 = vmatpush2.msra.mxu0 0.0
    %757 = vmatprep.subr.mxu0 0.0
    %758 = vmatpush2.msra.mxu0 0.0
    %759 = vmatprep.subr.mxu0 0.0
    %760 = vmatpush2.msra.mxu0 0.0
    %761 = vmatprep.subr.mxu0 0.0
    %762 = vmatpush2.msra.mxu0 0.0
    %763 = vmatprep.subr.mxu0 0.0
    %764 = vmatpush2.msra.mxu0 0.0
    %765 = vmatprep.subr.mxu0 0.0
    %766 = vmatpush2.msra.mxu0 0.0
    %767 = vmatprep.subr.mxu0 0.0
    %768 = vmatpush2.msra.mxu0 0.0
    %769 = vmatprep.subr.mxu0 0.0
    %770 = vmatpush2.msra.mxu0 0.0
    %771 = vmatprep.mubr.f32.mxu0 0.0
    %772 = vmatmul.mubr.f32.gmra.mxu0 %v705
    %v773 = vpop.f32.mrf.mxu0
    %v774 = vadd.f32 0.0, %v773
    %v775 = vpop.f32.mrf.mxu0
    %776 = vdwg.mxu0
    %v777 = vmul.f32 %v774, %v173
    %779 = vset.pattern.permute.xlu0 0
    %780 = vperm.xlu0 %779, %v82
    %v781 = vpop.permute.xlu0 %780
    %v783 = vmul.f32 %v781, %v252
    %784 = vset.pattern.permute.xlu0 1
    %785 = vperm.xlu0 %784, %v82
    %v786 = vpop.permute.xlu0 %785
    %v788 = vmul.f32 %v786, %v327
    %v789 = vadd.f32 %v783, %v788
    %790 = vset.pattern.permute.xlu0 2
    %791 = vperm.xlu0 %790, %v82
    %v792 = vpop.permute.xlu0 %791
    %v794 = vmul.f32 %v792, %v402
    %v795 = vadd.f32 %v789, %v794
    %796 = vset.pattern.permute.xlu0 3
    %797 = vperm.xlu0 %796, %v82
    %v798 = vpop.permute.xlu0 %797
    %v800 = vmul.f32 %v798, %v477
    %v801 = vadd.f32 %v795, %v800
    %802 = vset.pattern.permute.xlu0 4
    %803 = vperm.xlu0 %802, %v82
    %v804 = vpop.permute.xlu0 %803
    %v806 = vmul.f32 %v804, %v552
    %v807 = vadd.f32 %v801, %v806
    %808 = vset.pattern.permute.xlu0 5
    %809 = vperm.xlu0 %808, %v82
    %v810 = vpop.permute.xlu0 %809
    %v812 = vmul.f32 %v810, %v627
    %v813 = vadd.f32 %v807, %v812
    %814 = vset.pattern.permute.xlu0 6
    %815 = vperm.xlu0 %814, %v82
    %v816 = vpop.permute.xlu0 %815
    %v818 = vmul.f32 %v816, %v702
    %v819 = vadd.f32 %v813, %v818
    %820 = vset.pattern.permute.xlu0 7
    %821 = vperm.xlu0 %820, %v82
    %v822 = vpop.permute.xlu0 %821
    %v824 = vmul.f32 %v822, %v777
    %v825 = vadd.f32 %v819, %v824
    %v826 = vmul.f32 %v825, %v88
    %v828 = vlaneseq
    %v829 = vshrl.u32 %v828, 7
    %v830 = vsub.s32 0, %v829
    %v831 = vrot.slane %v177, %v830
    %v833 = vadd.f32 %v826, %v831
    %v834 = vmax.f32 %v833, 0.0
    %836 = vset.pattern.permute.xlu0 0
    %837 = vperm.xlu0 %836, %v96
    %v838 = vpop.permute.xlu0 %837
    %v840 = vmul.f32 %v838, %v252
    %841 = vset.pattern.permute.xlu0 1
    %842 = vperm.xlu0 %841, %v96
    %v843 = vpop.permute.xlu0 %842
    %v845 = vmul.f32 %v843, %v327
    %v846 = vadd.f32 %v840, %v845
    %847 = vset.pattern.permute.xlu0 2
    %848 = vperm.xlu0 %847, %v96
    %v849 = vpop.permute.xlu0 %848
    %v851 = vmul.f32 %v849, %v402
    %v852 = vadd.f32 %v846, %v851
    %853 = vset.pattern.permute.xlu0 3
    %854 = vperm.xlu0 %853, %v96
    %v855 = vpop.permute.xlu0 %854
    %v857 = vmul.f32 %v855, %v477
    %v858 = vadd.f32 %v852, %v857
    %859 = vset.pattern.permute.xlu0 4
    %860 = vperm.xlu0 %859, %v96
    %v861 = vpop.permute.xlu0 %860
    %v863 = vmul.f32 %v861, %v552
    %v864 = vadd.f32 %v858, %v863
    %865 = vset.pattern.permute.xlu0 5
    %866 = vperm.xlu0 %865, %v96
    %v867 = vpop.permute.xlu0 %866
    %v869 = vmul.f32 %v867, %v627
    %v870 = vadd.f32 %v864, %v869
    %871 = vset.pattern.permute.xlu0 6
    %872 = vperm.xlu0 %871, %v96
    %v873 = vpop.permute.xlu0 %872
    %v875 = vmul.f32 %v873, %v702
    %v876 = vadd.f32 %v870, %v875
    %877 = vset.pattern.permute.xlu0 7
    %878 = vperm.xlu0 %877, %v96
    %v879 = vpop.permute.xlu0 %878
    %v881 = vmul.f32 %v879, %v777
    %v882 = vadd.f32 %v876, %v881
    %v883 = vmul.f32 %v882, %v101
    %v884 = vadd.f32 %v883, %v831
    %v885 = vmax.f32 %v884, 0.0
    %887 = vset.pattern.permute.xlu0 0
    %888 = vperm.xlu0 %887, %v108
    %v889 = vpop.permute.xlu0 %888
    %v891 = vmul.f32 %v889, %v252
    %892 = vset.pattern.permute.xlu0 1
    %893 = vperm.xlu0 %892, %v108
    %v894 = vpop.permute.xlu0 %893
    %v896 = vmul.f32 %v894, %v327
    %v897 = vadd.f32 %v891, %v896
    %898 = vset.pattern.permute.xlu0 2
    %899 = vperm.xlu0 %898, %v108
    %v900 = vpop.permute.xlu0 %899
    %v902 = vmul.f32 %v900, %v402
    %v903 = vadd.f32 %v897, %v902
    %904 = vset.pattern.permute.xlu0 3
    %905 = vperm.xlu0 %904, %v108
    %v906 = vpop.permute.xlu0 %905
    %v908 = vmul.f32 %v906, %v477
    %v909 = vadd.f32 %v903, %v908
    %910 = vset.pattern.permute.xlu0 4
    %911 = vperm.xlu0 %910, %v108
    %v912 = vpop.permute.xlu0 %911
    %v914 = vmul.f32 %v912, %v552
    %v915 = vadd.f32 %v909, %v914
    %916 = vset.pattern.permute.xlu0 5
    %917 = vperm.xlu0 %916, %v108
    %v918 = vpop.permute.xlu0 %917
    %v920 = vmul.f32 %v918, %v627
    %v921 = vadd.f32 %v915, %v920
    %922 = vset.pattern.permute.xlu0 6
    %923 = vperm.xlu0 %922, %v108
    %v924 = vpop.permute.xlu0 %923
    %v926 = vmul.f32 %v924, %v702
    %v927 = vadd.f32 %v921, %v926
    %928 = vset.pattern.permute.xlu0 7
    %929 = vperm.xlu0 %928, %v108
    %v930 = vpop.permute.xlu0 %929
    %v932 = vmul.f32 %v930, %v777
    %v933 = vadd.f32 %v927, %v932
    %v934 = vmul.f32 %v933, %v113
    %v935 = vadd.f32 %v934, %v831
    %v936 = vmax.f32 %v935, 0.0
    %938 = vset.pattern.permute.xlu0 0
    %939 = vperm.xlu0 %938, %v120
    %v940 = vpop.permute.xlu0 %939
    %v942 = vmul.f32 %v940, %v252
    %943 = vset.pattern.permute.xlu0 1
    %944 = vperm.xlu0 %943, %v120
    %v945 = vpop.permute.xlu0 %944
    %v947 = vmul.f32 %v945, %v327
    %v948 = vadd.f32 %v942, %v947
    %949 = vset.pattern.permute.xlu0 2
    %950 = vperm.xlu0 %949, %v120
    %v951 = vpop.permute.xlu0 %950
    %v953 = vmul.f32 %v951, %v402
    %v954 = vadd.f32 %v948, %v953
    %955 = vset.pattern.permute.xlu0 3
    %956 = vperm.xlu0 %955, %v120
    %v957 = vpop.permute.xlu0 %956
    %v959 = vmul.f32 %v957, %v477
    %v960 = vadd.f32 %v954, %v959
    %961 = vset.pattern.permute.xlu0 4
    %962 = vperm.xlu0 %961, %v120
    %v963 = vpop.permute.xlu0 %962
    %v965 = vmul.f32 %v963, %v552
    %v966 = vadd.f32 %v960, %v965
    %967 = vset.pattern.permute.xlu0 5
    %968 = vperm.xlu0 %967, %v120
    %v969 = vpop.permute.xlu0 %968
    %v971 = vmul.f32 %v969, %v627
    %v972 = vadd.f32 %v966, %v971
    %973 = vset.pattern.permute.xlu0 6
    %974 = vperm.xlu0 %973, %v120
    %v975 = vpop.permute.xlu0 %974
    %v977 = vmul.f32 %v975, %v702
    %v978 = vadd.f32 %v972, %v977
    %979 = vset.pattern.permute.xlu0 7
    %980 = vperm.xlu0 %979, %v120
    %v981 = vpop.permute.xlu0 %980
    %v983 = vmul.f32 %v981, %v777
    %v984 = vadd.f32 %v978, %v983
    %v985 = vmul.f32 %v984, %v125
    %v986 = vadd.f32 %v985, %v831
    %v987 = vmax.f32 %v986, 0.0
    %989 = vset.pattern.permute.xlu0 0
    %990 = vperm.xlu0 %989, %v132
    %v991 = vpop.permute.xlu0 %990
    %v993 = vmul.f32 %v991, %v252
    %994 = vset.pattern.permute.xlu0 1
    %995 = vperm.xlu0 %994, %v132
    %v996 = vpop.permute.xlu0 %995
    %v998 = vmul.f32 %v996, %v327
    %v999 = vadd.f32 %v993, %v998
    %1000 = vset.pattern.permute.xlu0 2
    %1001 = vperm.xlu0 %1000, %v132
    %v1002 = vpop.permute.xlu0 %1001
    %v1004 = vmul.f32 %v1002, %v402
    %v1005 = vadd.f32 %v999, %v1004
    %1006 = vset.pattern.permute.xlu0 3
    %1007 = vperm.xlu0 %1006, %v132
    %v1008 = vpop.permute.xlu0 %1007
    %v1010 = vmul.f32 %v1008, %v477
    %v1011 = vadd.f32 %v1005, %v1010
    %1012 = vset.pattern.permute.xlu0 4
    %1013 = vperm.xlu0 %1012, %v132
    %v1014 = vpop.permute.xlu0 %1013
    %v1016 = vmul.f32 %v1014, %v552
    %v1017 = vadd.f32 %v1011, %v1016
    %1018 = vset.pattern.permute.xlu0 5
    %1019 = vperm.xlu0 %1018, %v132
    %v1020 = vpop.permute.xlu0 %1019
    %v1022 = vmul.f32 %v1020, %v627
    %v1023 = vadd.f32 %v1017, %v1022
    %1024 = vset.pattern.permute.xlu0 6
    %1025 = vperm.xlu0 %1024, %v132
    %v1026 = vpop.permute.xlu0 %1025
    %v1028 = vmul.f32 %v1026, %v702
    %v1029 = vadd.f32 %v1023, %v1028
    %1030 = vset.pattern.permute.xlu0 7
    %1031 = vperm.xlu0 %1030, %v132
    %v1032 = vpop.permute.xlu0 %1031
    %v1034 = vmul.f32 %v1032, %v777
    %v1035 = vadd.f32 %v1029, %v1034
    %v1036 = vmul.f32 %v1035, %v137
    %v1037 = vadd.f32 %v1036, %v831
    %v1038 = vmax.f32 %v1037, 0.0
    %1040 = vset.pattern.permute.xlu0 0
    %1041 = vperm.xlu0 %1040, %v144
    %v1042 = vpop.permute.xlu0 %1041
    %v1044 = vmul.f32 %v1042, %v252
    %1045 = vset.pattern.permute.xlu0 1
    %1046 = vperm.xlu0 %1045, %v144
    %v1047 = vpop.permute.xlu0 %1046
    %v1049 = vmul.f32 %v1047, %v327
    %v1050 = vadd.f32 %v1044, %v1049
    %1051 = vset.pattern.permute.xlu0 2
    %1052 = vperm.xlu0 %1051, %v144
    %v1053 = vpop.permute.xlu0 %1052
    %v1055 = vmul.f32 %v1053, %v402
    %v1056 = vadd.f32 %v1050, %v1055
    %1057 = vset.pattern.permute.xlu0 3
    %1058 = vperm.xlu0 %1057, %v144
    %v1059 = vpop.permute.xlu0 %1058
    %v1061 = vmul.f32 %v1059, %v477
    %v1062 = vadd.f32 %v1056, %v1061
    %1063 = vset.pattern.permute.xlu0 4
    %1064 = vperm.xlu0 %1063, %v144
    %v1065 = vpop.permute.xlu0 %1064
    %v1067 = vmul.f32 %v1065, %v552
    %v1068 = vadd.f32 %v1062, %v1067
    %1069 = vset.pattern.permute.xlu0 5
    %1070 = vperm.xlu0 %1069, %v144
    %v1071 = vpop.permute.xlu0 %1070
    %v1073 = vmul.f32 %v1071, %v627
    %v1074 = vadd.f32 %v1068, %v1073
    %1075 = vset.pattern.permute.xlu0 6
    %1076 = vperm.xlu0 %1075, %v144
    %v1077 = vpop.permute.xlu0 %1076
    %v1079 = vmul.f32 %v1077, %v702
    %v1080 = vadd.f32 %v1074, %v1079
    %1081 = vset.pattern.permute.xlu0 7
    %1082 = vperm.xlu0 %1081, %v144
    %v1083 = vpop.permute.xlu0 %1082
    %v1085 = vmul.f32 %v1083, %v777
    %v1086 = vadd.f32 %v1080, %v1085
    %v1087 = vmul.f32 %v1086, %v149
    %v1088 = vadd.f32 %v1087, %v831
    %v1089 = vmax.f32 %v1088, 0.0
    %1091 = vset.pattern.permute.xlu0 0
    %1092 = vperm.xlu0 %1091, %v156
    %v1093 = vpop.permute.xlu0 %1092
    %v1095 = vmul.f32 %v1093, %v252
    %1096 = vset.pattern.permute.xlu0 1
    %1097 = vperm.xlu0 %1096, %v156
    %v1098 = vpop.permute.xlu0 %1097
    %v1100 = vmul.f32 %v1098, %v327
    %v1101 = vadd.f32 %v1095, %v1100
    %1102 = vset.pattern.permute.xlu0 2
    %1103 = vperm.xlu0 %1102, %v156
    %v1104 = vpop.permute.xlu0 %1103
    %v1106 = vmul.f32 %v1104, %v402
    %v1107 = vadd.f32 %v1101, %v1106
    %1108 = vset.pattern.permute.xlu0 3
    %1109 = vperm.xlu0 %1108, %v156
    %v1110 = vpop.permute.xlu0 %1109
    %v1112 = vmul.f32 %v1110, %v477
    %v1113 = vadd.f32 %v1107, %v1112
    %1114 = vset.pattern.permute.xlu0 4
    %1115 = vperm.xlu0 %1114, %v156
    %v1116 = vpop.permute.xlu0 %1115
    %v1118 = vmul.f32 %v1116, %v552
    %v1119 = vadd.f32 %v1113, %v1118
    %1120 = vset.pattern.permute.xlu0 5
    %1121 = vperm.xlu0 %1120, %v156
    %v1122 = vpop.permute.xlu0 %1121
    %v1124 = vmul.f32 %v1122, %v627
    %v1125 = vadd.f32 %v1119, %v1124
    %1126 = vset.pattern.permute.xlu0 6
    %1127 = vperm.xlu0 %1126, %v156
    %v1128 = vpop.permute.xlu0 %1127
    %v1130 = vmul.f32 %v1128, %v702
    %v1131 = vadd.f32 %v1125, %v1130
    %1132 = vset.pattern.permute.xlu0 7
    %1133 = vperm.xlu0 %1132, %v156
    %v1134 = vpop.permute.xlu0 %1133
    %v1136 = vmul.f32 %v1134, %v777
    %v1137 = vadd.f32 %v1131, %v1136
    %v1138 = vmul.f32 %v1137, %v161
    %v1139 = vadd.f32 %v1138, %v831
    %v1140 = vmax.f32 %v1139, 0.0
    %1142 = vset.pattern.permute.xlu0 0
    %1143 = vperm.xlu0 %1142, %v168
    %v1144 = vpop.permute.xlu0 %1143
    %v1146 = vmul.f32 %v1144, %v252
    %1147 = vset.pattern.permute.xlu0 1
    %1148 = vperm.xlu0 %1147, %v168
    %v1149 = vpop.permute.xlu0 %1148
    %v1151 = vmul.f32 %v1149, %v327
    %v1152 = vadd.f32 %v1146, %v1151
    %1153 = vset.pattern.permute.xlu0 2
    %1154 = vperm.xlu0 %1153, %v168
    %v1155 = vpop.permute.xlu0 %1154
    %v1157 = vmul.f32 %v1155, %v402
    %v1158 = vadd.f32 %v1152, %v1157
    %1159 = vset.pattern.permute.xlu0 3
    %1160 = vperm.xlu0 %1159, %v168
    %v1161 = vpop.permute.xlu0 %1160
    %v1163 = vmul.f32 %v1161, %v477
    %v1164 = vadd.f32 %v1158, %v1163
    %1165 = vset.pattern.permute.xlu0 4
    %1166 = vperm.xlu0 %1165, %v168
    %v1167 = vpop.permute.xlu0 %1166
    %v1169 = vmul.f32 %v1167, %v552
    %v1170 = vadd.f32 %v1164, %v1169
    %1171 = vset.pattern.permute.xlu0 5
    %1172 = vperm.xlu0 %1171, %v168
    %v1173 = vpop.permute.xlu0 %1172
    %v1175 = vmul.f32 %v1173, %v627
    %v1176 = vadd.f32 %v1170, %v1175
    %1177 = vset.pattern.permute.xlu0 6
    %1178 = vperm.xlu0 %1177, %v168
    %v1179 = vpop.permute.xlu0 %1178
    %v1181 = vmul.f32 %v1179, %v702
    %v1182 = vadd.f32 %v1176, %v1181
    %1183 = vset.pattern.permute.xlu0 7
    %1184 = vperm.xlu0 %1183, %v168
    %v1185 = vpop.permute.xlu0 %1184
    %v1187 = vmul.f32 %v1185, %v777
    %v1188 = vadd.f32 %v1182, %v1187
    %v1189 = vmul.f32 %v1188, %v173
    %v1190 = vadd.f32 %v1189, %v831
    %v1191 = vmax.f32 %v1190, 0.0
    %v1192 = vld [vmem:[#allocation4] sm:$0xff]
    %v1193 = vld [vmem:[#allocation4 + $0x8] sm:$0xff]
    %v1194 = vld [vmem:[#allocation4 + $0x10] sm:$0xff]
    %v1195 = vld [vmem:[#allocation4 + $0x18] sm:$0xff]
    %v1196 = vld [vmem:[%s5] sm:$0x1]
    %vm1197 = vcmask 261120
    %v1199 = vsel %vm1197, %v834, 0
    %1201 = vmatprep.subr.mxu0 0.0
    %1202 = vmatpush1.msra.mxu0 0.0
    %1203 = vmatprep.subr.mxu0 0.0
    %1204 = vmatpush1.msra.mxu0 0.0
    %1205 = vmatprep.subr.mxu0 0.0
    %1206 = vmatpush1.msra.mxu0 0.0
    %1207 = vmatprep.subr.mxu0 0.0
    %1208 = vmatpush1.msra.mxu0 0.0
    %1209 = vmatprep.subr.mxu0 0.0
    %1210 = vmatpush1.msra.mxu0 0.0
    %1211 = vmatprep.subr.mxu0 0.0
    %1212 = vmatpush1.msra.mxu0 0.0
    %1213 = vmatprep.subr.mxu0 0.0
    %1214 = vmatpush1.msra.mxu0 0.0
    %1215 = vmatprep.subr.mxu0 0.0
    %1216 = vmatpush1.msra.mxu0 0.0
    %1217 = vmatprep.subr.mxu0 0.0
    %1218 = vmatpush1.msra.mxu0 0.0
    %1219 = vmatprep.subr.mxu0 0.0
    %1220 = vmatpush1.msra.mxu0 0.0
    %1221 = vmatprep.subr.mxu0 0.0
    %1222 = vmatpush1.msra.mxu0 0.0
    %1223 = vmatprep.subr.mxu0 0.0
    %1224 = vmatpush1.msra.mxu0 0.0
    %1225 = vmatprep.subr.mxu0 0.0
    %1226 = vmatpush1.msra.mxu0 %v1195
    %1227 = vmatprep.subr.mxu0 0.0
    %1228 = vmatpush1.msra.mxu0 %v1194
    %1229 = vmatprep.subr.mxu0 0.0
    %1230 = vmatpush1.msra.mxu0 %v1193
    %1231 = vmatprep.subr.mxu0 0.0
    %1232 = vmatpush1.msra.mxu0 %v1192
    %1233 = vmatprep.subr.mxu0 0.0
    %1234 = vmatpush2.msra.mxu0 0.0
    %1235 = vmatprep.subr.mxu0 0.0
    %1236 = vmatpush2.msra.mxu0 0.0
    %1237 = vmatprep.subr.mxu0 0.0
    %1238 = vmatpush2.msra.mxu0 0.0
    %1239 = vmatprep.subr.mxu0 0.0
    %1240 = vmatpush2.msra.mxu0 0.0
    %1241 = vmatprep.subr.mxu0 0.0
    %1242 = vmatpush2.msra.mxu0 0.0
    %1243 = vmatprep.subr.mxu0 0.0
    %1244 = vmatpush2.msra.mxu0 0.0
    %1245 = vmatprep.subr.mxu0 0.0
    %1246 = vmatpush2.msra.mxu0 0.0
    %1247 = vmatprep.subr.mxu0 0.0
    %1248 = vmatpush2.msra.mxu0 0.0
    %1249 = vmatprep.subr.mxu0 0.0
    %1250 = vmatpush2.msra.mxu0 0.0
    %1251 = vmatprep.subr.mxu0 0.0
    %1252 = vmatpush2.msra.mxu0 0.0
    %1253 = vmatprep.subr.mxu0 0.0
    %1254 = vmatpush2.msra.mxu0 0.0
    %1255 = vmatprep.subr.mxu0 0.0
    %1256 = vmatpush2.msra.mxu0 0.0
    %1257 = vmatprep.subr.mxu0 0.0
    %1258 = vmatpush2.msra.mxu0 0.0
    %1259 = vmatprep.subr.mxu0 0.0
    %1260 = vmatpush2.msra.mxu0 0.0
    %1261 = vmatprep.subr.mxu0 0.0
    %1262 = vmatpush2.msra.mxu0 0.0
    %1263 = vmatprep.subr.mxu0 0.0
    %1264 = vmatpush2.msra.mxu0 0.0
    %1265 = vmatprep.mubr.f32.mxu0 0.0
    %1266 = vmatmul.mubr.f32.gmra.mxu0 %v1199
    %v1267 = vpop.f32.mrf.mxu0
    %v1268 = vadd.f32 0.0, %v1267
    %v1269 = vpop.f32.mrf.mxu0
    %1270 = vdwg.mxu0
    %v1271 = vmul.f32 %v1268, %v88
    %v1273 = vsel %vm1197, %v885, 0
    %1275 = vmatprep.subr.mxu0 0.0
    %1276 = vmatpush1.msra.mxu0 0.0
    %1277 = vmatprep.subr.mxu0 0.0
    %1278 = vmatpush1.msra.mxu0 0.0
    %1279 = vmatprep.subr.mxu0 0.0
    %1280 = vmatpush1.msra.mxu0 0.0
    %1281 = vmatprep.subr.mxu0 0.0
    %1282 = vmatpush1.msra.mxu0 0.0
    %1283 = vmatprep.subr.mxu0 0.0
    %1284 = vmatpush1.msra.mxu0 0.0
    %1285 = vmatprep.subr.mxu0 0.0
    %1286 = vmatpush1.msra.mxu0 0.0
    %1287 = vmatprep.subr.mxu0 0.0
    %1288 = vmatpush1.msra.mxu0 0.0
    %1289 = vmatprep.subr.mxu0 0.0
    %1290 = vmatpush1.msra.mxu0 0.0
    %1291 = vmatprep.subr.mxu0 0.0
    %1292 = vmatpush1.msra.mxu0 0.0
    %1293 = vmatprep.subr.mxu0 0.0
    %1294 = vmatpush1.msra.mxu0 0.0
    %1295 = vmatprep.subr.mxu0 0.0
    %1296 = vmatpush1.msra.mxu0 0.0
    %1297 = vmatprep.subr.mxu0 0.0
    %1298 = vmatpush1.msra.mxu0 0.0
    %1299 = vmatprep.subr.mxu0 0.0
    %1300 = vmatpush1.msra.mxu0 %v1195
    %1301 = vmatprep.subr.mxu0 0.0
    %1302 = vmatpush1.msra.mxu0 %v1194
    %1303 = vmatprep.subr.mxu0 0.0
    %1304 = vmatpush1.msra.mxu0 %v1193
    %1305 = vmatprep.subr.mxu0 0.0
    %1306 = vmatpush1.msra.mxu0 %v1192
    %1307 = vmatprep.subr.mxu0 0.0
    %1308 = vmatpush2.msra.mxu0 0.0
    %1309 = vmatprep.subr.mxu0 0.0
    %1310 = vmatpush2.msra.mxu0 0.0
    %1311 = vmatprep.subr.mxu0 0.0
    %1312 = vmatpush2.msra.mxu0 0.0
    %1313 = vmatprep.subr.mxu0 0.0
    %1314 = vmatpush2.msra.mxu0 0.0
    %1315 = vmatprep.subr.mxu0 0.0
    %1316 = vmatpush2.msra.mxu0 0.0
    %1317 = vmatprep.subr.mxu0 0.0
    %1318 = vmatpush2.msra.mxu0 0.0
    %1319 = vmatprep.subr.mxu0 0.0
    %1320 = vmatpush2.msra.mxu0 0.0
    %1321 = vmatprep.subr.mxu0 0.0
    %1322 = vmatpush2.msra.mxu0 0.0
    %1323 = vmatprep.subr.mxu0 0.0
    %1324 = vmatpush2.msra.mxu0 0.0
    %1325 = vmatprep.subr.mxu0 0.0
    %1326 = vmatpush2.msra.mxu0 0.0
    %1327 = vmatprep.subr.mxu0 0.0
    %1328 = vmatpush2.msra.mxu0 0.0
    %1329 = vmatprep.subr.mxu0 0.0
    %1330 = vmatpush2.msra.mxu0 0.0
    %1331 = vmatprep.subr.mxu0 0.0
    %1332 = vmatpush2.msra.mxu0 0.0
    %1333 = vmatprep.subr.mxu0 0.0
    %1334 = vmatpush2.msra.mxu0 0.0
    %1335 = vmatprep.subr.mxu0 0.0
    %1336 = vmatpush2.msra.mxu0 0.0
    %1337 = vmatprep.subr.mxu0 0.0
    %1338 = vmatpush2.msra.mxu0 0.0
    %1339 = vmatprep.mubr.f32.mxu0 0.0
    %1340 = vmatmul.mubr.f32.gmra.mxu0 %v1273
    %v1341 = vpop.f32.mrf.mxu0
    %v1342 = vadd.f32 0.0, %v1341
    %v1343 = vpop.f32.mrf.mxu0
    %1344 = vdwg.mxu0
    %v1345 = vmul.f32 %v1342, %v101
    %v1347 = vsel %vm1197, %v936, 0
    %1349 = vmatprep.subr.mxu0 0.0
    %1350 = vmatpush1.msra.mxu0 0.0
    %1351 = vmatprep.subr.mxu0 0.0
    %1352 = vmatpush1.msra.mxu0 0.0
    %1353 = vmatprep.subr.mxu0 0.0
    %1354 = vmatpush1.msra.mxu0 0.0
    %1355 = vmatprep.subr.mxu0 0.0
    %1356 = vmatpush1.msra.mxu0 0.0
    %1357 = vmatprep.subr.mxu0 0.0
    %1358 = vmatpush1.msra.mxu0 0.0
    %1359 = vmatprep.subr.mxu0 0.0
    %1360 = vmatpush1.msra.mxu0 0.0
    %1361 = vmatprep.subr.mxu0 0.0
    %1362 = vmatpush1.msra.mxu0 0.0
    %1363 = vmatprep.subr.mxu0 0.0
    %1364 = vmatpush1.msra.mxu0 0.0
    %1365 = vmatprep.subr.mxu0 0.0
    %1366 = vmatpush1.msra.mxu0 0.0
    %1367 = vmatprep.subr.mxu0 0.0
    %1368 = vmatpush1.msra.mxu0 0.0
    %1369 = vmatprep.subr.mxu0 0.0
    %1370 = vmatpush1.msra.mxu0 0.0
    %1371 = vmatprep.subr.mxu0 0.0
    %1372 = vmatpush1.msra.mxu0 0.0
    %1373 = vmatprep.subr.mxu0 0.0
    %1374 = vmatpush1.msra.mxu0 %v1195
    %1375 = vmatprep.subr.mxu0 0.0
    %1376 = vmatpush1.msra.mxu0 %v1194
    %1377 = vmatprep.subr.mxu0 0.0
    %1378 = vmatpush1.msra.mxu0 %v1193
    %1379 = vmatprep.subr.mxu0 0.0
    %1380 = vmatpush1.msra.mxu0 %v1192
    %1381 = vmatprep.subr.mxu0 0.0
    %1382 = vmatpush2.msra.mxu0 0.0
    %1383 = vmatprep.subr.mxu0 0.0
    %1384 = vmatpush2.msra.mxu0 0.0
    %1385 = vmatprep.subr.mxu0 0.0
    %1386 = vmatpush2.msra.mxu0 0.0
    %1387 = vmatprep.subr.mxu0 0.0
    %1388 = vmatpush2.msra.mxu0 0.0
    %1389 = vmatprep.subr.mxu0 0.0
    %1390 = vmatpush2.msra.mxu0 0.0
    %1391 = vmatprep.subr.mxu0 0.0
    %1392 = vmatpush2.msra.mxu0 0.0
    %1393 = vmatprep.subr.mxu0 0.0
    %1394 = vmatpush2.msra.mxu0 0.0
    %1395 = vmatprep.subr.mxu0 0.0
    %1396 = vmatpush2.msra.mxu0 0.0
    %1397 = vmatprep.subr.mxu0 0.0
    %1398 = vmatpush2.msra.mxu0 0.0
    %1399 = vmatprep.subr.mxu0 0.0
    %1400 = vmatpush2.msra.mxu0 0.0
    %1401 = vmatprep.subr.mxu0 0.0
    %1402 = vmatpush2.msra.mxu0 0.0
    %1403 = vmatprep.subr.mxu0 0.0
    %1404 = vmatpush2.msra.mxu0 0.0
    %1405 = vmatprep.subr.mxu0 0.0
    %1406 = vmatpush2.msra.mxu0 0.0
    %1407 = vmatprep.subr.mxu0 0.0
    %1408 = vmatpush2.msra.mxu0 0.0
    %1409 = vmatprep.subr.mxu0 0.0
    %1410 = vmatpush2.msra.mxu0 0.0
    %1411 = vmatprep.subr.mxu0 0.0
    %1412 = vmatpush2.msra.mxu0 0.0
    %1413 = vmatprep.mubr.f32.mxu0 0.0
    %1414 = vmatmul.mubr.f32.gmra.mxu0 %v1347
    %v1415 = vpop.f32.mrf.mxu0
    %v1416 = vadd.f32 0.0, %v1415
    %v1417 = vpop.f32.mrf.mxu0
    %1418 = vdwg.mxu0
    %v1419 = vmul.f32 %v1416, %v113
    %v1421 = vsel %vm1197, %v987, 0
    %1423 = vmatprep.subr.mxu0 0.0
    %1424 = vmatpush1.msra.mxu0 0.0
    %1425 = vmatprep.subr.mxu0 0.0
    %1426 = vmatpush1.msra.mxu0 0.0
    %1427 = vmatprep.subr.mxu0 0.0
    %1428 = vmatpush1.msra.mxu0 0.0
    %1429 = vmatprep.subr.mxu0 0.0
    %1430 = vmatpush1.msra.mxu0 0.0
    %1431 = vmatprep.subr.mxu0 0.0
    %1432 = vmatpush1.msra.mxu0 0.0
    %1433 = vmatprep.subr.mxu0 0.0
    %1434 = vmatpush1.msra.mxu0 0.0
    %1435 = vmatprep.subr.mxu0 0.0
    %1436 = vmatpush1.msra.mxu0 0.0
    %1437 = vmatprep.subr.mxu0 0.0
    %1438 = vmatpush1.msra.mxu0 0.0
    %1439 = vmatprep.subr.mxu0 0.0
    %1440 = vmatpush1.msra.mxu0 0.0
    %1441 = vmatprep.subr.mxu0 0.0
    %1442 = vmatpush1.msra.mxu0 0.0
    %1443 = vmatprep.subr.mxu0 0.0
    %1444 = vmatpush1.msra.mxu0 0.0
    %1445 = vmatprep.subr.mxu0 0.0
    %1446 = vmatpush1.msra.mxu0 0.0
    %1447 = vmatprep.subr.mxu0 0.0
    %1448 = vmatpush1.msra.mxu0 %v1195
    %1449 = vmatprep.subr.mxu0 0.0
    %1450 = vmatpush1.msra.mxu0 %v1194
    %1451 = vmatprep.subr.mxu0 0.0
    %1452 = vmatpush1.msra.mxu0 %v1193
    %1453 = vmatprep.subr.mxu0 0.0
    %1454 = vmatpush1.msra.mxu0 %v1192
    %1455 = vmatprep.subr.mxu0 0.0
    %1456 = vmatpush2.msra.mxu0 0.0
    %1457 = vmatprep.subr.mxu0 0.0
    %1458 = vmatpush2.msra.mxu0 0.0
    %1459 = vmatprep.subr.mxu0 0.0
    %1460 = vmatpush2.msra.mxu0 0.0
    %1461 = vmatprep.subr.mxu0 0.0
    %1462 = vmatpush2.msra.mxu0 0.0
    %1463 = vmatprep.subr.mxu0 0.0
    %1464 = vmatpush2.msra.mxu0 0.0
    %1465 = vmatprep.subr.mxu0 0.0
    %1466 = vmatpush2.msra.mxu0 0.0
    %1467 = vmatprep.subr.mxu0 0.0
    %1468 = vmatpush2.msra.mxu0 0.0
    %1469 = vmatprep.subr.mxu0 0.0
    %1470 = vmatpush2.msra.mxu0 0.0
    %1471 = vmatprep.subr.mxu0 0.0
    %1472 = vmatpush2.msra.mxu0 0.0
    %1473 = vmatprep.subr.mxu0 0.0
    %1474 = vmatpush2.msra.mxu0 0.0
    %1475 = vmatprep.subr.mxu0 0.0
    %1476 = vmatpush2.msra.mxu0 0.0
    %1477 = vmatprep.subr.mxu0 0.0
    %1478 = vmatpush2.msra.mxu0 0.0
    %1479 = vmatprep.subr.mxu0 0.0
    %1480 = vmatpush2.msra.mxu0 0.0
    %1481 = vmatprep.subr.mxu0 0.0
    %1482 = vmatpush2.msra.mxu0 0.0
    %1483 = vmatprep.subr.mxu0 0.0
    %1484 = vmatpush2.msra.mxu0 0.0
    %1485 = vmatprep.subr.mxu0 0.0
    %1486 = vmatpush2.msra.mxu0 0.0
    %1487 = vmatprep.mubr.f32.mxu0 0.0
    %1488 = vmatmul.mubr.f32.gmra.mxu0 %v1421
    %v1489 = vpop.f32.mrf.mxu0
    %v1490 = vadd.f32 0.0, %v1489
    %v1491 = vpop.f32.mrf.mxu0
    %1492 = vdwg.mxu0
    %v1493 = vmul.f32 %v1490, %v125
    %v1495 = vsel %vm1197, %v1038, 0
    %1497 = vmatprep.subr.mxu0 0.0
    %1498 = vmatpush1.msra.mxu0 0.0
    %1499 = vmatprep.subr.mxu0 0.0
    %1500 = vmatpush1.msra.mxu0 0.0
    %1501 = vmatprep.subr.mxu0 0.0
    %1502 = vmatpush1.msra.mxu0 0.0
    %1503 = vmatprep.subr.mxu0 0.0
    %1504 = vmatpush1.msra.mxu0 0.0
    %1505 = vmatprep.subr.mxu0 0.0
    %1506 = vmatpush1.msra.mxu0 0.0
    %1507 = vmatprep.subr.mxu0 0.0
    %1508 = vmatpush1.msra.mxu0 0.0
    %1509 = vmatprep.subr.mxu0 0.0
    %1510 = vmatpush1.msra.mxu0 0.0
    %1511 = vmatprep.subr.mxu0 0.0
    %1512 = vmatpush1.msra.mxu0 0.0
    %1513 = vmatprep.subr.mxu0 0.0
    %1514 = vmatpush1.msra.mxu0 0.0
    %1515 = vmatprep.subr.mxu0 0.0
    %1516 = vmatpush1.msra.mxu0 0.0
    %1517 = vmatprep.subr.mxu0 0.0
    %1518 = vmatpush1.msra.mxu0 0.0
    %1519 = vmatprep.subr.mxu0 0.0
    %1520 = vmatpush1.msra.mxu0 0.0
    %1521 = vmatprep.subr.mxu0 0.0
    %1522 = vmatpush1.msra.mxu0 %v1195
    %1523 = vmatprep.subr.mxu0 0.0
    %1524 = vmatpush1.msra.mxu0 %v1194
    %1525 = vmatprep.subr.mxu0 0.0
    %1526 = vmatpush1.msra.mxu0 %v1193
    %1527 = vmatprep.subr.mxu0 0.0
    %1528 = vmatpush1.msra.mxu0 %v1192
    %1529 = vmatprep.subr.mxu0 0.0
    %1530 = vmatpush2.msra.mxu0 0.0
    %1531 = vmatprep.subr.mxu0 0.0
    %1532 = vmatpush2.msra.mxu0 0.0
    %1533 = vmatprep.subr.mxu0 0.0
    %1534 = vmatpush2.msra.mxu0 0.0
    %1535 = vmatprep.subr.mxu0 0.0
    %1536 = vmatpush2.msra.mxu0 0.0
    %1537 = vmatprep.subr.mxu0 0.0
    %1538 = vmatpush2.msra.mxu0 0.0
    %1539 = vmatprep.subr.mxu0 0.0
    %1540 = vmatpush2.msra.mxu0 0.0
    %1541 = vmatprep.subr.mxu0 0.0
    %1542 = vmatpush2.msra.mxu0 0.0
    %1543 = vmatprep.subr.mxu0 0.0
    %1544 = vmatpush2.msra.mxu0 0.0
    %1545 = vmatprep.subr.mxu0 0.0
    %1546 = vmatpush2.msra.mxu0 0.0
    %1547 = vmatprep.subr.mxu0 0.0
    %1548 = vmatpush2.msra.mxu0 0.0
    %1549 = vmatprep.subr.mxu0 0.0
    %1550 = vmatpush2.msra.mxu0 0.0
    %1551 = vmatprep.subr.mxu0 0.0
    %1552 = vmatpush2.msra.mxu0 0.0
    %1553 = vmatprep.subr.mxu0 0.0
    %1554 = vmatpush2.msra.mxu0 0.0
    %1555 = vmatprep.subr.mxu0 0.0
    %1556 = vmatpush2.msra.mxu0 0.0
    %1557 = vmatprep.subr.mxu0 0.0
    %1558 = vmatpush2.msra.mxu0 0.0
    %1559 = vmatprep.subr.mxu0 0.0
    %1560 = vmatpush2.msra.mxu0 0.0
    %1561 = vmatprep.mubr.f32.mxu0 0.0
    %1562 = vmatmul.mubr.f32.gmra.mxu0 %v1495
    %v1563 = vpop.f32.mrf.mxu0
    %v1564 = vadd.f32 0.0, %v1563
    %v1565 = vpop.f32.mrf.mxu0
    %1566 = vdwg.mxu0
    %v1567 = vmul.f32 %v1564, %v137
    %v1569 = vsel %vm1197, %v1089, 0
    %1571 = vmatprep.subr.mxu0 0.0
    %1572 = vmatpush1.msra.mxu0 0.0
    %1573 = vmatprep.subr.mxu0 0.0
    %1574 = vmatpush1.msra.mxu0 0.0
    %1575 = vmatprep.subr.mxu0 0.0
    %1576 = vmatpush1.msra.mxu0 0.0
    %1577 = vmatprep.subr.mxu0 0.0
    %1578 = vmatpush1.msra.mxu0 0.0
    %1579 = vmatprep.subr.mxu0 0.0
    %1580 = vmatpush1.msra.mxu0 0.0
    %1581 = vmatprep.subr.mxu0 0.0
    %1582 = vmatpush1.msra.mxu0 0.0
    %1583 = vmatprep.subr.mxu0 0.0
    %1584 = vmatpush1.msra.mxu0 0.0
    %1585 = vmatprep.subr.mxu0 0.0
    %1586 = vmatpush1.msra.mxu0 0.0
    %1587 = vmatprep.subr.mxu0 0.0
    %1588 = vmatpush1.msra.mxu0 0.0
    %1589 = vmatprep.subr.mxu0 0.0
    %1590 = vmatpush1.msra.mxu0 0.0
    %1591 = vmatprep.subr.mxu0 0.0
    %1592 = vmatpush1.msra.mxu0 0.0
    %1593 = vmatprep.subr.mxu0 0.0
    %1594 = vmatpush1.msra.mxu0 0.0
    %1595 = vmatprep.subr.mxu0 0.0
    %1596 = vmatpush1.msra.mxu0 %v1195
    %1597 = vmatprep.subr.mxu0 0.0
    %1598 = vmatpush1.msra.mxu0 %v1194
    %1599 = vmatprep.subr.mxu0 0.0
    %1600 = vmatpush1.msra.mxu0 %v1193
    %1601 = vmatprep.subr.mxu0 0.0
    %1602 = vmatpush1.msra.mxu0 %v1192
    %1603 = vmatprep.subr.mxu0 0.0
    %1604 = vmatpush2.msra.mxu0 0.0
    %1605 = vmatprep.subr.mxu0 0.0
    %1606 = vmatpush2.msra.mxu0 0.0
    %1607 = vmatprep.subr.mxu0 0.0
    %1608 = vmatpush2.msra.mxu0 0.0
    %1609 = vmatprep.subr.mxu0 0.0
    %1610 = vmatpush2.msra.mxu0 0.0
    %1611 = vmatprep.subr.mxu0 0.0
    %1612 = vmatpush2.msra.mxu0 0.0
    %1613 = vmatprep.subr.mxu0 0.0
    %1614 = vmatpush2.msra.mxu0 0.0
    %1615 = vmatprep.subr.mxu0 0.0
    %1616 = vmatpush2.msra.mxu0 0.0
    %1617 = vmatprep.subr.mxu0 0.0
    %1618 = vmatpush2.msra.mxu0 0.0
    %1619 = vmatprep.subr.mxu0 0.0
    %1620 = vmatpush2.msra.mxu0 0.0
    %1621 = vmatprep.subr.mxu0 0.0
    %1622 = vmatpush2.msra.mxu0 0.0
    %1623 = vmatprep.subr.mxu0 0.0
    %1624 = vmatpush2.msra.mxu0 0.0
    %1625 = vmatprep.subr.mxu0 0.0
    %1626 = vmatpush2.msra.mxu0 0.0
    %1627 = vmatprep.subr.mxu0 0.0
    %1628 = vmatpush2.msra.mxu0 0.0
    %1629 = vmatprep.subr.mxu0 0.0
    %1630 = vmatpush2.msra.mxu0 0.0
    %1631 = vmatprep.subr.mxu0 0.0
    %1632 = vmatpush2.msra.mxu0 0.0
    %1633 = vmatprep.subr.mxu0 0.0
    %1634 = vmatpush2.msra.mxu0 0.0
    %1635 = vmatprep.mubr.f32.mxu0 0.0
    %1636 = vmatmul.mubr.f32.gmra.mxu0 %v1569
    %v1637 = vpop.f32.mrf.mxu0
    %v1638 = vadd.f32 0.0, %v1637
    %v1639 = vpop.f32.mrf.mxu0
    %1640 = vdwg.mxu0
    %v1641 = vmul.f32 %v1638, %v149
    %v1643 = vsel %vm1197, %v1140, 0
    %1645 = vmatprep.subr.mxu0 0.0
    %1646 = vmatpush1.msra.mxu0 0.0
    %1647 = vmatprep.subr.mxu0 0.0
    %1648 = vmatpush1.msra.mxu0 0.0
    %1649 = vmatprep.subr.mxu0 0.0
    %1650 = vmatpush1.msra.mxu0 0.0
    %1651 = vmatprep.subr.mxu0 0.0
    %1652 = vmatpush1.msra.mxu0 0.0
    %1653 = vmatprep.subr.mxu0 0.0
    %1654 = vmatpush1.msra.mxu0 0.0
    %1655 = vmatprep.subr.mxu0 0.0
    %1656 = vmatpush1.msra.mxu0 0.0
    %1657 = vmatprep.subr.mxu0 0.0
    %1658 = vmatpush1.msra.mxu0 0.0
    %1659 = vmatprep.subr.mxu0 0.0
    %1660 = vmatpush1.msra.mxu0 0.0
    %1661 = vmatprep.subr.mxu0 0.0
    %1662 = vmatpush1.msra.mxu0 0.0
    %1663 = vmatprep.subr.mxu0 0.0
    %1664 = vmatpush1.msra.mxu0 0.0
    %1665 = vmatprep.subr.mxu0 0.0
    %1666 = vmatpush1.msra.mxu0 0.0
    %1667 = vmatprep.subr.mxu0 0.0
    %1668 = vmatpush1.msra.mxu0 0.0
    %1669 = vmatprep.subr.mxu0 0.0
    %1670 = vmatpush1.msra.mxu0 %v1195
    %1671 = vmatprep.subr.mxu0 0.0
    %1672 = vmatpush1.msra.mxu0 %v1194
    %1673 = vmatprep.subr.mxu0 0.0
    %1674 = vmatpush1.msra.mxu0 %v1193
    %1675 = vmatprep.subr.mxu0 0.0
    %1676 = vmatpush1.msra.mxu0 %v1192
    %1677 = vmatprep.subr.mxu0 0.0
    %1678 = vmatpush2.msra.mxu0 0.0
    %1679 = vmatprep.subr.mxu0 0.0
    %1680 = vmatpush2.msra.mxu0 0.0
    %1681 = vmatprep.subr.mxu0 0.0
    %1682 = vmatpush2.msra.mxu0 0.0
    %1683 = vmatprep.subr.mxu0 0.0
    %1684 = vmatpush2.msra.mxu0 0.0
    %1685 = vmatprep.subr.mxu0 0.0
    %1686 = vmatpush2.msra.mxu0 0.0
    %1687 = vmatprep.subr.mxu0 0.0
    %1688 = vmatpush2.msra.mxu0 0.0
    %1689 = vmatprep.subr.mxu0 0.0
    %1690 = vmatpush2.msra.mxu0 0.0
    %1691 = vmatprep.subr.mxu0 0.0
    %1692 = vmatpush2.msra.mxu0 0.0
    %1693 = vmatprep.subr.mxu0 0.0
    %1694 = vmatpush2.msra.mxu0 0.0
    %1695 = vmatprep.subr.mxu0 0.0
    %1696 = vmatpush2.msra.mxu0 0.0
    %1697 = vmatprep.subr.mxu0 0.0
    %1698 = vmatpush2.msra.mxu0 0.0
    %1699 = vmatprep.subr.mxu0 0.0
    %1700 = vmatpush2.msra.mxu0 0.0
    %1701 = vmatprep.subr.mxu0 0.0
    %1702 = vmatpush2.msra.mxu0 0.0
    %1703 = vmatprep.subr.mxu0 0.0
    %1704 = vmatpush2.msra.mxu0 0.0
    %1705 = vmatprep.subr.mxu0 0.0
    %1706 = vmatpush2.msra.mxu0 0.0
    %1707 = vmatprep.subr.mxu0 0.0
    %1708 = vmatpush2.msra.mxu0 0.0
    %1709 = vmatprep.mubr.f32.mxu0 0.0
    %1710 = vmatmul.mubr.f32.gmra.mxu0 %v1643
    %v1711 = vpop.f32.mrf.mxu0
    %v1712 = vadd.f32 0.0, %v1711
    %v1713 = vpop.f32.mrf.mxu0
    %1714 = vdwg.mxu0
    %v1715 = vmul.f32 %v1712, %v161
    %v1717 = vsel %vm1197, %v1191, 0
    %1719 = vmatprep.subr.mxu0 0.0
    %1720 = vmatpush1.msra.mxu0 0.0
    %1721 = vmatprep.subr.mxu0 0.0
    %1722 = vmatpush1.msra.mxu0 0.0
    %1723 = vmatprep.subr.mxu0 0.0
    %1724 = vmatpush1.msra.mxu0 0.0
    %1725 = vmatprep.subr.mxu0 0.0
    %1726 = vmatpush1.msra.mxu0 0.0
    %1727 = vmatprep.subr.mxu0 0.0
    %1728 = vmatpush1.msra.mxu0 0.0
    %1729 = vmatprep.subr.mxu0 0.0
    %1730 = vmatpush1.msra.mxu0 0.0
    %1731 = vmatprep.subr.mxu0 0.0
    %1732 = vmatpush1.msra.mxu0 0.0
    %1733 = vmatprep.subr.mxu0 0.0
    %1734 = vmatpush1.msra.mxu0 0.0
    %1735 = vmatprep.subr.mxu0 0.0
    %1736 = vmatpush1.msra.mxu0 0.0
    %1737 = vmatprep.subr.mxu0 0.0
    %1738 = vmatpush1.msra.mxu0 0.0
    %1739 = vmatprep.subr.mxu0 0.0
    %1740 = vmatpush1.msra.mxu0 0.0
    %1741 = vmatprep.subr.mxu0 0.0
    %1742 = vmatpush1.msra.mxu0 0.0
    %1743 = vmatprep.subr.mxu0 0.0
    %1744 = vmatpush1.msra.mxu0 %v1195
    %1745 = vmatprep.subr.mxu0 0.0
    %1746 = vmatpush1.msra.mxu0 %v1194
    %1747 = vmatprep.subr.mxu0 0.0
    %1748 = vmatpush1.msra.mxu0 %v1193
    %1749 = vmatprep.subr.mxu0 0.0
    %1750 = vmatpush1.msra.mxu0 %v1192
    %1751 = vmatprep.subr.mxu0 0.0
    %1752 = vmatpush2.msra.mxu0 0.0
    %1753 = vmatprep.subr.mxu0 0.0
    %1754 = vmatpush2.msra.mxu0 0.0
    %1755 = vmatprep.subr.mxu0 0.0
    %1756 = vmatpush2.msra.mxu0 0.0
    %1757 = vmatprep.subr.mxu0 0.0
    %1758 = vmatpush2.msra.mxu0 0.0
    %1759 = vmatprep.subr.mxu0 0.0
    %1760 = vmatpush2.msra.mxu0 0.0
    %1761 = vmatprep.subr.mxu0 0.0
    %1762 = vmatpush2.msra.mxu0 0.0
    %1763 = vmatprep.subr.mxu0 0.0
    %1764 = vmatpush2.msra.mxu0 0.0
    %1765 = vmatprep.subr.mxu0 0.0
    %1766 = vmatpush2.msra.mxu0 0.0
    %1767 = vmatprep.subr.mxu0 0.0
    %1768 = vmatpush2.msra.mxu0 0.0
    %1769 = vmatprep.subr.mxu0 0.0
    %1770 = vmatpush2.msra.mxu0 0.0
    %1771 = vmatprep.subr.mxu0 0.0
    %1772 = vmatpush2.msra.mxu0 0.0
    %1773 = vmatprep.subr.mxu0 0.0
    %1774 = vmatpush2.msra.mxu0 0.0
    %1775 = vmatprep.subr.mxu0 0.0
    %1776 = vmatpush2.msra.mxu0 0.0
    %1777 = vmatprep.subr.mxu0 0.0
    %1778 = vmatpush2.msra.mxu0 0.0
    %1779 = vmatprep.subr.mxu0 0.0
    %1780 = vmatpush2.msra.mxu0 0.0
    %1781 = vmatprep.subr.mxu0 0.0
    %1782 = vmatpush2.msra.mxu0 0.0
    %1783 = vmatprep.mubr.f32.mxu0 0.0
    %1784 = vmatmul.mubr.f32.gmra.mxu0 %v1717
    %v1785 = vpop.f32.mrf.mxu0
    %v1786 = vadd.f32 0.0, %v1785
    %v1787 = vpop.f32.mrf.mxu0
    %1788 = vdwg.mxu0
    %v1789 = vmul.f32 %v1786, %v173
    %v1790 = vmul.f32 %v781, %v1271
    %v1791 = vmul.f32 %v786, %v1345
    %v1792 = vadd.f32 %v1790, %v1791
    %v1793 = vmul.f32 %v792, %v1419
    %v1794 = vadd.f32 %v1792, %v1793
    %v1795 = vmul.f32 %v798, %v1493
    %v1796 = vadd.f32 %v1794, %v1795
    %v1797 = vmul.f32 %v804, %v1567
    %v1798 = vadd.f32 %v1796, %v1797
    %v1799 = vmul.f32 %v810, %v1641
    %v1800 = vadd.f32 %v1798, %v1799
    %v1801 = vmul.f32 %v816, %v1715
    %v1802 = vadd.f32 %v1800, %v1801
    %v1803 = vmul.f32 %v822, %v1789
    %v1804 = vadd.f32 %v1802, %v1803
    %v1805 = vmul.f32 %v1804, %v88
    %v1807 = vlaneseq
    %v1808 = vshrl.u32 %v1807, 7
    %v1809 = vsub.s32 0, %v1808
    %v1810 = vrot.slane %v1196, %v1809
    %v1812 = vadd.f32 %v1805, %v1810
    %v1813 = vmax.f32 %v1812, 0.0
    %v1814 = vmul.f32 %v838, %v1271
    %v1815 = vmul.f32 %v843, %v1345
    %v1816 = vadd.f32 %v1814, %v1815
    %v1817 = vmul.f32 %v849, %v1419
    %v1818 = vadd.f32 %v1816, %v1817
    %v1819 = vmul.f32 %v855, %v1493
    %v1820 = vadd.f32 %v1818, %v1819
    %v1821 = vmul.f32 %v861, %v1567
    %v1822 = vadd.f32 %v1820, %v1821
    %v1823 = vmul.f32 %v867, %v1641
    %v1824 = vadd.f32 %v1822, %v1823
    %v1825 = vmul.f32 %v873, %v1715
    %v1826 = vadd.f32 %v1824, %v1825
    %v1827 = vmul.f32 %v879, %v1789
    %v1828 = vadd.f32 %v1826, %v1827
    %v1829 = vmul.f32 %v1828, %v101
    %v1830 = vadd.f32 %v1829, %v1810
    %v1831 = vmax.f32 %v1830, 0.0
    %v1832 = vmul.f32 %v889, %v1271
    %v1833 = vmul.f32 %v894, %v1345
    %v1834 = vadd.f32 %v1832, %v1833
    %v1835 = vmul.f32 %v900, %v1419
    %v1836 = vadd.f32 %v1834, %v1835
    %v1837 = vmul.f32 %v906, %v1493
    %v1838 = vadd.f32 %v1836, %v1837
    %v1839 = vmul.f32 %v912, %v1567
    %v1840 = vadd.f32 %v1838, %v1839
    %v1841 = vmul.f32 %v918, %v1641
    %v1842 = vadd.f32 %v1840, %v1841
    %v1843 = vmul.f32 %v924, %v1715
    %v1844 = vadd.f32 %v1842, %v1843
    %v1845 = vmul.f32 %v930, %v1789
    %v1846 = vadd.f32 %v1844, %v1845
    %v1847 = vmul.f32 %v1846, %v113
    %v1848 = vadd.f32 %v1847, %v1810
    %v1849 = vmax.f32 %v1848, 0.0
    %v1850 = vmul.f32 %v940, %v1271
    %v1851 = vmul.f32 %v945, %v1345
    %v1852 = vadd.f32 %v1850, %v1851
    %v1853 = vmul.f32 %v951, %v1419
    %v1854 = vadd.f32 %v1852, %v1853
    %v1855 = vmul.f32 %v957, %v1493
    %v1856 = vadd.f32 %v1854, %v1855
    %v1857 = vmul.f32 %v963, %v1567
    %v1858 = vadd.f32 %v1856, %v1857
    %v1859 = vmul.f32 %v969, %v1641
    %v1860 = vadd.f32 %v1858, %v1859
    %v1861 = vmul.f32 %v975, %v1715
    %v1862 = vadd.f32 %v1860, %v1861
    %v1863 = vmul.f32 %v981, %v1789
    %v1864 = vadd.f32 %v1862, %v1863
    %v1865 = vmul.f32 %v1864, %v125
    %v1866 = vadd.f32 %v1865, %v1810
    %v1867 = vmax.f32 %v1866, 0.0
    %v1868 = vmul.f32 %v991, %v1271
    %v1869 = vmul.f32 %v996, %v1345
    %v1870 = vadd.f32 %v1868, %v1869
    %v1871 = vmul.f32 %v1002, %v1419
    %v1872 = vadd.f32 %v1870, %v1871
    %v1873 = vmul.f32 %v1008, %v1493
    %v1874 = vadd.f32 %v1872, %v1873
    %v1875 = vmul.f32 %v1014, %v1567
    %v1876 = vadd.f32 %v1874, %v1875
    %v1877 = vmul.f32 %v1020, %v1641
    %v1878 = vadd.f32 %v1876, %v1877
    %v1879 = vmul.f32 %v1026, %v1715
    %v1880 = vadd.f32 %v1878, %v1879
    %v1881 = vmul.f32 %v1032, %v1789
    %v1882 = vadd.f32 %v1880, %v1881
    %v1883 = vmul.f32 %v1882, %v137
    %v1884 = vadd.f32 %v1883, %v1810
    %v1885 = vmax.f32 %v1884, 0.0
    %v1886 = vmul.f32 %v1042, %v1271
    %v1887 = vmul.f32 %v1047, %v1345
    %v1888 = vadd.f32 %v1886, %v1887
    %v1889 = vmul.f32 %v1053, %v1419
    %v1890 = vadd.f32 %v1888, %v1889
    %v1891 = vmul.f32 %v1059, %v1493
    %v1892 = vadd.f32 %v1890, %v1891
    %v1893 = vmul.f32 %v1065, %v1567
    %v1894 = vadd.f32 %v1892, %v1893
    %v1895 = vmul.f32 %v1071, %v1641
    %v1896 = vadd.f32 %v1894, %v1895
    %v1897 = vmul.f32 %v1077, %v1715
    %v1898 = vadd.f32 %v1896, %v1897
    %v1899 = vmul.f32 %v1083, %v1789
    %v1900 = vadd.f32 %v1898, %v1899
    %v1901 = vmul.f32 %v1900, %v149
    %v1902 = vadd.f32 %v1901, %v1810
    %v1903 = vmax.f32 %v1902, 0.0
    %v1904 = vmul.f32 %v1093, %v1271
    %v1905 = vmul.f32 %v1098, %v1345
    %v1906 = vadd.f32 %v1904, %v1905
    %v1907 = vmul.f32 %v1104, %v1419
    %v1908 = vadd.f32 %v1906, %v1907
    %v1909 = vmul.f32 %v1110, %v1493
    %v1910 = vadd.f32 %v1908, %v1909
    %v1911 = vmul.f32 %v1116, %v1567
    %v1912 = vadd.f32 %v1910, %v1911
    %v1913 = vmul.f32 %v1122, %v1641
    %v1914 = vadd.f32 %v1912, %v1913
    %v1915 = vmul.f32 %v1128, %v1715
    %v1916 = vadd.f32 %v1914, %v1915
    %v1917 = vmul.f32 %v1134, %v1789
    %v1918 = vadd.f32 %v1916, %v1917
    %v1919 = vmul.f32 %v1918, %v161
    %v1920 = vadd.f32 %v1919, %v1810
    %v1921 = vmax.f32 %v1920, 0.0
    %v1922 = vmul.f32 %v1144, %v1271
    %v1923 = vmul.f32 %v1149, %v1345
    %v1924 = vadd.f32 %v1922, %v1923
    %v1925 = vmul.f32 %v1155, %v1419
    %v1926 = vadd.f32 %v1924, %v1925
    %v1927 = vmul.f32 %v1161, %v1493
    %v1928 = vadd.f32 %v1926, %v1927
    %v1929 = vmul.f32 %v1167, %v1567
    %v1930 = vadd.f32 %v1928, %v1929
    %v1931 = vmul.f32 %v1173, %v1641
    %v1932 = vadd.f32 %v1930, %v1931
    %v1933 = vmul.f32 %v1179, %v1715
    %v1934 = vadd.f32 %v1932, %v1933
    %v1935 = vmul.f32 %v1185, %v1789
    %v1936 = vadd.f32 %v1934, %v1935
    %v1937 = vmul.f32 %v1936, %v173
    %v1938 = vadd.f32 %v1937, %v1810
    %v1939 = vmax.f32 %v1938, 0.0
    %v1940 = vld [vmem:[#allocation6] sm:$0xff]
    %v1941 = vld [vmem:[#allocation6 + $0x8] sm:$0xff]
    %v1942 = vld [vmem:[#allocation6 + $0x10] sm:$0xff]
    %v1943 = vld [vmem:[#allocation6 + $0x18] sm:$0xff]
    %v1944 = vld [vmem:[%s7] sm:$0x1]
    %v1946 = vsel %vm1197, %v1813, 0
    %1948 = vmatprep.subr.mxu0 0.0
    %1949 = vmatpush1.msra.mxu0 0.0
    %1950 = vmatprep.subr.mxu0 0.0
    %1951 = vmatpush1.msra.mxu0 0.0
    %1952 = vmatprep.subr.mxu0 0.0
    %1953 = vmatpush1.msra.mxu0 0.0
    %1954 = vmatprep.subr.mxu0 0.0
    %1955 = vmatpush1.msra.mxu0 0.0
    %1956 = vmatprep.subr.mxu0 0.0
    %1957 = vmatpush1.msra.mxu0 0.0
    %1958 = vmatprep.subr.mxu0 0.0
    %1959 = vmatpush1.msra.mxu0 0.0
    %1960 = vmatprep.subr.mxu0 0.0
    %1961 = vmatpush1.msra.mxu0 0.0
    %1962 = vmatprep.subr.mxu0 0.0
    %1963 = vmatpush1.msra.mxu0 0.0
    %1964 = vmatprep.subr.mxu0 0.0
    %1965 = vmatpush1.msra.mxu0 0.0
    %1966 = vmatprep.subr.mxu0 0.0
    %1967 = vmatpush1.msra.mxu0 0.0
    %1968 = vmatprep.subr.mxu0 0.0
    %1969 = vmatpush1.msra.mxu0 0.0
    %1970 = vmatprep.subr.mxu0 0.0
    %1971 = vmatpush1.msra.mxu0 0.0
    %1972 = vmatprep.subr.mxu0 0.0
    %1973 = vmatpush1.msra.mxu0 %v1943
    %1974 = vmatprep.subr.mxu0 0.0
    %1975 = vmatpush1.msra.mxu0 %v1942
    %1976 = vmatprep.subr.mxu0 0.0
    %1977 = vmatpush1.msra.mxu0 %v1941
    %1978 = vmatprep.subr.mxu0 0.0
    %1979 = vmatpush1.msra.mxu0 %v1940
    %1980 = vmatprep.subr.mxu0 0.0
    %1981 = vmatpush2.msra.mxu0 0.0
    %1982 = vmatprep.subr.mxu0 0.0
    %1983 = vmatpush2.msra.mxu0 0.0
    %1984 = vmatprep.subr.mxu0 0.0
    %1985 = vmatpush2.msra.mxu0 0.0
    %1986 = vmatprep.subr.mxu0 0.0
    %1987 = vmatpush2.msra.mxu0 0.0
    %1988 = vmatprep.subr.mxu0 0.0
    %1989 = vmatpush2.msra.mxu0 0.0
    %1990 = vmatprep.subr.mxu0 0.0
    %1991 = vmatpush2.msra.mxu0 0.0
    %1992 = vmatprep.subr.mxu0 0.0
    %1993 = vmatpush2.msra.mxu0 0.0
    %1994 = vmatprep.subr.mxu0 0.0
    %1995 = vmatpush2.msra.mxu0 0.0
    %1996 = vmatprep.subr.mxu0 0.0
    %1997 = vmatpush2.msra.mxu0 0.0
    %1998 = vmatprep.subr.mxu0 0.0
    %1999 = vmatpush2.msra.mxu0 0.0
    %2000 = vmatprep.subr.mxu0 0.0
    %2001 = vmatpush2.msra.mxu0 0.0
    %2002 = vmatprep.subr.mxu0 0.0
    %2003 = vmatpush2.msra.mxu0 0.0
    %2004 = vmatprep.subr.mxu0 0.0
    %2005 = vmatpush2.msra.mxu0 0.0
    %2006 = vmatprep.subr.mxu0 0.0
    %2007 = vmatpush2.msra.mxu0 0.0
    %2008 = vmatprep.subr.mxu0 0.0
    %2009 = vmatpush2.msra.mxu0 0.0
    %2010 = vmatprep.subr.mxu0 0.0
    %2011 = vmatpush2.msra.mxu0 0.0
    %2012 = vmatprep.mubr.f32.mxu0 0.0
    %2013 = vmatmul.mubr.f32.gmra.mxu0 %v1946
    %v2014 = vpop.f32.mrf.mxu0
    %v2015 = vadd.f32 0.0, %v2014
    %v2016 = vpop.f32.mrf.mxu0
    %2017 = vdwg.mxu0
    %v2018 = vmul.f32 %v2015, %v88
    %v2020 = vsel %vm1197, %v1831, 0
    %2022 = vmatprep.subr.mxu0 0.0
    %2023 = vmatpush1.msra.mxu0 0.0
    %2024 = vmatprep.subr.mxu0 0.0
    %2025 = vmatpush1.msra.mxu0 0.0
    %2026 = vmatprep.subr.mxu0 0.0
    %2027 = vmatpush1.msra.mxu0 0.0
    %2028 = vmatprep.subr.mxu0 0.0
    %2029 = vmatpush1.msra.mxu0 0.0
    %2030 = vmatprep.subr.mxu0 0.0
    %2031 = vmatpush1.msra.mxu0 0.0
    %2032 = vmatprep.subr.mxu0 0.0
    %2033 = vmatpush1.msra.mxu0 0.0
    %2034 = vmatprep.subr.mxu0 0.0
    %2035 = vmatpush1.msra.mxu0 0.0
    %2036 = vmatprep.subr.mxu0 0.0
    %2037 = vmatpush1.msra.mxu0 0.0
    %2038 = vmatprep.subr.mxu0 0.0
    %2039 = vmatpush1.msra.mxu0 0.0
    %2040 = vmatprep.subr.mxu0 0.0
    %2041 = vmatpush1.msra.mxu0 0.0
    %2042 = vmatprep.subr.mxu0 0.0
    %2043 = vmatpush1.msra.mxu0 0.0
    %2044 = vmatprep.subr.mxu0 0.0
    %2045 = vmatpush1.msra.mxu0 0.0
    %2046 = vmatprep.subr.mxu0 0.0
    %2047 = vmatpush1.msra.mxu0 %v1943
    %2048 = vmatprep.subr.mxu0 0.0
    %2049 = vmatpush1.msra.mxu0 %v1942
    %2050 = vmatprep.subr.mxu0 0.0
    %2051 = vmatpush1.msra.mxu0 %v1941
    %2052 = vmatprep.subr.mxu0 0.0
    %2053 = vmatpush1.msra.mxu0 %v1940
    %2054 = vmatprep.subr.mxu0 0.0
    %2055 = vmatpush2.msra.mxu0 0.0
    %2056 = vmatprep.subr.mxu0 0.0
    %2057 = vmatpush2.msra.mxu0 0.0
    %2058 = vmatprep.subr.mxu0 0.0
    %2059 = vmatpush2.msra.mxu0 0.0
    %2060 = vmatprep.subr.mxu0 0.0
    %2061 = vmatpush2.msra.mxu0 0.0
    %2062 = vmatprep.subr.mxu0 0.0
    %2063 = vmatpush2.msra.mxu0 0.0
    %2064 = vmatprep.subr.mxu0 0.0
    %2065 = vmatpush2.msra.mxu0 0.0
    %2066 = vmatprep.subr.mxu0 0.0
    %2067 = vmatpush2.msra.mxu0 0.0
    %2068 = vmatprep.subr.mxu0 0.0
    %2069 = vmatpush2.msra.mxu0 0.0
    %2070 = vmatprep.subr.mxu0 0.0
    %2071 = vmatpush2.msra.mxu0 0.0
    %2072 = vmatprep.subr.mxu0 0.0
    %2073 = vmatpush2.msra.mxu0 0.0
    %2074 = vmatprep.subr.mxu0 0.0
    %2075 = vmatpush2.msra.mxu0 0.0
    %2076 = vmatprep.subr.mxu0 0.0
    %2077 = vmatpush2.msra.mxu0 0.0
    %2078 = vmatprep.subr.mxu0 0.0
    %2079 = vmatpush2.msra.mxu0 0.0
    %2080 = vmatprep.subr.mxu0 0.0
    %2081 = vmatpush2.msra.mxu0 0.0
    %2082 = vmatprep.subr.mxu0 0.0
    %2083 = vmatpush2.msra.mxu0 0.0
    %2084 = vmatprep.subr.mxu0 0.0
    %2085 = vmatpush2.msra.mxu0 0.0
    %2086 = vmatprep.mubr.f32.mxu0 0.0
    %2087 = vmatmul.mubr.f32.gmra.mxu0 %v2020
    %v2088 = vpop.f32.mrf.mxu0
    %v2089 = vadd.f32 0.0, %v2088
    %v2090 = vpop.f32.mrf.mxu0
    %2091 = vdwg.mxu0
    %v2092 = vmul.f32 %v2089, %v101
    %v2094 = vsel %vm1197, %v1849, 0
    %2096 = vmatprep.subr.mxu0 0.0
    %2097 = vmatpush1.msra.mxu0 0.0
    %2098 = vmatprep.subr.mxu0 0.0
    %2099 = vmatpush1.msra.mxu0 0.0
    %2100 = vmatprep.subr.mxu0 0.0
    %2101 = vmatpush1.msra.mxu0 0.0
    %2102 = vmatprep.subr.mxu0 0.0
    %2103 = vmatpush1.msra.mxu0 0.0
    %2104 = vmatprep.subr.mxu0 0.0
    %2105 = vmatpush1.msra.mxu0 0.0
    %2106 = vmatprep.subr.mxu0 0.0
    %2107 = vmatpush1.msra.mxu0 0.0
    %2108 = vmatprep.subr.mxu0 0.0
    %2109 = vmatpush1.msra.mxu0 0.0
    %2110 = vmatprep.subr.mxu0 0.0
    %2111 = vmatpush1.msra.mxu0 0.0
    %2112 = vmatprep.subr.mxu0 0.0
    %2113 = vmatpush1.msra.mxu0 0.0
    %2114 = vmatprep.subr.mxu0 0.0
    %2115 = vmatpush1.msra.mxu0 0.0
    %2116 = vmatprep.subr.mxu0 0.0
    %2117 = vmatpush1.msra.mxu0 0.0
    %2118 = vmatprep.subr.mxu0 0.0
    %2119 = vmatpush1.msra.mxu0 0.0
    %2120 = vmatprep.subr.mxu0 0.0
    %2121 = vmatpush1.msra.mxu0 %v1943
    %2122 = vmatprep.subr.mxu0 0.0
    %2123 = vmatpush1.msra.mxu0 %v1942
    %2124 = vmatprep.subr.mxu0 0.0
    %2125 = vmatpush1.msra.mxu0 %v1941
    %2126 = vmatprep.subr.mxu0 0.0
    %2127 = vmatpush1.msra.mxu0 %v1940
    %2128 = vmatprep.subr.mxu0 0.0
    %2129 = vmatpush2.msra.mxu0 0.0
    %2130 = vmatprep.subr.mxu0 0.0
    %2131 = vmatpush2.msra.mxu0 0.0
    %2132 = vmatprep.subr.mxu0 0.0
    %2133 = vmatpush2.msra.mxu0 0.0
    %2134 = vmatprep.subr.mxu0 0.0
    %2135 = vmatpush2.msra.mxu0 0.0
    %2136 = vmatprep.subr.mxu0 0.0
    %2137 = vmatpush2.msra.mxu0 0.0
    %2138 = vmatprep.subr.mxu0 0.0
    %2139 = vmatpush2.msra.mxu0 0.0
    %2140 = vmatprep.subr.mxu0 0.0
    %2141 = vmatpush2.msra.mxu0 0.0
    %2142 = vmatprep.subr.mxu0 0.0
    %2143 = vmatpush2.msra.mxu0 0.0
    %2144 = vmatprep.subr.mxu0 0.0
    %2145 = vmatpush2.msra.mxu0 0.0
    %2146 = vmatprep.subr.mxu0 0.0
    %2147 = vmatpush2.msra.mxu0 0.0
    %2148 = vmatprep.subr.mxu0 0.0
    %2149 = vmatpush2.msra.mxu0 0.0
    %2150 = vmatprep.subr.mxu0 0.0
    %2151 = vmatpush2.msra.mxu0 0.0
    %2152 = vmatprep.subr.mxu0 0.0
    %2153 = vmatpush2.msra.mxu0 0.0
    %2154 = vmatprep.subr.mxu0 0.0
    %2155 = vmatpush2.msra.mxu0 0.0
    %2156 = vmatprep.subr.mxu0 0.0
    %2157 = vmatpush2.msra.mxu0 0.0
    %2158 = vmatprep.subr.mxu0 0.0
    %2159 = vmatpush2.msra.mxu0 0.0
    %2160 = vmatprep.mubr.f32.mxu0 0.0
    %2161 = vmatmul.mubr.f32.gmra.mxu0 %v2094
    %v2162 = vpop.f32.mrf.mxu0
    %v2163 = vadd.f32 0.0, %v2162
    %v2164 = vpop.f32.mrf.mxu0
    %2165 = vdwg.mxu0
    %v2166 = vmul.f32 %v2163, %v113
    %v2168 = vsel %vm1197, %v1867, 0
    %2170 = vmatprep.subr.mxu0 0.0
    %2171 = vmatpush1.msra.mxu0 0.0
    %2172 = vmatprep.subr.mxu0 0.0
    %2173 = vmatpush1.msra.mxu0 0.0
    %2174 = vmatprep.subr.mxu0 0.0
    %2175 = vmatpush1.msra.mxu0 0.0
    %2176 = vmatprep.subr.mxu0 0.0
    %2177 = vmatpush1.msra.mxu0 0.0
    %2178 = vmatprep.subr.mxu0 0.0
    %2179 = vmatpush1.msra.mxu0 0.0
    %2180 = vmatprep.subr.mxu0 0.0
    %2181 = vmatpush1.msra.mxu0 0.0
    %2182 = vmatprep.subr.mxu0 0.0
    %2183 = vmatpush1.msra.mxu0 0.0
    %2184 = vmatprep.subr.mxu0 0.0
    %2185 = vmatpush1.msra.mxu0 0.0
    %2186 = vmatprep.subr.mxu0 0.0
    %2187 = vmatpush1.msra.mxu0 0.0
    %2188 = vmatprep.subr.mxu0 0.0
    %2189 = vmatpush1.msra.mxu0 0.0
    %2190 = vmatprep.subr.mxu0 0.0
    %2191 = vmatpush1.msra.mxu0 0.0
    %2192 = vmatprep.subr.mxu0 0.0
    %2193 = vmatpush1.msra.mxu0 0.0
    %2194 = vmatprep.subr.mxu0 0.0
    %2195 = vmatpush1.msra.mxu0 %v1943
    %2196 = vmatprep.subr.mxu0 0.0
    %2197 = vmatpush1.msra.mxu0 %v1942
    %2198 = vmatprep.subr.mxu0 0.0
    %2199 = vmatpush1.msra.mxu0 %v1941
    %2200 = vmatprep.subr.mxu0 0.0
    %2201 = vmatpush1.msra.mxu0 %v1940
    %2202 = vmatprep.subr.mxu0 0.0
    %2203 = vmatpush2.msra.mxu0 0.0
    %2204 = vmatprep.subr.mxu0 0.0
    %2205 = vmatpush2.msra.mxu0 0.0
    %2206 = vmatprep.subr.mxu0 0.0
    %2207 = vmatpush2.msra.mxu0 0.0
    %2208 = vmatprep.subr.mxu0 0.0
    %2209 = vmatpush2.msra.mxu0 0.0
    %2210 = vmatprep.subr.mxu0 0.0
    %2211 = vmatpush2.msra.mxu0 0.0
    %2212 = vmatprep.subr.mxu0 0.0
    %2213 = vmatpush2.msra.mxu0 0.0
    %2214 = vmatprep.subr.mxu0 0.0
    %2215 = vmatpush2.msra.mxu0 0.0
    %2216 = vmatprep.subr.mxu0 0.0
    %2217 = vmatpush2.msra.mxu0 0.0
    %2218 = vmatprep.subr.mxu0 0.0
    %2219 = vmatpush2.msra.mxu0 0.0
    %2220 = vmatprep.subr.mxu0 0.0
    %2221 = vmatpush2.msra.mxu0 0.0
    %2222 = vmatprep.subr.mxu0 0.0
    %2223 = vmatpush2.msra.mxu0 0.0
    %2224 = vmatprep.subr.mxu0 0.0
    %2225 = vmatpush2.msra.mxu0 0.0
    %2226 = vmatprep.subr.mxu0 0.0
    %2227 = vmatpush2.msra.mxu0 0.0
    %2228 = vmatprep.subr.mxu0 0.0
    %2229 = vmatpush2.msra.mxu0 0.0
    %2230 = vmatprep.subr.mxu0 0.0
    %2231 = vmatpush2.msra.mxu0 0.0
    %2232 = vmatprep.subr.mxu0 0.0
    %2233 = vmatpush2.msra.mxu0 0.0
    %2234 = vmatprep.mubr.f32.mxu0 0.0
    %2235 = vmatmul.mubr.f32.gmra.mxu0 %v2168
    %v2236 = vpop.f32.mrf.mxu0
    %v2237 = vadd.f32 0.0, %v2236
    %v2238 = vpop.f32.mrf.mxu0
    %2239 = vdwg.mxu0
    %v2240 = vmul.f32 %v2237, %v125
    %v2242 = vsel %vm1197, %v1885, 0
    %2244 = vmatprep.subr.mxu0 0.0
    %2245 = vmatpush1.msra.mxu0 0.0
    %2246 = vmatprep.subr.mxu0 0.0
    %2247 = vmatpush1.msra.mxu0 0.0
    %2248 = vmatprep.subr.mxu0 0.0
    %2249 = vmatpush1.msra.mxu0 0.0
    %2250 = vmatprep.subr.mxu0 0.0
    %2251 = vmatpush1.msra.mxu0 0.0
    %2252 = vmatprep.subr.mxu0 0.0
    %2253 = vmatpush1.msra.mxu0 0.0
    %2254 = vmatprep.subr.mxu0 0.0
    %2255 = vmatpush1.msra.mxu0 0.0
    %2256 = vmatprep.subr.mxu0 0.0
    %2257 = vmatpush1.msra.mxu0 0.0
    %2258 = vmatprep.subr.mxu0 0.0
    %2259 = vmatpush1.msra.mxu0 0.0
    %2260 = vmatprep.subr.mxu0 0.0
    %2261 = vmatpush1.msra.mxu0 0.0
    %2262 = vmatprep.subr.mxu0 0.0
    %2263 = vmatpush1.msra.mxu0 0.0
    %2264 = vmatprep.subr.mxu0 0.0
    %2265 = vmatpush1.msra.mxu0 0.0
    %2266 = vmatprep.subr.mxu0 0.0
    %2267 = vmatpush1.msra.mxu0 0.0
    %2268 = vmatprep.subr.mxu0 0.0
    %2269 = vmatpush1.msra.mxu0 %v1943
    %2270 = vmatprep.subr.mxu0 0.0
    %2271 = vmatpush1.msra.mxu0 %v1942
    %2272 = vmatprep.subr.mxu0 0.0
    %2273 = vmatpush1.msra.mxu0 %v1941
    %2274 = vmatprep.subr.mxu0 0.0
    %2275 = vmatpush1.msra.mxu0 %v1940
    %2276 = vmatprep.subr.mxu0 0.0
    %2277 = vmatpush2.msra.mxu0 0.0
    %2278 = vmatprep.subr.mxu0 0.0
    %2279 = vmatpush2.msra.mxu0 0.0
    %2280 = vmatprep.subr.mxu0 0.0
    %2281 = vmatpush2.msra.mxu0 0.0
    %2282 = vmatprep.subr.mxu0 0.0
    %2283 = vmatpush2.msra.mxu0 0.0
    %2284 = vmatprep.subr.mxu0 0.0
    %2285 = vmatpush2.msra.mxu0 0.0
    %2286 = vmatprep.subr.mxu0 0.0
    %2287 = vmatpush2.msra.mxu0 0.0
    %2288 = vmatprep.subr.mxu0 0.0
    %2289 = vmatpush2.msra.mxu0 0.0
    %2290 = vmatprep.subr.mxu0 0.0
    %2291 = vmatpush2.msra.mxu0 0.0
    %2292 = vmatprep.subr.mxu0 0.0
    %2293 = vmatpush2.msra.mxu0 0.0
    %2294 = vmatprep.subr.mxu0 0.0
    %2295 = vmatpush2.msra.mxu0 0.0
    %2296 = vmatprep.subr.mxu0 0.0
    %2297 = vmatpush2.msra.mxu0 0.0
    %2298 = vmatprep.subr.mxu0 0.0
    %2299 = vmatpush2.msra.mxu0 0.0
    %2300 = vmatprep.subr.mxu0 0.0
    %2301 = vmatpush2.msra.mxu0 0.0
    %2302 = vmatprep.subr.mxu0 0.0
    %2303 = vmatpush2.msra.mxu0 0.0
    %2304 = vmatprep.subr.mxu0 0.0
    %2305 = vmatpush2.msra.mxu0 0.0
    %2306 = vmatprep.subr.mxu0 0.0
    %2307 = vmatpush2.msra.mxu0 0.0
    %2308 = vmatprep.mubr.f32.mxu0 0.0
    %2309 = vmatmul.mubr.f32.gmra.mxu0 %v2242
    %v2310 = vpop.f32.mrf.mxu0
    %v2311 = vadd.f32 0.0, %v2310
    %v2312 = vpop.f32.mrf.mxu0
    %2313 = vdwg.mxu0
    %v2314 = vmul.f32 %v2311, %v137
    %v2316 = vsel %vm1197, %v1903, 0
    %2318 = vmatprep.subr.mxu0 0.0
    %2319 = vmatpush1.msra.mxu0 0.0
    %2320 = vmatprep.subr.mxu0 0.0
    %2321 = vmatpush1.msra.mxu0 0.0
    %2322 = vmatprep.subr.mxu0 0.0
    %2323 = vmatpush1.msra.mxu0 0.0
    %2324 = vmatprep.subr.mxu0 0.0
    %2325 = vmatpush1.msra.mxu0 0.0
    %2326 = vmatprep.subr.mxu0 0.0
    %2327 = vmatpush1.msra.mxu0 0.0
    %2328 = vmatprep.subr.mxu0 0.0
    %2329 = vmatpush1.msra.mxu0 0.0
    %2330 = vmatprep.subr.mxu0 0.0
    %2331 = vmatpush1.msra.mxu0 0.0
    %2332 = vmatprep.subr.mxu0 0.0
    %2333 = vmatpush1.msra.mxu0 0.0
    %2334 = vmatprep.subr.mxu0 0.0
    %2335 = vmatpush1.msra.mxu0 0.0
    %2336 = vmatprep.subr.mxu0 0.0
    %2337 = vmatpush1.msra.mxu0 0.0
    %2338 = vmatprep.subr.mxu0 0.0
    %2339 = vmatpush1.msra.mxu0 0.0
    %2340 = vmatprep.subr.mxu0 0.0
    %2341 = vmatpush1.msra.mxu0 0.0
    %2342 = vmatprep.subr.mxu0 0.0
    %2343 = vmatpush1.msra.mxu0 %v1943
    %2344 = vmatprep.subr.mxu0 0.0
    %2345 = vmatpush1.msra.mxu0 %v1942
    %2346 = vmatprep.subr.mxu0 0.0
    %2347 = vmatpush1.msra.mxu0 %v1941
    %2348 = vmatprep.subr.mxu0 0.0
    %2349 = vmatpush1.msra.mxu0 %v1940
    %2350 = vmatprep.subr.mxu0 0.0
    %2351 = vmatpush2.msra.mxu0 0.0
    %2352 = vmatprep.subr.mxu0 0.0
    %2353 = vmatpush2.msra.mxu0 0.0
    %2354 = vmatprep.subr.mxu0 0.0
    %2355 = vmatpush2.msra.mxu0 0.0
    %2356 = vmatprep.subr.mxu0 0.0
    %2357 = vmatpush2.msra.mxu0 0.0
    %2358 = vmatprep.subr.mxu0 0.0
    %2359 = vmatpush2.msra.mxu0 0.0
    %2360 = vmatprep.subr.mxu0 0.0
    %2361 = vmatpush2.msra.mxu0 0.0
    %2362 = vmatprep.subr.mxu0 0.0
    %2363 = vmatpush2.msra.mxu0 0.0
    %2364 = vmatprep.subr.mxu0 0.0
    %2365 = vmatpush2.msra.mxu0 0.0
    %2366 = vmatprep.subr.mxu0 0.0
    %2367 = vmatpush2.msra.mxu0 0.0
    %2368 = vmatprep.subr.mxu0 0.0
    %2369 = vmatpush2.msra.mxu0 0.0
    %2370 = vmatprep.subr.mxu0 0.0
    %2371 = vmatpush2.msra.mxu0 0.0
    %2372 = vmatprep.subr.mxu0 0.0
    %2373 = vmatpush2.msra.mxu0 0.0
    %2374 = vmatprep.subr.mxu0 0.0
    %2375 = vmatpush2.msra.mxu0 0.0
    %2376 = vmatprep.subr.mxu0 0.0
    %2377 = vmatpush2.msra.mxu0 0.0
    %2378 = vmatprep.subr.mxu0 0.0
    %2379 = vmatpush2.msra.mxu0 0.0
    %2380 = vmatprep.subr.mxu0 0.0
    %2381 = vmatpush2.msra.mxu0 0.0
    %2382 = vmatprep.mubr.f32.mxu0 0.0
    %2383 = vmatmul.mubr.f32.gmra.mxu0 %v2316
    %v2384 = vpop.f32.mrf.mxu0
    %v2385 = vadd.f32 0.0, %v2384
    %v2386 = vpop.f32.mrf.mxu0
    %2387 = vdwg.mxu0
    %v2388 = vmul.f32 %v2385, %v149
    %v2390 = vsel %vm1197, %v1921, 0
    %2392 = vmatprep.subr.mxu0 0.0
    %2393 = vmatpush1.msra.mxu0 0.0
    %2394 = vmatprep.subr.mxu0 0.0
    %2395 = vmatpush1.msra.mxu0 0.0
    %2396 = vmatprep.subr.mxu0 0.0
    %2397 = vmatpush1.msra.mxu0 0.0
    %2398 = vmatprep.subr.mxu0 0.0
    %2399 = vmatpush1.msra.mxu0 0.0
    %2400 = vmatprep.subr.mxu0 0.0
    %2401 = vmatpush1.msra.mxu0 0.0
    %2402 = vmatprep.subr.mxu0 0.0
    %2403 = vmatpush1.msra.mxu0 0.0
    %2404 = vmatprep.subr.mxu0 0.0
    %2405 = vmatpush1.msra.mxu0 0.0
    %2406 = vmatprep.subr.mxu0 0.0
    %2407 = vmatpush1.msra.mxu0 0.0
    %2408 = vmatprep.subr.mxu0 0.0
    %2409 = vmatpush1.msra.mxu0 0.0
    %2410 = vmatprep.subr.mxu0 0.0
    %2411 = vmatpush1.msra.mxu0 0.0
    %2412 = vmatprep.subr.mxu0 0.0
    %2413 = vmatpush1.msra.mxu0 0.0
    %2414 = vmatprep.subr.mxu0 0.0
    %2415 = vmatpush1.msra.mxu0 0.0
    %2416 = vmatprep.subr.mxu0 0.0
    %2417 = vmatpush1.msra.mxu0 %v1943
    %2418 = vmatprep.subr.mxu0 0.0
    %2419 = vmatpush1.msra.mxu0 %v1942
    %2420 = vmatprep.subr.mxu0 0.0
    %2421 = vmatpush1.msra.mxu0 %v1941
    %2422 = vmatprep.subr.mxu0 0.0
    %2423 = vmatpush1.msra.mxu0 %v1940
    %2424 = vmatprep.subr.mxu0 0.0
    %2425 = vmatpush2.msra.mxu0 0.0
    %2426 = vmatprep.subr.mxu0 0.0
    %2427 = vmatpush2.msra.mxu0 0.0
    %2428 = vmatprep.subr.mxu0 0.0
    %2429 = vmatpush2.msra.mxu0 0.0
    %2430 = vmatprep.subr.mxu0 0.0
    %2431 = vmatpush2.msra.mxu0 0.0
    %2432 = vmatprep.subr.mxu0 0.0
    %2433 = vmatpush2.msra.mxu0 0.0
    %2434 = vmatprep.subr.mxu0 0.0
    %2435 = vmatpush2.msra.mxu0 0.0
    %2436 = vmatprep.subr.mxu0 0.0
    %2437 = vmatpush2.msra.mxu0 0.0
    %2438 = vmatprep.subr.mxu0 0.0
    %2439 = vmatpush2.msra.mxu0 0.0
    %2440 = vmatprep.subr.mxu0 0.0
    %2441 = vmatpush2.msra.mxu0 0.0
    %2442 = vmatprep.subr.mxu0 0.0
    %2443 = vmatpush2.msra.mxu0 0.0
    %2444 = vmatprep.subr.mxu0 0.0
    %2445 = vmatpush2.msra.mxu0 0.0
    %2446 = vmatprep.subr.mxu0 0.0
    %2447 = vmatpush2.msra.mxu0 0.0
    %2448 = vmatprep.subr.mxu0 0.0
    %2449 = vmatpush2.msra.mxu0 0.0
    %2450 = vmatprep.subr.mxu0 0.0
    %2451 = vmatpush2.msra.mxu0 0.0
    %2452 = vmatprep.subr.mxu0 0.0
    %2453 = vmatpush2.msra.mxu0 0.0
    %2454 = vmatprep.subr.mxu0 0.0
    %2455 = vmatpush2.msra.mxu0 0.0
    %2456 = vmatprep.mubr.f32.mxu0 0.0
    %2457 = vmatmul.mubr.f32.gmra.mxu0 %v2390
    %v2458 = vpop.f32.mrf.mxu0
    %v2459 = vadd.f32 0.0, %v2458
    %v2460 = vpop.f32.mrf.mxu0
    %2461 = vdwg.mxu0
    %v2462 = vmul.f32 %v2459, %v161
    %v2464 = vsel %vm1197, %v1939, 0
    %2466 = vmatprep.subr.mxu0 0.0
    %2467 = vmatpush1.msra.mxu0 0.0
    %2468 = vmatprep.subr.mxu0 0.0
    %2469 = vmatpush1.msra.mxu0 0.0
    %2470 = vmatprep.subr.mxu0 0.0
    %2471 = vmatpush1.msra.mxu0 0.0
    %2472 = vmatprep.subr.mxu0 0.0
    %2473 = vmatpush1.msra.mxu0 0.0
    %2474 = vmatprep.subr.mxu0 0.0
    %2475 = vmatpush1.msra.mxu0 0.0
    %2476 = vmatprep.subr.mxu0 0.0
    %2477 = vmatpush1.msra.mxu0 0.0
    %2478 = vmatprep.subr.mxu0 0.0
    %2479 = vmatpush1.msra.mxu0 0.0
    %2480 = vmatprep.subr.mxu0 0.0
    %2481 = vmatpush1.msra.mxu0 0.0
    %2482 = vmatprep.subr.mxu0 0.0
    %2483 = vmatpush1.msra.mxu0 0.0
    %2484 = vmatprep.subr.mxu0 0.0
    %2485 = vmatpush1.msra.mxu0 0.0
    %2486 = vmatprep.subr.mxu0 0.0
    %2487 = vmatpush1.msra.mxu0 0.0
    %2488 = vmatprep.subr.mxu0 0.0
    %2489 = vmatpush1.msra.mxu0 0.0
    %2490 = vmatprep.subr.mxu0 0.0
    %2491 = vmatpush1.msra.mxu0 %v1943
    %2492 = vmatprep.subr.mxu0 0.0
    %2493 = vmatpush1.msra.mxu0 %v1942
    %2494 = vmatprep.subr.mxu0 0.0
    %2495 = vmatpush1.msra.mxu0 %v1941
    %2496 = vmatprep.subr.mxu0 0.0
    %2497 = vmatpush1.msra.mxu0 %v1940
    %2498 = vmatprep.subr.mxu0 0.0
    %2499 = vmatpush2.msra.mxu0 0.0
    %2500 = vmatprep.subr.mxu0 0.0
    %2501 = vmatpush2.msra.mxu0 0.0
    %2502 = vmatprep.subr.mxu0 0.0
    %2503 = vmatpush2.msra.mxu0 0.0
    %2504 = vmatprep.subr.mxu0 0.0
    %2505 = vmatpush2.msra.mxu0 0.0
    %2506 = vmatprep.subr.mxu0 0.0
    %2507 = vmatpush2.msra.mxu0 0.0
    %2508 = vmatprep.subr.mxu0 0.0
    %2509 = vmatpush2.msra.mxu0 0.0
    %2510 = vmatprep.subr.mxu0 0.0
    %2511 = vmatpush2.msra.mxu0 0.0
    %2512 = vmatprep.subr.mxu0 0.0
    %2513 = vmatpush2.msra.mxu0 0.0
    %2514 = vmatprep.subr.mxu0 0.0
    %2515 = vmatpush2.msra.mxu0 0.0
    %2516 = vmatprep.subr.mxu0 0.0
    %2517 = vmatpush2.msra.mxu0 0.0
    %2518 = vmatprep.subr.mxu0 0.0
    %2519 = vmatpush2.msra.mxu0 0.0
    %2520 = vmatprep.subr.mxu0 0.0
    %2521 = vmatpush2.msra.mxu0 0.0
    %2522 = vmatprep.subr.mxu0 0.0
    %2523 = vmatpush2.msra.mxu0 0.0
    %2524 = vmatprep.subr.mxu0 0.0
    %2525 = vmatpush2.msra.mxu0 0.0
    %2526 = vmatprep.subr.mxu0 0.0
    %2527 = vmatpush2.msra.mxu0 0.0
    %2528 = vmatprep.subr.mxu0 0.0
    %2529 = vmatpush2.msra.mxu0 0.0
    %2530 = vmatprep.mubr.f32.mxu0 0.0
    %2531 = vmatmul.mubr.f32.gmra.mxu0 %v2464
    %v2532 = vpop.f32.mrf.mxu0
    %v2533 = vadd.f32 0.0, %v2532
    %v2534 = vpop.f32.mrf.mxu0
    %2535 = vdwg.mxu0
    %v2536 = vmul.f32 %v2533, %v173
    %v2537 = vmul.f32 %v781, %v2018
    %v2538 = vmul.f32 %v786, %v2092
    %v2539 = vadd.f32 %v2537, %v2538
    %v2540 = vmul.f32 %v792, %v2166
    %v2541 = vadd.f32 %v2539, %v2540
    %v2542 = vmul.f32 %v798, %v2240
    %v2543 = vadd.f32 %v2541, %v2542
    %v2544 = vmul.f32 %v804, %v2314
    %v2545 = vadd.f32 %v2543, %v2544
    %v2546 = vmul.f32 %v810, %v2388
    %v2547 = vadd.f32 %v2545, %v2546
    %v2548 = vmul.f32 %v816, %v2462
    %v2549 = vadd.f32 %v2547, %v2548
    %v2550 = vmul.f32 %v822, %v2536
    %v2551 = vadd.f32 %v2549, %v2550
    %v2552 = vmul.f32 %v2551, %v88
    %v2554 = vlaneseq
    %v2555 = vshrl.u32 %v2554, 7
    %v2556 = vsub.s32 0, %v2555
    %v2557 = vrot.slane %v1944, %v2556
    %v2559 = vadd.f32 %v2552, %v2557
    %v2560 = vmax.f32 %v2559, 0.0
    %v2561 = vmul.f32 %v838, %v2018
    %v2562 = vmul.f32 %v843, %v2092
    %v2563 = vadd.f32 %v2561, %v2562
    %v2564 = vmul.f32 %v849, %v2166
    %v2565 = vadd.f32 %v2563, %v2564
    %v2566 = vmul.f32 %v855, %v2240
    %v2567 = vadd.f32 %v2565, %v2566
    %v2568 = vmul.f32 %v861, %v2314
    %v2569 = vadd.f32 %v2567, %v2568
    %v2570 = vmul.f32 %v867, %v2388
    %v2571 = vadd.f32 %v2569, %v2570
    %v2572 = vmul.f32 %v873, %v2462
    %v2573 = vadd.f32 %v2571, %v2572
    %v2574 = vmul.f32 %v879, %v2536
    %v2575 = vadd.f32 %v2573, %v2574
    %v2576 = vmul.f32 %v2575, %v101
    %v2577 = vadd.f32 %v2576, %v2557
    %v2578 = vmax.f32 %v2577, 0.0
    %v2579 = vmul.f32 %v889, %v2018
    %v2580 = vmul.f32 %v894, %v2092
    %v2581 = vadd.f32 %v2579, %v2580
    %v2582 = vmul.f32 %v900, %v2166
    %v2583 = vadd.f32 %v2581, %v2582
    %v2584 = vmul.f32 %v906, %v2240
    %v2585 = vadd.f32 %v2583, %v2584
    %v2586 = vmul.f32 %v912, %v2314
    %v2587 = vadd.f32 %v2585, %v2586
    %v2588 = vmul.f32 %v918, %v2388
    %v2589 = vadd.f32 %v2587, %v2588
    %v2590 = vmul.f32 %v924, %v2462
    %v2591 = vadd.f32 %v2589, %v2590
    %v2592 = vmul.f32 %v930, %v2536
    %v2593 = vadd.f32 %v2591, %v2592
    %v2594 = vmul.f32 %v2593, %v113
    %v2595 = vadd.f32 %v2594, %v2557
    %v2596 = vmax.f32 %v2595, 0.0
    %v2597 = vmul.f32 %v940, %v2018
    %v2598 = vmul.f32 %v945, %v2092
    %v2599 = vadd.f32 %v2597, %v2598
    %v2600 = vmul.f32 %v951, %v2166
    %v2601 = vadd.f32 %v2599, %v2600
    %v2602 = vmul.f32 %v957, %v2240
    %v2603 = vadd.f32 %v2601, %v2602
    %v2604 = vmul.f32 %v963, %v2314
    %v2605 = vadd.f32 %v2603, %v2604
    %v2606 = vmul.f32 %v969, %v2388
    %v2607 = vadd.f32 %v2605, %v2606
    %v2608 = vmul.f32 %v975, %v2462
    %v2609 = vadd.f32 %v2607, %v2608
    %v2610 = vmul.f32 %v981, %v2536
    %v2611 = vadd.f32 %v2609, %v2610
    %v2612 = vmul.f32 %v2611, %v125
    %v2613 = vadd.f32 %v2612, %v2557
    %v2614 = vmax.f32 %v2613, 0.0
    %v2615 = vmul.f32 %v991, %v2018
    %v2616 = vmul.f32 %v996, %v2092
    %v2617 = vadd.f32 %v2615, %v2616
    %v2618 = vmul.f32 %v1002, %v2166
    %v2619 = vadd.f32 %v2617, %v2618
    %v2620 = vmul.f32 %v1008, %v2240
    %v2621 = vadd.f32 %v2619, %v2620
    %v2622 = vmul.f32 %v1014, %v2314
    %v2623 = vadd.f32 %v2621, %v2622
    %v2624 = vmul.f32 %v1020, %v2388
    %v2625 = vadd.f32 %v2623, %v2624
    %v2626 = vmul.f32 %v1026, %v2462
    %v2627 = vadd.f32 %v2625, %v2626
    %v2628 = vmul.f32 %v1032, %v2536
    %v2629 = vadd.f32 %v2627, %v2628
    %v2630 = vmul.f32 %v2629, %v137
    %v2631 = vadd.f32 %v2630, %v2557
    %v2632 = vmax.f32 %v2631, 0.0
    %v2633 = vmul.f32 %v1042, %v2018
    %v2634 = vmul.f32 %v1047, %v2092
    %v2635 = vadd.f32 %v2633, %v2634
    %v2636 = vmul.f32 %v1053, %v2166
    %v2637 = vadd.f32 %v2635, %v2636
    %v2638 = vmul.f32 %v1059, %v2240
    %v2639 = vadd.f32 %v2637, %v2638
    %v2640 = vmul.f32 %v1065, %v2314
    %v2641 = vadd.f32 %v2639, %v2640
    %v2642 = vmul.f32 %v1071, %v2388
    %v2643 = vadd.f32 %v2641, %v2642
    %v2644 = vmul.f32 %v1077, %v2462
    %v2645 = vadd.f32 %v2643, %v2644
    %v2646 = vmul.f32 %v1083, %v2536
    %v2647 = vadd.f32 %v2645, %v2646
    %v2648 = vmul.f32 %v2647, %v149
    %v2649 = vadd.f32 %v2648, %v2557
    %v2650 = vmax.f32 %v2649, 0.0
    %v2651 = vmul.f32 %v1093, %v2018
    %v2652 = vmul.f32 %v1098, %v2092
    %v2653 = vadd.f32 %v2651, %v2652
    %v2654 = vmul.f32 %v1104, %v2166
    %v2655 = vadd.f32 %v2653, %v2654
    %v2656 = vmul.f32 %v1110, %v2240
    %v2657 = vadd.f32 %v2655, %v2656
    %v2658 = vmul.f32 %v1116, %v2314
    %v2659 = vadd.f32 %v2657, %v2658
    %v2660 = vmul.f32 %v1122, %v2388
    %v2661 = vadd.f32 %v2659, %v2660
    %v2662 = vmul.f32 %v1128, %v2462
    %v2663 = vadd.f32 %v2661, %v2662
    %v2664 = vmul.f32 %v1134, %v2536
    %v2665 = vadd.f32 %v2663, %v2664
    %v2666 = vmul.f32 %v2665, %v161
    %v2667 = vadd.f32 %v2666, %v2557
    %v2668 = vmax.f32 %v2667, 0.0
    %v2669 = vmul.f32 %v1144, %v2018
    %v2670 = vmul.f32 %v1149, %v2092
    %v2671 = vadd.f32 %v2669, %v2670
    %v2672 = vmul.f32 %v1155, %v2166
    %v2673 = vadd.f32 %v2671, %v2672
    %v2674 = vmul.f32 %v1161, %v2240
    %v2675 = vadd.f32 %v2673, %v2674
    %v2676 = vmul.f32 %v1167, %v2314
    %v2677 = vadd.f32 %v2675, %v2676
    %v2678 = vmul.f32 %v1173, %v2388
    %v2679 = vadd.f32 %v2677, %v2678
    %v2680 = vmul.f32 %v1179, %v2462
    %v2681 = vadd.f32 %v2679, %v2680
    %v2682 = vmul.f32 %v1185, %v2536
    %v2683 = vadd.f32 %v2681, %v2682
    %v2684 = vmul.f32 %v2683, %v173
    %v2685 = vadd.f32 %v2684, %v2557
    %v2686 = vmax.f32 %v2685, 0.0
    %v2687 = vadd.f32 %v2560, %v2578
    %v2688 = vadd.f32 %v2687, %v2596
    %v2689 = vadd.f32 %v2688, %v2614
    %v2690 = vadd.f32 %v2689, %v2632
    %v2691 = vadd.f32 %v2690, %v2650
    %v2692 = vadd.f32 %v2691, %v2668
    %v2693 = vadd.f32 %v2692, %v2686
    %v2694 = vmul.f32 %v2693, 0.125
    %v2695 = vld [vmem:[%s8] sm:$0xf]
    %v2696 = vld [vmem:[%s9] sm:$0xf]
    %2698 = vset.pattern.permute.xlu0 0
    %2699 = vperm.xlu0 %2698, %v2696
    %v2700 = vpop.permute.xlu0 %2699
    %v2703 = vsel %vm1197, %v2695, 0
    %v2706 = vsel %vm1197, %v2694, 0
    %2708 = vmatprep.subr.mxu0 0.0
    %2709 = vmatpush1.xpose.msra.mxu0 0.0
    %2710 = vmatprep.subr.mxu0 0.0
    %2711 = vmatpush1.xpose.msra.mxu0 0.0
    %2712 = vmatprep.subr.mxu0 0.0
    %2713 = vmatpush1.xpose.msra.mxu0 0.0
    %2714 = vmatprep.subr.mxu0 0.0
    %2715 = vmatpush1.xpose.msra.mxu0 0.0
    %2716 = vmatprep.subr.mxu0 0.0
    %2717 = vmatpush1.xpose.msra.mxu0 0.0
    %2718 = vmatprep.subr.mxu0 0.0
    %2719 = vmatpush1.xpose.msra.mxu0 0.0
    %2720 = vmatprep.subr.mxu0 0.0
    %2721 = vmatpush1.xpose.msra.mxu0 0.0
    %2722 = vmatprep.subr.mxu0 0.0
    %2723 = vmatpush1.xpose.msra.mxu0 0.0
    %2724 = vmatprep.subr.mxu0 0.0
    %2725 = vmatpush1.xpose.msra.mxu0 0.0
    %2726 = vmatprep.subr.mxu0 0.0
    %2727 = vmatpush1.xpose.msra.mxu0 0.0
    %2728 = vmatprep.subr.mxu0 0.0
    %2729 = vmatpush1.xpose.msra.mxu0 0.0
    %2730 = vmatprep.subr.mxu0 0.0
    %2731 = vmatpush1.xpose.msra.mxu0 0.0
    %2732 = vmatprep.subr.mxu0 0.0
    %2733 = vmatpush1.xpose.msra.mxu0 0.0
    %2734 = vmatprep.subr.mxu0 0.0
    %2735 = vmatpush1.xpose.msra.mxu0 0.0
    %2736 = vmatprep.subr.mxu0 0.0
    %2737 = vmatpush1.xpose.msra.mxu0 0.0
    %2738 = vmatprep.subr.mxu0 0.0
    %2739 = vmatpush1.xpose.msra.mxu0 %v2706
    %2740 = vmatprep.subr.mxu0 0.0
    %2741 = vmatpush2.xpose.msra.mxu0 0.0
    %2742 = vmatprep.subr.mxu0 0.0
    %2743 = vmatpush2.xpose.msra.mxu0 0.0
    %2744 = vmatprep.subr.mxu0 0.0
    %2745 = vmatpush2.xpose.msra.mxu0 0.0
    %2746 = vmatprep.subr.mxu0 0.0
    %2747 = vmatpush2.xpose.msra.mxu0 0.0
    %2748 = vmatprep.subr.mxu0 0.0
    %2749 = vmatpush2.xpose.msra.mxu0 0.0
    %2750 = vmatprep.subr.mxu0 0.0
    %2751 = vmatpush2.xpose.msra.mxu0 0.0
    %2752 = vmatprep.subr.mxu0 0.0
    %2753 = vmatpush2.xpose.msra.mxu0 0.0
    %2754 = vmatprep.subr.mxu0 0.0
    %2755 = vmatpush2.xpose.msra.mxu0 0.0
    %2756 = vmatprep.subr.mxu0 0.0
    %2757 = vmatpush2.xpose.msra.mxu0 0.0
    %2758 = vmatprep.subr.mxu0 0.0
    %2759 = vmatpush2.xpose.msra.mxu0 0.0
    %2760 = vmatprep.subr.mxu0 0.0
    %2761 = vmatpush2.xpose.msra.mxu0 0.0
    %2762 = vmatprep.subr.mxu0 0.0
    %2763 = vmatpush2.xpose.msra.mxu0 0.0
    %2764 = vmatprep.subr.mxu0 0.0
    %2765 = vmatpush2.xpose.msra.mxu0 0.0
    %2766 = vmatprep.subr.mxu0 0.0
    %2767 = vmatpush2.xpose.msra.mxu0 0.0
    %2768 = vmatprep.subr.mxu0 0.0
    %2769 = vmatpush2.xpose.msra.mxu0 0.0
    %2770 = vmatprep.subr.mxu0 0.0
    %2771 = vmatpush2.xpose.msra.mxu0 0.0
    %2772 = vmatprep.mubr.f32.mxu0 0.0
    %2773 = vmatmul.mubr.f32.gmra.mxu0 %v2703
    %v2774 = vpop.f32.mrf.mxu0
    %v2775 = vadd.f32 %v2700, %v2774
    %v2776 = vpop.f32.mrf.mxu0
    %2777 = vdwg.mxu0
    %vm2778 = vcmask 11264
    %v2779 = vsel %vm2778, %v2775, -inf
    %v2780 = vrot.slane %v2779, 4
    %v2781 = vmax.f32 %v2779, %v2780
    %v2782 = vrot.slane %v2781, 2
    %v2783 = vmax.f32 %v2781, %v2782
    %v2784 = vrot.slane %v2783, 1
    %v2785 = vmax.f32 %v2783, %v2784
    %v2786 = vsub.f32 %v2775, %v2785
    %v2787 = vmul.f32 %v2786, 1.442695
    %v2788 = vpow.pop %v2787
    %v2789 = vsel %vm2778, %v2788, 0.0
    %v2790 = vrot.slane %v2789, 4
    %v2791 = vadd.f32 %v2789, %v2790
    %v2792 = vrot.slane %v2791, 2
    %v2793 = vadd.f32 %v2791, %v2792
    %v2794 = vrot.slane %v2793, 1
    %v2795 = vadd.f32 %v2793, %v2794
    %v2796 = vlog2.pop %v2795
    %v2797 = vmul.f32 %v2796, 0.6931472
    %v2798 = vadd.f32 %v2797, %v2785
    %v2799 = vsub.f32 %v2775, %v2798
    %2800 = vst.msk [vmem:[%s10] sm:$0xf] %vm2778, %v2799
    // Predicated region
    $region54: #{tpu_custom_call.1} parent=1 // pred_check
      _
    $region55: #{tpu_custom_call.1} parent=1 // pred_check_branch
      %2802 = sbr.rel (0) target = $region57
    $region56: #{tpu_custom_call.1} parent=1 // pred_region
      _
    $region57: #{tpu_custom_call.1} parent=1 // pred_fallthru
      _
    // Predicated region
    $region58: #{tpu_custom_call.1} parent=1 // pred_check
      _
    $region59: #{tpu_custom_call.1} parent=1 // pred_check_branch
      %2804 = sbr.rel (0) target = $region61
    $region60: #{tpu_custom_call.1} parent=1 // pred_region
      _
    $region61: #{tpu_custom_call.1} parent=1 // pred_fallthru
      _
    %2805 = vsyncpa [#allocation3], 1
    %2806 = vsyncpa [#allocation5], 1

</llo_original>
